<compile_context>
chip_gen: v7x
topology: tpu7x:2x2x1
jax: 0.10.0
libtpu: 0.0.40
codegen_flags: <defaults>
</compile_context>

<pallas_src>
import jax
import jax.numpy as jnp
from jax import lax
from jax.experimental import pallas as pl
from jax.experimental.pallas import tpu as pltpu

KERNEL = 3  # depthwise conv kernel size


def eucb_kernel(x_ref, halo_ref, f_ref, bnb_ref, pww_ref, pwb_ref, o_ref, xs_ref):
    # x_ref    : (1, TH, W, Cin)          one row-strip of the original image
    # halo_ref : (1, 1, 2, W, Cin)        rows just above / below the strip (zeros at borders)
    # f_ref    : (16, Cin)                phase filters, BN scale folded; row = ((a*2+b)*2+r)*2+s
    # bnb_ref  : (1, Cin)                 folded BatchNorm bias
    # pww_ref  : (Cin, Cout) bf16         pointwise conv weight (transposed for matmul)
    # pwb_ref  : (1, Cout)                pointwise conv bias
    # o_ref    : (1, 2, 2, TH, W, Cout)   output phase slabs [a, b] for this strip
    # xs_ref   : (TH+2, W+2, Cin) f32     scratch: zero-haloed strip slab
    th = x_ref.shape[1]
    w = x_ref.shape[2]
    cin = x_ref.shape[3]
    cout = o_ref.shape[5]

    # --- Assemble the zero-haloed f32 strip slab in VMEM (replaces wrapper jnp.pad).
    xs_ref[...] = jnp.zeros_like(xs_ref)
    xs_ref[0, 1:w + 1, :] = halo_ref[0, 0, 0].astype(jnp.float32)
    xs_ref[th + 1, 1:w + 1, :] = halo_ref[0, 0, 1].astype(jnp.float32)
    xs_ref[1:th + 1, 1:w + 1, :] = x_ref[0].astype(jnp.float32)

    # --- Hoisted parameter reads (out of the tap loops).
    f = f_ref[...]                       # (16, Cin) f32
    bnb = bnb_ref[...]                   # (1, Cin)
    pww = pww_ref[...]                   # (Cin, Cout) bf16
    pwb = pwb_ref[...]                   # (1, Cout)

    # --- 4 output phases; each phase: 4 VPU taps -> bias+ReLU -> its own MXU matmul.
    # Issuing the matmul per phase lets the MXU work overlap the next phase's taps.
    for a in range(2):                   # vertical output phase (static)
        for b in range(2):               # horizontal output phase (static)
            base = (a * 2 + b) * 4
            acc = xs_ref[a:a + th, b:b + w, :] * f[base + 0]
            acc = acc + xs_ref[a:a + th, b + 1:b + 1 + w, :] * f[base + 1]
            acc = acc + xs_ref[a + 1:a + 1 + th, b:b + w, :] * f[base + 2]
            acc = acc + xs_ref[a + 1:a + 1 + th, b + 1:b + 1 + w, :] * f[base + 3]
            # BatchNorm (scale already folded into the filters) bias + ReLU.
            y = jnp.maximum(acc + bnb, 0.0)                     # (TH, W, Cin) f32
            # channel_shuffle(groups=Cin): channels_per_group == 1 -> identity.
            # Pointwise 1x1 conv on the MXU: bf16 operands, f32 accumulation.
            out = jnp.dot(y.reshape(th * w, cin).astype(jnp.bfloat16), pww,
                          preferred_element_type=jnp.float32)   # (TH*W, Cout)
            out = out + pwb
            o_ref[0, a, b] = out.reshape(th, w, cout).astype(o_ref.dtype)


def _pick_strip_rows(h, target=64):
    """Largest divisor of h that is <= target (bounds per-step VMEM; good for v7x)."""
    if h <= target:
        return h
    for th in range(target, 0, -1):
        if h % th == 0:
            return th
    return h


def eucb_forward(x_nchw, w_dw, bn_gamma, bn_beta, bn_mean, bn_var, w_pw, b_pw,
                 eps=1e-5, strip_rows=None):
    B, C, H, W = x_nchw.shape
    Cout = w_pw.shape[0]
    TH = strip_rows if strip_rows is not None else _pick_strip_rows(H)
    assert H % TH == 0, (H, TH)
    T = H // TH

    # ---- Glue (plain JAX): NCHW -> NHWC; tiny per-strip halo-row array.  The 2x
    # upsample and the 1-px halo pad are NOT materialized in HBM.
    x = jnp.transpose(x_nchw, (0, 2, 3, 1))                     # (B, H, W, C)
    xr = x.reshape(B, T, TH, W, C)
    zrow = jnp.zeros((B, 1, W, C), x.dtype)
    above = jnp.concatenate([zrow, xr[:, :-1, TH - 1]], axis=1)  # row above each strip
    below = jnp.concatenate([xr[:, 1:, 0], zrow], axis=1)        # row below each strip
    halo = jnp.stack([above, below], axis=2)                     # (B, T, 2, W, C)

    # ---- Fold BatchNorm (eval mode) and build the 4 per-phase 2x2 filters (f32).
    inv_std = 1.0 / jnp.sqrt(bn_var + eps)
    bn_scale = bn_gamma * inv_std
    bn_bias = (bn_beta - bn_mean * bn_scale).reshape(1, C).astype(jnp.float32)

    # For nearest-2x upsample + 3x3/pad-1 depthwise conv, output phase (a,b) sees a
    # 2x2 block of original pixels with effective filter F[a,b] = R[a] @ w3 @ R[b].T.
    w3 = (w_dw[:, 0, :, :] * bn_scale[:, None, None]).astype(jnp.float32)   # (C,3,3)
    R = jnp.array([[[1., 0., 0.], [0., 1., 1.]],
                   [[1., 1., 0.], [0., 0., 1.]]], dtype=jnp.float32)        # (2,2,3)
    fphase = jnp.einsum('ard,ndx,bsx->abrsn', R, w3, R).reshape(16, C)      # (16,C)

    pww = jnp.transpose(w_pw[:, :, 0, 0], (1, 0)).astype(jnp.bfloat16)      # (C,Cout)
    pwb = b_pw.reshape(1, Cout).astype(jnp.float32)

    # ---- VMEM budget for this strip size (double-buffered blocks + scratch + temps).
    isz = x.dtype.itemsize
    osz = jnp.dtype(x_nchw.dtype).itemsize
    blk_bytes = (TH * W * C * isz                    # input strip block
                 + 2 * W * C * isz                   # halo block
                 + 4 * TH * W * Cout * osz           # output block (4 phases)
                 + 16 * C * 4 + C * 4 + C * Cout * 2 + Cout * 4)   # params
    scratch_bytes = (TH + 2) * (W + 2) * C * 4
    interm_bytes = 4 * TH * W * max(C, Cout) * 4     # acc / y / matmul temporaries
    vmem_limit = 2 * blk_bytes + scratch_bytes + interm_bytes
    vmem_limit = min(max(int(vmem_limit * 1.5) + (2 << 20), 16 << 20), 64 << 20)

    flops = B * (4 * 8 * H * W * C + 2 * 4 * H * W * C * Cout)
    bytes_accessed = (B * (H * W * C * isz + T * 2 * W * C * isz
                           + 4 * H * W * Cout * osz)
                      + 16 * C * 4 + C * Cout * 2 + C * 4 + Cout * 4)
    cost = pl.CostEstimate(flops=flops, transcendentals=0,
                           bytes_accessed=bytes_accessed)

    out = pl.pallas_call(
        eucb_kernel,
        out_shape=jax.ShapeDtypeStruct((B, 2, 2, H, W, Cout), x_nchw.dtype),
        grid=(B, T),
        in_specs=[
            pl.BlockSpec((1, TH, W, C), lambda b, t: (b, t, 0, 0)),
            pl.BlockSpec((1, 1, 2, W, C), lambda b, t: (b, t, 0, 0, 0)),
            pl.BlockSpec((16, C), lambda b, t: (0, 0)),
            pl.BlockSpec((1, C), lambda b, t: (0, 0)),
            pl.BlockSpec((C, Cout), lambda b, t: (0, 0)),
            pl.BlockSpec((1, Cout), lambda b, t: (0, 0)),
        ],
        out_specs=pl.BlockSpec((1, 2, 2, TH, W, Cout),
                               lambda b, t: (b, 0, 0, t, 0, 0)),
        scratch_shapes=[pltpu.VMEM((TH + 2, W + 2, C), jnp.float32)],
        compiler_params=pltpu.CompilerParams(
            dimension_semantics=("parallel", "parallel"),
            vmem_limit_bytes=vmem_limit),
        cost_estimate=cost,
    )(x, halo, fphase, bn_bias, pww, pwb)

    # out[b, a, c, i, j, n] == pixel (2i+a, 2j+c), channel n -> NCHW (B, Cout, 2H, 2W).
    out = jnp.transpose(out, (0, 5, 3, 1, 4, 2)).reshape(B, Cout, 2 * H, 2 * W)
    return out


def eucb_reference(x, w_dw, bn_gamma, bn_beta, bn_mean, bn_var, w_pw, b_pw,
                   eps=1e-5):
    """Pure-JAX reference mirroring the PyTorch forward (NCHW, eval-mode BN)."""
    B, C, H, W = x.shape
    x = jnp.repeat(jnp.repeat(x, 2, axis=2), 2, axis=3)
    y = lax.conv_general_dilated(
        x, w_dw, window_strides=(1, 1), padding=((1, 1), (1, 1)),
        dimension_numbers=('NCHW', 'OIHW', 'NCHW'), feature_group_count=C)
    scale = bn_gamma / jnp.sqrt(bn_var + eps)
    y = y * scale[None, :, None, None] \
        + (bn_beta - bn_mean * scale)[None, :, None, None]
    y = jnp.maximum(y, 0.0)
    # channel_shuffle(groups=C) is identity (1 channel per group)
    out = lax.conv_general_dilated(
        y, w_pw, window_strides=(1, 1), padding=((0, 0), (0, 0)),
        dimension_numbers=('NCHW', 'OIHW', 'NCHW'))
    return out + b_pw[None, :, None, None]


if __name__ == "__main__":
    key = jax.random.PRNGKey(0)
    B, Cin, Cout, H, W = 2, 4, 8, 16, 16
    k1, k2, k3 = jax.random.split(key, 3)

    x = jax.random.normal(k1, (B, Cin, H, W), jnp.float32)

    # 'normal' init scheme: conv weights ~ N(0, 0.02^2), conv biases = 0,
    # BatchNorm weight = 1, bias = 0; running stats at defaults (mean 0, var 1).
    w_dw = 0.02 * jax.random.normal(k2, (Cin, 1, KERNEL, KERNEL), jnp.float32)
    w_pw = 0.02 * jax.random.normal(k3, (Cout, Cin, 1, 1), jnp.float32)
    b_pw = jnp.zeros((Cout,), jnp.float32)
    bn_gamma = jnp.ones((Cin,), jnp.float32)
    bn_beta = jnp.zeros((Cin,), jnp.float32)
    bn_mean = jnp.zeros((Cin,), jnp.float32)
    bn_var = jnp.ones((Cin,), jnp.float32)

    out = eucb_forward(x, w_dw, bn_gamma, bn_beta, bn_mean, bn_var, w_pw, b_pw)
    out = jax.block_until_ready(out)

    ref = eucb_reference(x, w_dw, bn_gamma, bn_beta, bn_mean, bn_var, w_pw, b_pw)
    assert out.shape == (B, Cout, 2 * H, 2 * W), out.shape
    max_err = float(jnp.max(jnp.abs(out - ref)))
    assert jnp.allclose(out, ref, atol=5e-4, rtol=5e-4), max_err
    print("KERNEL_OK")
</pallas_src>

<mosaic_0001>
module attributes {stable_mosaic.version = 11 : i64} {
  func.func @eucb_kernel(%arg0: i32, %arg1: i32, %arg2: memref<1x16x16x4xf32, #tpu.memory_space<vmem>>, %arg3: memref<1x1x2x16x4xf32, #tpu.memory_space<vmem>>, %arg4: memref<16x4xf32, #tpu.memory_space<vmem>>, %arg5: memref<1x4xf32, #tpu.memory_space<vmem>>, %arg6: memref<4x8xbf16, #tpu.memory_space<vmem>>, %arg7: memref<1x8xf32, #tpu.memory_space<vmem>>, %arg8: memref<1x2x2x16x16x8xf32, #tpu.memory_space<vmem>>, %arg9: memref<18x18x4xf32, #tpu.memory_space<vmem>>) attributes {dimension_semantics = [#tpu.dimension_semantics<parallel>, #tpu.dimension_semantics<parallel>], iteration_bounds = array<i64: 2, 1>, scalar_prefetch = 0 : i64, scratch_operands = 1 : i64, tpu.core_type = #tpu.core_type<tc>, window_params = [{transform_indices = @transform_0, window_bounds = array<i64: 1, 16, 16, 4>}, {transform_indices = @transform_1, window_bounds = array<i64: 1, 1, 2, 16, 4>}, {pipeline_mode = #tpu.pipeline_mode<synchronous>, transform_indices = @transform_2, window_bounds = array<i64: 16, 4>}, {pipeline_mode = #tpu.pipeline_mode<synchronous>, transform_indices = @transform_3, window_bounds = array<i64: 1, 4>}, {pipeline_mode = #tpu.pipeline_mode<synchronous>, transform_indices = @transform_4, window_bounds = array<i64: 4, 8>}, {pipeline_mode = #tpu.pipeline_mode<synchronous>, transform_indices = @transform_5, window_bounds = array<i64: 1, 8>}, {transform_indices = @transform_6, window_bounds = array<i64: 1, 2, 2, 16, 16, 8>}]} {
    %cst = arith.constant 0.000000e+00 : f32
    %0 = vector.broadcast %cst : f32 to vector<18x18x4xf32>
    %c0 = arith.constant 0 : index
    %c0_0 = arith.constant 0 : index
    %c0_1 = arith.constant 0 : index
    %1 = vector.load %arg9[%c0, %c0_0, %c0_1] : memref<18x18x4xf32, #tpu.memory_space<vmem>>, vector<18x18x4xf32>
    tpu.vector_store %arg9[%c0, %c0_0, %c0_1], %0 {strides = array<i32>} : memref<18x18x4xf32, #tpu.memory_space<vmem>>, vector<18x18x4xf32>,
    %c0_2 = arith.constant 0 : index
    %c0_3 = arith.constant 0 : index
    %c0_4 = arith.constant 0 : index
    %c0_5 = arith.constant 0 : index
    %c0_6 = arith.constant 0 : index
    %2 = vector.load %arg3[%c0_2, %c0_3, %c0_4, %c0_5, %c0_6] : memref<1x1x2x16x4xf32, #tpu.memory_space<vmem>>, vector<1x1x1x16x4xf32>
    %3 = vector.shape_cast %2 : vector<1x1x1x16x4xf32> to vector<16x4xf32>
    %c0_7 = arith.constant 0 : index
    %c1 = arith.constant 1 : index
    %c0_8 = arith.constant 0 : index
    %4 = vector.load %arg9[%c0_7, %c1, %c0_8] : memref<18x18x4xf32, #tpu.memory_space<vmem>>, vector<1x16x4xf32>
    %5 = vector.shape_cast %4 : vector<1x16x4xf32> to vector<16x4xf32>
    %6 = vector.shape_cast %3 : vector<16x4xf32> to vector<1x16x4xf32>
    tpu.vector_store %arg9[%c0_7, %c1, %c0_8], %6 {strides = array<i32>} : memref<18x18x4xf32, #tpu.memory_space<vmem>>, vector<1x16x4xf32>,
    %c0_9 = arith.constant 0 : index
    %c0_10 = arith.constant 0 : index
    %c1_11 = arith.constant 1 : index
    %c0_12 = arith.constant 0 : index
    %c0_13 = arith.constant 0 : index
    %7 = vector.load %arg3[%c0_9, %c0_10, %c1_11, %c0_12, %c0_13] : memref<1x1x2x16x4xf32, #tpu.memory_space<vmem>>, vector<1x1x1x16x4xf32>
    %8 = vector.shape_cast %7 : vector<1x1x1x16x4xf32> to vector<16x4xf32>
    %c17 = arith.constant 17 : index
    %c1_14 = arith.constant 1 : index
    %c0_15 = arith.constant 0 : index
    %9 = vector.load %arg9[%c17, %c1_14, %c0_15] : memref<18x18x4xf32, #tpu.memory_space<vmem>>, vector<1x16x4xf32>
    %10 = vector.shape_cast %9 : vector<1x16x4xf32> to vector<16x4xf32>
    %11 = vector.shape_cast %8 : vector<16x4xf32> to vector<1x16x4xf32>
    tpu.vector_store %arg9[%c17, %c1_14, %c0_15], %11 {strides = array<i32>} : memref<18x18x4xf32, #tpu.memory_space<vmem>>, vector<1x16x4xf32>,
    %c0_16 = arith.constant 0 : index
    %c0_17 = arith.constant 0 : index
    %c0_18 = arith.constant 0 : index
    %c0_19 = arith.constant 0 : index
    %12 = vector.load %arg2[%c0_16, %c0_17, %c0_18, %c0_19] : memref<1x16x16x4xf32, #tpu.memory_space<vmem>>, vector<1x16x16x4xf32>
    %13 = vector.shape_cast %12 : vector<1x16x16x4xf32> to vector<16x16x4xf32>
    %c1_20 = arith.constant 1 : index
    %c1_21 = arith.constant 1 : index
    %c0_22 = arith.constant 0 : index
    %14 = vector.load %arg9[%c1_20, %c1_21, %c0_22] : memref<18x18x4xf32, #tpu.memory_space<vmem>>, vector<16x16x4xf32>
    tpu.vector_store %arg9[%c1_20, %c1_21, %c0_22], %13 {strides = array<i32>} : memref<18x18x4xf32, #tpu.memory_space<vmem>>, vector<16x16x4xf32>,
    %c0_23 = arith.constant 0 : index
    %c0_24 = arith.constant 0 : index
    %15 = vector.load %arg4[%c0_23, %c0_24] : memref<16x4xf32, #tpu.memory_space<vmem>>, vector<16x4xf32>
    %c0_25 = arith.constant 0 : index
    %c0_26 = arith.constant 0 : index
    %16 = vector.load %arg5[%c0_25, %c0_26] : memref<1x4xf32, #tpu.memory_space<vmem>>, vector<1x4xf32>
    %c0_27 = arith.constant 0 : index
    %c0_28 = arith.constant 0 : index
    %17 = vector.load %arg6[%c0_27, %c0_28] : memref<4x8xbf16, #tpu.memory_space<vmem>>, vector<4x8xbf16>
    %c0_29 = arith.constant 0 : index
    %c0_30 = arith.constant 0 : index
    %18 = vector.load %arg7[%c0_29, %c0_30] : memref<1x8xf32, #tpu.memory_space<vmem>>, vector<1x8xf32>
    %c0_31 = arith.constant 0 : index
    %c0_32 = arith.constant 0 : index
    %c0_33 = arith.constant 0 : index
    %19 = vector.load %arg9[%c0_31, %c0_32, %c0_33] : memref<18x18x4xf32, #tpu.memory_space<vmem>>, vector<16x16x4xf32>
    %20 = vector.extract_strided_slice %15 {offsets = [0, 0], sizes = [1, 4], strides = [1, 1]} : vector<16x4xf32> to vector<1x4xf32>
    %21 = vector.shape_cast %20 : vector<1x4xf32> to vector<4xf32>
    %22 = vector.shape_cast %21 : vector<4xf32> to vector<1x1x4xf32>
    %23 = vector.broadcast %22 : vector<1x1x4xf32> to vector<16x16x4xf32>
    %24 = arith.mulf %19, %23 : vector<16x16x4xf32>
    %c0_34 = arith.constant 0 : index
    %c1_35 = arith.constant 1 : index
    %c0_36 = arith.constant 0 : index
    %25 = vector.load %arg9[%c0_34, %c1_35, %c0_36] : memref<18x18x4xf32, #tpu.memory_space<vmem>>, vector<16x16x4xf32>
    %26 = vector.extract_strided_slice %15 {offsets = [1, 0], sizes = [1, 4], strides = [1, 1]} : vector<16x4xf32> to vector<1x4xf32>
    %27 = vector.shape_cast %26 : vector<1x4xf32> to vector<4xf32>
    %28 = vector.shape_cast %27 : vector<4xf32> to vector<1x1x4xf32>
    %29 = vector.broadcast %28 : vector<1x1x4xf32> to vector<16x16x4xf32>
    %30 = arith.mulf %25, %29 : vector<16x16x4xf32>
    %31 = arith.addf %24, %30 : vector<16x16x4xf32>
    %c1_37 = arith.constant 1 : index
    %c0_38 = arith.constant 0 : index
    %c0_39 = arith.constant 0 : index
    %32 = vector.load %arg9[%c1_37, %c0_38, %c0_39] : memref<18x18x4xf32, #tpu.memory_space<vmem>>, vector<16x16x4xf32>
    %33 = vector.extract_strided_slice %15 {offsets = [2, 0], sizes = [1, 4], strides = [1, 1]} : vector<16x4xf32> to vector<1x4xf32>
    %34 = vector.shape_cast %33 : vector<1x4xf32> to vector<4xf32>
    %35 = vector.shape_cast %34 : vector<4xf32> to vector<1x1x4xf32>
    %36 = vector.broadcast %35 : vector<1x1x4xf32> to vector<16x16x4xf32>
    %37 = arith.mulf %32, %36 : vector<16x16x4xf32>
    %38 = arith.addf %31, %37 : vector<16x16x4xf32>
    %c1_40 = arith.constant 1 : index
    %c1_41 = arith.constant 1 : index
    %c0_42 = arith.constant 0 : index
    %39 = vector.load %arg9[%c1_40, %c1_41, %c0_42] : memref<18x18x4xf32, #tpu.memory_space<vmem>>, vector<16x16x4xf32>
    %40 = vector.extract_strided_slice %15 {offsets = [3, 0], sizes = [1, 4], strides = [1, 1]} : vector<16x4xf32> to vector<1x4xf32>
    %41 = vector.shape_cast %40 : vector<1x4xf32> to vector<4xf32>
    %42 = vector.shape_cast %41 : vector<4xf32> to vector<1x1x4xf32>
    %43 = vector.broadcast %42 : vector<1x1x4xf32> to vector<16x16x4xf32>
    %44 = arith.mulf %39, %43 : vector<16x16x4xf32>
    %45 = arith.addf %38, %44 : vector<16x16x4xf32>
    %46 = vector.shape_cast %16 : vector<1x4xf32> to vector<1x1x4xf32>
    %47 = vector.broadcast %46 : vector<1x1x4xf32> to vector<16x16x4xf32>
    %48 = arith.addf %45, %47 : vector<16x16x4xf32>
    %cst_43 = arith.constant 0.000000e+00 : f32
    %49 = vector.broadcast %cst_43 : f32 to vector<16x16x4xf32>
    %50 = arith.maximumf %48, %49 : vector<16x16x4xf32>
    %51 = vector.shape_cast %50 : vector<16x16x4xf32> to vector<256x4xf32>
    %52 = arith.truncf %51 : vector<256x4xf32> to vector<256x4xbf16>
    %cst_44 = arith.constant dense<0.000000e+00> : vector<256x8xf32>
    %53 = tpu.matmul %52, %17, %cst_44 {dimension_numbers = #tpu.dot_dimension_numbers<[1], [0], [0], [1], [0, 0, 1, 1], [], []>} : vector<256x4xbf16>, vector<4x8xbf16>, vector<256x8xf32> -> vector<256x8xf32>
    %54 = vector.broadcast %18 : vector<1x8xf32> to vector<256x8xf32>
    %55 = arith.addf %53, %54 : vector<256x8xf32>
    %56 = vector.shape_cast %55 : vector<256x8xf32> to vector<16x16x8xf32>
    %c0_45 = arith.constant 0 : index
    %c0_46 = arith.constant 0 : index
    %c0_47 = arith.constant 0 : index
    %c0_48 = arith.constant 0 : index
    %c0_49 = arith.constant 0 : index
    %c0_50 = arith.constant 0 : index
    %57 = vector.load %arg8[%c0_45, %c0_46, %c0_47, %c0_48, %c0_49, %c0_50] : memref<1x2x2x16x16x8xf32, #tpu.memory_space<vmem>>, vector<1x1x1x16x16x8xf32>
    %58 = vector.shape_cast %57 : vector<1x1x1x16x16x8xf32> to vector<16x16x8xf32>
    %59 = vector.shape_cast %56 : vector<16x16x8xf32> to vector<1x1x1x16x16x8xf32>
    tpu.vector_store %arg8[%c0_45, %c0_46, %c0_47, %c0_48, %c0_49, %c0_50], %59 {strides = array<i32>} : memref<1x2x2x16x16x8xf32, #tpu.memory_space<vmem>>, vector<1x1x1x16x16x8xf32>,
    %c0_51 = arith.constant 0 : index
    %c1_52 = arith.constant 1 : index
    %c0_53 = arith.constant 0 : index
    %60 = vector.load %arg9[%c0_51, %c1_52, %c0_53] : memref<18x18x4xf32, #tpu.memory_space<vmem>>, vector<16x16x4xf32>
    %61 = vector.extract_strided_slice %15 {offsets = [4, 0], sizes = [1, 4], strides = [1, 1]} : vector<16x4xf32> to vector<1x4xf32>
    %62 = vector.shape_cast %61 : vector<1x4xf32> to vector<4xf32>
    %63 = vector.shape_cast %62 : vector<4xf32> to vector<1x1x4xf32>
    %64 = vector.broadcast %63 : vector<1x1x4xf32> to vector<16x16x4xf32>
    %65 = arith.mulf %60, %64 : vector<16x16x4xf32>
    %c0_54 = arith.constant 0 : index
    %c2 = arith.constant 2 : index
    %c0_55 = arith.constant 0 : index
    %66 = vector.load %arg9[%c0_54, %c2, %c0_55] : memref<18x18x4xf32, #tpu.memory_space<vmem>>, vector<16x16x4xf32>
    %67 = vector.extract_strided_slice %15 {offsets = [5, 0], sizes = [1, 4], strides = [1, 1]} : vector<16x4xf32> to vector<1x4xf32>
    %68 = vector.shape_cast %67 : vector<1x4xf32> to vector<4xf32>
    %69 = vector.shape_cast %68 : vector<4xf32> to vector<1x1x4xf32>
    %70 = vector.broadcast %69 : vector<1x1x4xf32> to vector<16x16x4xf32>
    %71 = arith.mulf %66, %70 : vector<16x16x4xf32>
    %72 = arith.addf %65, %71 : vector<16x16x4xf32>
    %c1_56 = arith.constant 1 : index
    %c1_57 = arith.constant 1 : index
    %c0_58 = arith.constant 0 : index
    %73 = vector.load %arg9[%c1_56, %c1_57, %c0_58] : memref<18x18x4xf32, #tpu.memory_space<vmem>>, vector<16x16x4xf32>
    %74 = vector.extract_strided_slice %15 {offsets = [6, 0], sizes = [1, 4], strides = [1, 1]} : vector<16x4xf32> to vector<1x4xf32>
    %75 = vector.shape_cast %74 : vector<1x4xf32> to vector<4xf32>
    %76 = vector.shape_cast %75 : vector<4xf32> to vector<1x1x4xf32>
    %77 = vector.broadcast %76 : vector<1x1x4xf32> to vector<16x16x4xf32>
    %78 = arith.mulf %73, %77 : vector<16x16x4xf32>
    %79 = arith.addf %72, %78 : vector<16x16x4xf32>
    %c1_59 = arith.constant 1 : index
    %c2_60 = arith.constant 2 : index
    %c0_61 = arith.constant 0 : index
    %80 = vector.load %arg9[%c1_59, %c2_60, %c0_61] : memref<18x18x4xf32, #tpu.memory_space<vmem>>, vector<16x16x4xf32>
    %81 = vector.extract_strided_slice %15 {offsets = [7, 0], sizes = [1, 4], strides = [1, 1]} : vector<16x4xf32> to vector<1x4xf32>
    %82 = vector.shape_cast %81 : vector<1x4xf32> to vector<4xf32>
    %83 = vector.shape_cast %82 : vector<4xf32> to vector<1x1x4xf32>
    %84 = vector.broadcast %83 : vector<1x1x4xf32> to vector<16x16x4xf32>
    %85 = arith.mulf %80, %84 : vector<16x16x4xf32>
    %86 = arith.addf %79, %85 : vector<16x16x4xf32>
    %87 = vector.shape_cast %16 : vector<1x4xf32> to vector<1x1x4xf32>
    %88 = vector.broadcast %87 : vector<1x1x4xf32> to vector<16x16x4xf32>
    %89 = arith.addf %86, %88 : vector<16x16x4xf32>
    %cst_62 = arith.constant 0.000000e+00 : f32
    %90 = vector.broadcast %cst_62 : f32 to vector<16x16x4xf32>
    %91 = arith.maximumf %89, %90 : vector<16x16x4xf32>
    %92 = vector.shape_cast %91 : vector<16x16x4xf32> to vector<256x4xf32>
    %93 = arith.truncf %92 : vector<256x4xf32> to vector<256x4xbf16>
    %cst_63 = arith.constant dense<0.000000e+00> : vector<256x8xf32>
    %94 = tpu.matmul %93, %17, %cst_63 {dimension_numbers = #tpu.dot_dimension_numbers<[1], [0], [0], [1], [0, 0, 1, 1], [], []>} : vector<256x4xbf16>, vector<4x8xbf16>, vector<256x8xf32> -> vector<256x8xf32>
    %95 = vector.broadcast %18 : vector<1x8xf32> to vector<256x8xf32>
    %96 = arith.addf %94, %95 : vector<256x8xf32>
    %97 = vector.shape_cast %96 : vector<256x8xf32> to vector<16x16x8xf32>
    %c0_64 = arith.constant 0 : index
    %c0_65 = arith.constant 0 : index
    %c1_66 = arith.constant 1 : index
    %c0_67 = arith.constant 0 : index
    %c0_68 = arith.constant 0 : index
    %c0_69 = arith.constant 0 : index
    %98 = vector.load %arg8[%c0_64, %c0_65, %c1_66, %c0_67, %c0_68, %c0_69] : memref<1x2x2x16x16x8xf32, #tpu.memory_space<vmem>>, vector<1x1x1x16x16x8xf32>
    %99 = vector.shape_cast %98 : vector<1x1x1x16x16x8xf32> to vector<16x16x8xf32>
    %100 = vector.shape_cast %97 : vector<16x16x8xf32> to vector<1x1x1x16x16x8xf32>
    tpu.vector_store %arg8[%c0_64, %c0_65, %c1_66, %c0_67, %c0_68, %c0_69], %100 {strides = array<i32>} : memref<1x2x2x16x16x8xf32, #tpu.memory_space<vmem>>, vector<1x1x1x16x16x8xf32>,
    %c1_70 = arith.constant 1 : index
    %c0_71 = arith.constant 0 : index
    %c0_72 = arith.constant 0 : index
    %101 = vector.load %arg9[%c1_70, %c0_71, %c0_72] : memref<18x18x4xf32, #tpu.memory_space<vmem>>, vector<16x16x4xf32>
    %102 = vector.extract_strided_slice %15 {offsets = [8, 0], sizes = [1, 4], strides = [1, 1]} : vector<16x4xf32> to vector<1x4xf32>
    %103 = vector.shape_cast %102 : vector<1x4xf32> to vector<4xf32>
    %104 = vector.shape_cast %103 : vector<4xf32> to vector<1x1x4xf32>
    %105 = vector.broadcast %104 : vector<1x1x4xf32> to vector<16x16x4xf32>
    %106 = arith.mulf %101, %105 : vector<16x16x4xf32>
    %c1_73 = arith.constant 1 : index
    %c1_74 = arith.constant 1 : index
    %c0_75 = arith.constant 0 : index
    %107 = vector.load %arg9[%c1_73, %c1_74, %c0_75] : memref<18x18x4xf32, #tpu.memory_space<vmem>>, vector<16x16x4xf32>
    %108 = vector.extract_strided_slice %15 {offsets = [9, 0], sizes = [1, 4], strides = [1, 1]} : vector<16x4xf32> to vector<1x4xf32>
    %109 = vector.shape_cast %108 : vector<1x4xf32> to vector<4xf32>
    %110 = vector.shape_cast %109 : vector<4xf32> to vector<1x1x4xf32>
    %111 = vector.broadcast %110 : vector<1x1x4xf32> to vector<16x16x4xf32>
    %112 = arith.mulf %107, %111 : vector<16x16x4xf32>
    %113 = arith.addf %106, %112 : vector<16x16x4xf32>
    %c2_76 = arith.constant 2 : index
    %c0_77 = arith.constant 0 : index
    %c0_78 = arith.constant 0 : index
    %114 = vector.load %arg9[%c2_76, %c0_77, %c0_78] : memref<18x18x4xf32, #tpu.memory_space<vmem>>, vector<16x16x4xf32>
    %115 = vector.extract_strided_slice %15 {offsets = [10, 0], sizes = [1, 4], strides = [1, 1]} : vector<16x4xf32> to vector<1x4xf32>
    %116 = vector.shape_cast %115 : vector<1x4xf32> to vector<4xf32>
    %117 = vector.shape_cast %116 : vector<4xf32> to vector<1x1x4xf32>
    %118 = vector.broadcast %117 : vector<1x1x4xf32> to vector<16x16x4xf32>
    %119 = arith.mulf %114, %118 : vector<16x16x4xf32>
    %120 = arith.addf %113, %119 : vector<16x16x4xf32>
    %c2_79 = arith.constant 2 : index
    %c1_80 = arith.constant 1 : index
    %c0_81 = arith.constant 0 : index
    %121 = vector.load %arg9[%c2_79, %c1_80, %c0_81] : memref<18x18x4xf32, #tpu.memory_space<vmem>>, vector<16x16x4xf32>
    %122 = vector.extract_strided_slice %15 {offsets = [11, 0], sizes = [1, 4], strides = [1, 1]} : vector<16x4xf32> to vector<1x4xf32>
    %123 = vector.shape_cast %122 : vector<1x4xf32> to vector<4xf32>
    %124 = vector.shape_cast %123 : vector<4xf32> to vector<1x1x4xf32>
    %125 = vector.broadcast %124 : vector<1x1x4xf32> to vector<16x16x4xf32>
    %126 = arith.mulf %121, %125 : vector<16x16x4xf32>
    %127 = arith.addf %120, %126 : vector<16x16x4xf32>
    %128 = vector.shape_cast %16 : vector<1x4xf32> to vector<1x1x4xf32>
    %129 = vector.broadcast %128 : vector<1x1x4xf32> to vector<16x16x4xf32>
    %130 = arith.addf %127, %129 : vector<16x16x4xf32>
    %cst_82 = arith.constant 0.000000e+00 : f32
    %131 = vector.broadcast %cst_82 : f32 to vector<16x16x4xf32>
    %132 = arith.maximumf %130, %131 : vector<16x16x4xf32>
    %133 = vector.shape_cast %132 : vector<16x16x4xf32> to vector<256x4xf32>
    %134 = arith.truncf %133 : vector<256x4xf32> to vector<256x4xbf16>
    %cst_83 = arith.constant dense<0.000000e+00> : vector<256x8xf32>
    %135 = tpu.matmul %134, %17, %cst_83 {dimension_numbers = #tpu.dot_dimension_numbers<[1], [0], [0], [1], [0, 0, 1, 1], [], []>} : vector<256x4xbf16>, vector<4x8xbf16>, vector<256x8xf32> -> vector<256x8xf32>
    %136 = vector.broadcast %18 : vector<1x8xf32> to vector<256x8xf32>
    %137 = arith.addf %135, %136 : vector<256x8xf32>
    %138 = vector.shape_cast %137 : vector<256x8xf32> to vector<16x16x8xf32>
    %c0_84 = arith.constant 0 : index
    %c1_85 = arith.constant 1 : index
    %c0_86 = arith.constant 0 : index
    %c0_87 = arith.constant 0 : index
    %c0_88 = arith.constant 0 : index
    %c0_89 = arith.constant 0 : index
    %139 = vector.load %arg8[%c0_84, %c1_85, %c0_86, %c0_87, %c0_88, %c0_89] : memref<1x2x2x16x16x8xf32, #tpu.memory_space<vmem>>, vector<1x1x1x16x16x8xf32>
    %140 = vector.shape_cast %139 : vector<1x1x1x16x16x8xf32> to vector<16x16x8xf32>
    %141 = vector.shape_cast %138 : vector<16x16x8xf32> to vector<1x1x1x16x16x8xf32>
    tpu.vector_store %arg8[%c0_84, %c1_85, %c0_86, %c0_87, %c0_88, %c0_89], %141 {strides = array<i32>} : memref<1x2x2x16x16x8xf32, #tpu.memory_space<vmem>>, vector<1x1x1x16x16x8xf32>,
    %c1_90 = arith.constant 1 : index
    %c1_91 = arith.constant 1 : index
    %c0_92 = arith.constant 0 : index
    %142 = vector.load %arg9[%c1_90, %c1_91, %c0_92] : memref<18x18x4xf32, #tpu.memory_space<vmem>>, vector<16x16x4xf32>
    %143 = vector.extract_strided_slice %15 {offsets = [12, 0], sizes = [1, 4], strides = [1, 1]} : vector<16x4xf32> to vector<1x4xf32>
    %144 = vector.shape_cast %143 : vector<1x4xf32> to vector<4xf32>
    %145 = vector.shape_cast %144 : vector<4xf32> to vector<1x1x4xf32>
    %146 = vector.broadcast %145 : vector<1x1x4xf32> to vector<16x16x4xf32>
    %147 = arith.mulf %142, %146 : vector<16x16x4xf32>
    %c1_93 = arith.constant 1 : index
    %c2_94 = arith.constant 2 : index
    %c0_95 = arith.constant 0 : index
    %148 = vector.load %arg9[%c1_93, %c2_94, %c0_95] : memref<18x18x4xf32, #tpu.memory_space<vmem>>, vector<16x16x4xf32>
    %149 = vector.extract_strided_slice %15 {offsets = [13, 0], sizes = [1, 4], strides = [1, 1]} : vector<16x4xf32> to vector<1x4xf32>
    %150 = vector.shape_cast %149 : vector<1x4xf32> to vector<4xf32>
    %151 = vector.shape_cast %150 : vector<4xf32> to vector<1x1x4xf32>
    %152 = vector.broadcast %151 : vector<1x1x4xf32> to vector<16x16x4xf32>
    %153 = arith.mulf %148, %152 : vector<16x16x4xf32>
    %154 = arith.addf %147, %153 : vector<16x16x4xf32>
    %c2_96 = arith.constant 2 : index
    %c1_97 = arith.constant 1 : index
    %c0_98 = arith.constant 0 : index
    %155 = vector.load %arg9[%c2_96, %c1_97, %c0_98] : memref<18x18x4xf32, #tpu.memory_space<vmem>>, vector<16x16x4xf32>
    %156 = vector.extract_strided_slice %15 {offsets = [14, 0], sizes = [1, 4], strides = [1, 1]} : vector<16x4xf32> to vector<1x4xf32>
    %157 = vector.shape_cast %156 : vector<1x4xf32> to vector<4xf32>
    %158 = vector.shape_cast %157 : vector<4xf32> to vector<1x1x4xf32>
    %159 = vector.broadcast %158 : vector<1x1x4xf32> to vector<16x16x4xf32>
    %160 = arith.mulf %155, %159 : vector<16x16x4xf32>
    %161 = arith.addf %154, %160 : vector<16x16x4xf32>
    %c2_99 = arith.constant 2 : index
    %c2_100 = arith.constant 2 : index
    %c0_101 = arith.constant 0 : index
    %162 = vector.load %arg9[%c2_99, %c2_100, %c0_101] : memref<18x18x4xf32, #tpu.memory_space<vmem>>, vector<16x16x4xf32>
    %163 = vector.extract_strided_slice %15 {offsets = [15, 0], sizes = [1, 4], strides = [1, 1]} : vector<16x4xf32> to vector<1x4xf32>
    %164 = vector.shape_cast %163 : vector<1x4xf32> to vector<4xf32>
    %165 = vector.shape_cast %164 : vector<4xf32> to vector<1x1x4xf32>
    %166 = vector.broadcast %165 : vector<1x1x4xf32> to vector<16x16x4xf32>
    %167 = arith.mulf %162, %166 : vector<16x16x4xf32>
    %168 = arith.addf %161, %167 : vector<16x16x4xf32>
    %169 = vector.shape_cast %16 : vector<1x4xf32> to vector<1x1x4xf32>
    %170 = vector.broadcast %169 : vector<1x1x4xf32> to vector<16x16x4xf32>
    %171 = arith.addf %168, %170 : vector<16x16x4xf32>
    %cst_102 = arith.constant 0.000000e+00 : f32
    %172 = vector.broadcast %cst_102 : f32 to vector<16x16x4xf32>
    %173 = arith.maximumf %171, %172 : vector<16x16x4xf32>
    %174 = vector.shape_cast %173 : vector<16x16x4xf32> to vector<256x4xf32>
    %175 = arith.truncf %174 : vector<256x4xf32> to vector<256x4xbf16>
    %cst_103 = arith.constant dense<0.000000e+00> : vector<256x8xf32>
    %176 = tpu.matmul %175, %17, %cst_103 {dimension_numbers = #tpu.dot_dimension_numbers<[1], [0], [0], [1], [0, 0, 1, 1], [], []>} : vector<256x4xbf16>, vector<4x8xbf16>, vector<256x8xf32> -> vector<256x8xf32>
    %177 = vector.broadcast %18 : vector<1x8xf32> to vector<256x8xf32>
    %178 = arith.addf %176, %177 : vector<256x8xf32>
    %179 = vector.shape_cast %178 : vector<256x8xf32> to vector<16x16x8xf32>
    %c0_104 = arith.constant 0 : index
    %c1_105 = arith.constant 1 : index
    %c1_106 = arith.constant 1 : index
    %c0_107 = arith.constant 0 : index
    %c0_108 = arith.constant 0 : index
    %c0_109 = arith.constant 0 : index
    %180 = vector.load %arg8[%c0_104, %c1_105, %c1_106, %c0_107, %c0_108, %c0_109] : memref<1x2x2x16x16x8xf32, #tpu.memory_space<vmem>>, vector<1x1x1x16x16x8xf32>
    %181 = vector.shape_cast %180 : vector<1x1x1x16x16x8xf32> to vector<16x16x8xf32>
    %182 = vector.shape_cast %179 : vector<16x16x8xf32> to vector<1x1x1x16x16x8xf32>
    tpu.vector_store %arg8[%c0_104, %c1_105, %c1_106, %c0_107, %c0_108, %c0_109], %182 {strides = array<i32>} : memref<1x2x2x16x16x8xf32, #tpu.memory_space<vmem>>, vector<1x1x1x16x16x8xf32>,
    return
  }
  func.func @transform_0(%arg0: i32, %arg1: i32) -> (i32, i32, i32, i32) {
    %c0_i32 = arith.constant 0 : i32
    %c0_i32_0 = arith.constant 0 : i32
    %c0_i32_1 = arith.constant 0 : i32
    return %arg0, %arg1, %c0_i32, %c0_i32_0 : i32, i32, i32, i32
  }
  func.func @transform_1(%arg0: i32, %arg1: i32) -> (i32, i32, i32, i32, i32) {
    %c0_i32 = arith.constant 0 : i32
    %c0_i32_0 = arith.constant 0 : i32
    %c0_i32_1 = arith.constant 0 : i32
    %c0_i32_2 = arith.constant 0 : i32
    return %arg0, %arg1, %c0_i32, %c0_i32_0, %c0_i32_1 : i32, i32, i32, i32, i32
  }
  func.func @transform_2(%arg0: i32, %arg1: i32) -> (i32, i32) {
    %c0_i32 = arith.constant 0 : i32
    %c0_i32_0 = arith.constant 0 : i32
    %c0_i32_1 = arith.constant 0 : i32
    return %c0_i32, %c0_i32_0 : i32, i32
  }
  func.func @transform_3(%arg0: i32, %arg1: i32) -> (i32, i32) {
    %c0_i32 = arith.constant 0 : i32
    %c0_i32_0 = arith.constant 0 : i32
    %c0_i32_1 = arith.constant 0 : i32
    return %c0_i32, %c0_i32_0 : i32, i32
  }
  func.func @transform_4(%arg0: i32, %arg1: i32) -> (i32, i32) {
    %c0_i32 = arith.constant 0 : i32
    %c0_i32_0 = arith.constant 0 : i32
    %c0_i32_1 = arith.constant 0 : i32
    return %c0_i32, %c0_i32_0 : i32, i32
  }
  func.func @transform_5(%arg0: i32, %arg1: i32) -> (i32, i32) {
    %c0_i32 = arith.constant 0 : i32
    %c0_i32_0 = arith.constant 0 : i32
    %c0_i32_1 = arith.constant 0 : i32
    return %c0_i32, %c0_i32_0 : i32, i32
  }
  func.func @transform_6(%arg0: i32, %arg1: i32) -> (i32, i32, i32, i32, i32, i32) {
    %c0_i32 = arith.constant 0 : i32
    %c0_i32_0 = arith.constant 0 : i32
    %c0_i32_1 = arith.constant 0 : i32
    %c0_i32_2 = arith.constant 0 : i32
    %c0_i32_3 = arith.constant 0 : i32
    return %arg0, %c0_i32, %c0_i32_0, %arg1, %c0_i32_1, %c0_i32_2 : i32, i32, i32, i32, i32, i32
  }
}

</mosaic_0001>

<llo_original>
// kernel: tpu_custom_call.1
$region0: #{tpu_custom_call.1}
  #allocation0 [shape = 'u32[]', space=smem, size = 0x4, offset = 0x4, fixed_abs, tag = 'smem constant byte address 0x4 - core index']
  #allocation1 [shape = 'u32[144,128]{1,0:T(1,128)}', space=vmem, size = 0x12000, scoped, tag = 'internal scratch']
  #allocation2 [shape = 'f32[18,18,4]{2,1,0:T(8,128)}', space=vmem, size = 0x36000, scoped, tag = 'scratch operand']
  %s0 = inlined_call_operand.vmem [shape: f32[2,16,16,4], index: 0, kind: input, shape index: {}]
  %s1 = inlined_call_operand.vmem [shape: f32[2,1,2,16,4], index: 1, kind: input, shape index: {}]
  %s2 = inlined_call_operand.vmem [shape: f32[16,4], index: 2, kind: input, shape index: {}]
  %s3 = inlined_call_operand.vmem [shape: f32[1,4], index: 3, kind: input, shape index: {}]
  %s4 = inlined_call_operand.vmem [shape: bf16[4,8], index: 4, kind: input, shape index: {}]
  %s5 = inlined_call_operand.vmem [shape: f32[1,8], index: 5, kind: input, shape index: {}]
  %s6 = inlined_call_operand.vmem [shape: f32[2,2,2,16,16,8], index: 6, kind: output, shape index: {}]
  %s7 = sld [smem:[#allocation0]]
  $region57: #{tpu_custom_call.1} parent=0
    _
  %s9 = ssub.s32 1, %s7
  %s10 = scalar_select 0, %s9, %s7
  loop: start=0, step=1, limit=4
  $region2: #{tpu_custom_call.1} parent=0 // loop_pre_header
    _
  $region3: #{tpu_custom_call.1} parent=0 // loop_header
    %s12 = sphi 0, %s16
    %p13 = scmp.ge.s32.totalorder %s12, 4
    %s19 = sphi 0, %s31
    %s20 = sphi 0, %s27
    %s21 = sphi 0, %s19
    %s22 = sphi 0, %s20
    %s23 = sphi 0, %s21
    %s24 = sphi 0, %s22
    %s36 = sphi 0, %s38
    %s39 = sphi 0, %s36
    %s40 = sphi 0, %s39
    %s56 = sphi 0, %s40
    %s64 = sphi 0, %s66
    %s67 = sphi 0, %s64
    %s68 = sphi 0, %s67
    %s84 = sphi 0, %s68
    %s88 = sphi 0, %s88
    %s90 = sphi 0, %s88
    %s91 = sphi 0, %s90
    %s105 = sphi 0, %s91
    %s109 = sphi 0, %s109
    %s111 = sphi 0, %s109
    %s112 = sphi 0, %s111
    %s126 = sphi 0, %s112
    %s130 = sphi 0, %s130
    %s132 = sphi 0, %s130
    %s133 = sphi 0, %s132
    %s147 = sphi 0, %s133
    %s151 = sphi 0, %s151
    %s153 = sphi 0, %s151
    %s154 = sphi 0, %s153
    %s168 = sphi 0, %s154
    %s176 = sphi 0, %s178
    %s179 = sphi 0, %s176
    %s180 = sphi 0, %s179
    %s196 = sphi 0, %s180
  $region4: #{tpu_custom_call.1} parent=0 // loop_header_branch
    %15 = sbr.rel (%p13) target = $region8
  $region5: #{tpu_custom_call.1} parent=0 // loop_body
    %s17 = ssub.s32 %s12, 1
    %s18 = ssub.s32 %s12, 2
    %s25 = sadd.s32 1, %s20
    %p26 = scmp.ge.s32.totalorder %s25, 1
    %s27 = scalar_select %p26, 0, %s25
    %s28 = sadd.s32 1, %s19
    %s29 = scalar_select %p26, %s28, %s19
    %p30 = scmp.ge.s32.totalorder %s29, 2
    %s31 = scalar_select %p30, 0, %s29
    %s32 = ssub.s32 %s19, %s31
    %s33 = ssub.s32 %s20, %s27
    %s34 = sor.u32 %s32, %s33
    %p35 = scmp.eq.s32.totalorder %s34, 0
    %s37 = sadd.s32 %s36, 1
    %s38 = scalar_select %p35, %s36, %s37
    %p41 = pneg %p35
    %p42 = scmp.eq.s32.totalorder %s12, 1
    %p43 = por %p41, %p42
    %p44 = scmp.ne.s32.totalorder %s36, %s39
    %p45 = scmp.eq.s32.totalorder %s12, 0
    %p46 = por %p44, %p45
    %p47 = scmp.ne.s32.totalorder %s36, %s39
    %p48 = scmp.eq.s32.totalorder %s17, 1
    %p49 = por %p47, %p48
    %p50 = scmp.ne.s32.totalorder %s39, %s40
    %p51 = scmp.eq.s32.totalorder %s17, 0
    %p52 = por %p50, %p51
    %p53 = scmp.ne.s32.totalorder %s39, %s40
    %p54 = scmp.eq.s32.totalorder %s18, 1
    %p55 = por %p53, %p54
    %p57 = scmp.ne.s32.totalorder %s40, %s56
    %p58 = scmp.eq.s32.totalorder %s18, 0
    %p59 = por %p57, %p58
    %s60 = ssub.s32 %s19, %s31
    %s61 = ssub.s32 %s20, %s27
    %s62 = sor.u32 %s60, %s61
    %p63 = scmp.eq.s32.totalorder %s62, 0
    %s65 = sadd.s32 %s64, 1
    %s66 = scalar_select %p63, %s64, %s65
    %p69 = pneg %p63
    %p70 = scmp.eq.s32.totalorder %s12, 1
    %p71 = por %p69, %p70
    %p72 = scmp.ne.s32.totalorder %s64, %s67
    %p73 = scmp.eq.s32.totalorder %s12, 0
    %p74 = por %p72, %p73
    %p75 = scmp.ne.s32.totalorder %s64, %s67
    %p76 = scmp.eq.s32.totalorder %s17, 1
    %p77 = por %p75, %p76
    %p78 = scmp.ne.s32.totalorder %s67, %s68
    %p79 = scmp.eq.s32.totalorder %s17, 0
    %p80 = por %p78, %p79
    %p81 = scmp.ne.s32.totalorder %s67, %s68
    %p82 = scmp.eq.s32.totalorder %s18, 1
    %p83 = por %p81, %p82
    %p85 = scmp.ne.s32.totalorder %s68, %s84
    %p86 = scmp.eq.s32.totalorder %s18, 0
    %p87 = por %p85, %p86
    %s89 = sadd.s32 %s88, 1
    %p92 = scmp.eq.s32.totalorder %s12, 1
    %p93 = scmp.ne.s32.totalorder %s88, %s90
    %p94 = scmp.eq.s32.totalorder %s12, 0
    %p95 = por %p93, %p94
    %p96 = scmp.ne.s32.totalorder %s88, %s90
    %p97 = scmp.eq.s32.totalorder %s17, 1
    %p98 = por %p96, %p97
    %p99 = scmp.ne.s32.totalorder %s90, %s91
    %p100 = scmp.eq.s32.totalorder %s17, 0
    %p101 = por %p99, %p100
    %p102 = scmp.ne.s32.totalorder %s90, %s91
    %p103 = scmp.eq.s32.totalorder %s18, 1
    %p104 = por %p102, %p103
    %p106 = scmp.ne.s32.totalorder %s91, %s105
    %p107 = scmp.eq.s32.totalorder %s18, 0
    %p108 = por %p106, %p107
    %s110 = sadd.s32 %s109, 1
    %p113 = scmp.eq.s32.totalorder %s12, 1
    %p114 = scmp.ne.s32.totalorder %s109, %s111
    %p115 = scmp.eq.s32.totalorder %s12, 0
    %p116 = por %p114, %p115
    %p117 = scmp.ne.s32.totalorder %s109, %s111
    %p118 = scmp.eq.s32.totalorder %s17, 1
    %p119 = por %p117, %p118
    %p120 = scmp.ne.s32.totalorder %s111, %s112
    %p121 = scmp.eq.s32.totalorder %s17, 0
    %p122 = por %p120, %p121
    %p123 = scmp.ne.s32.totalorder %s111, %s112
    %p124 = scmp.eq.s32.totalorder %s18, 1
    %p125 = por %p123, %p124
    %p127 = scmp.ne.s32.totalorder %s112, %s126
    %p128 = scmp.eq.s32.totalorder %s18, 0
    %p129 = por %p127, %p128
    %s131 = sadd.s32 %s130, 1
    %p134 = scmp.eq.s32.totalorder %s12, 1
    %p135 = scmp.ne.s32.totalorder %s130, %s132
    %p136 = scmp.eq.s32.totalorder %s12, 0
    %p137 = por %p135, %p136
    %p138 = scmp.ne.s32.totalorder %s130, %s132
    %p139 = scmp.eq.s32.totalorder %s17, 1
    %p140 = por %p138, %p139
    %p141 = scmp.ne.s32.totalorder %s132, %s133
    %p142 = scmp.eq.s32.totalorder %s17, 0
    %p143 = por %p141, %p142
    %p144 = scmp.ne.s32.totalorder %s132, %s133
    %p145 = scmp.eq.s32.totalorder %s18, 1
    %p146 = por %p144, %p145
    %p148 = scmp.ne.s32.totalorder %s133, %s147
    %p149 = scmp.eq.s32.totalorder %s18, 0
    %p150 = por %p148, %p149
    %s152 = sadd.s32 %s151, 1
    %p155 = scmp.eq.s32.totalorder %s12, 1
    %p156 = scmp.ne.s32.totalorder %s151, %s153
    %p157 = scmp.eq.s32.totalorder %s12, 0
    %p158 = por %p156, %p157
    %p159 = scmp.ne.s32.totalorder %s151, %s153
    %p160 = scmp.eq.s32.totalorder %s17, 1
    %p161 = por %p159, %p160
    %p162 = scmp.ne.s32.totalorder %s153, %s154
    %p163 = scmp.eq.s32.totalorder %s17, 0
    %p164 = por %p162, %p163
    %p165 = scmp.ne.s32.totalorder %s153, %s154
    %p166 = scmp.eq.s32.totalorder %s18, 1
    %p167 = por %p165, %p166
    %p169 = scmp.ne.s32.totalorder %s154, %s168
    %p170 = scmp.eq.s32.totalorder %s18, 0
    %p171 = por %p169, %p170
    %s172 = ssub.s32 %s19, %s31
    %s173 = ssub.s32 %s20, %s27
    %s174 = sor.u32 %s172, %s173
    %p175 = scmp.eq.s32.totalorder %s174, 0
    %s177 = sadd.s32 %s176, 1
    %s178 = scalar_select %p175, %s176, %s177
    %p181 = pneg %p175
    %p182 = scmp.eq.s32.totalorder %s12, 1
    %p183 = por %p181, %p182
    %p184 = scmp.ne.s32.totalorder %s176, %s179
    %p185 = scmp.eq.s32.totalorder %s12, 0
    %p186 = por %p184, %p185
    %p187 = scmp.ne.s32.totalorder %s176, %s179
    %p188 = scmp.eq.s32.totalorder %s17, 1
    %p189 = por %p187, %p188
    %p190 = scmp.ne.s32.totalorder %s179, %s180
    %p191 = scmp.eq.s32.totalorder %s17, 0
    %p192 = por %p190, %p191
    %p193 = scmp.ne.s32.totalorder %s179, %s180
    %p194 = scmp.eq.s32.totalorder %s18, 1
    %p195 = por %p193, %p194
    %p197 = scmp.ne.s32.totalorder %s180, %s196
    %p198 = scmp.eq.s32.totalorder %s18, 0
    %p199 = por %p197, %p198
    %p200 = scmp.le.s32.totalorder 1, %s12
    %p201 = scmp.lt.s32.totalorder %s12, 3
    %p202 = pnand %p200, %p201
    %p203 = pneg %p202
    // Predicated region
    $region9: #{tpu_custom_call.1} parent=5 // pred_check
      _
    $region10: #{tpu_custom_call.1} parent=5 // pred_check_branch
      %205 = sbr.rel (%p202) target = $region12
    $region11: #{tpu_custom_call.1} parent=5 // pred_region
      %s206 = ssub.s32 %s12, 1
      // Predicated region
      $region13: #{tpu_custom_call.1} parent=11 // pred_check
        %p207 = pneg %p101
      $region14: #{tpu_custom_call.1} parent=11 // pred_check_branch
        %209 = sbr.rel (%p207) target = $region16
      $region15: #{tpu_custom_call.1} parent=11 // pred_region
        _
      $region16: #{tpu_custom_call.1} parent=11 // pred_fallthru
        _
      // Predicated region
      $region17: #{tpu_custom_call.1} parent=11 // pred_check
        %p210 = pneg %p122
      $region18: #{tpu_custom_call.1} parent=11 // pred_check_branch
        %212 = sbr.rel (%p210) target = $region20
      $region19: #{tpu_custom_call.1} parent=11 // pred_region
        _
      $region20: #{tpu_custom_call.1} parent=11 // pred_fallthru
        _
      // Predicated region
      $region21: #{tpu_custom_call.1} parent=11 // pred_check
        %p213 = pneg %p143
      $region22: #{tpu_custom_call.1} parent=11 // pred_check_branch
        %215 = sbr.rel (%p213) target = $region24
      $region23: #{tpu_custom_call.1} parent=11 // pred_region
        _
      $region24: #{tpu_custom_call.1} parent=11 // pred_fallthru
        _
      // Predicated region
      $region25: #{tpu_custom_call.1} parent=11 // pred_check
        %p216 = pneg %p164
      $region26: #{tpu_custom_call.1} parent=11 // pred_check_branch
        %218 = sbr.rel (%p216) target = $region28
      $region27: #{tpu_custom_call.1} parent=11 // pred_region
        _
      $region28: #{tpu_custom_call.1} parent=11 // pred_fallthru
        _
    $region12: #{tpu_custom_call.1} parent=5 // pred_fallthru
      _
    %p219 = scmp.lt.s32.totalorder %s12, 2
    // Predicated region
    $region29: #{tpu_custom_call.1} parent=5 // pred_check
      %p220 = pneg %p219
    $region30: #{tpu_custom_call.1} parent=5 // pred_check_branch
      %222 = sbr.rel (%p220) target = $region32
    $region31: #{tpu_custom_call.1} parent=5 // pred_region
      // Predicated region
      $region33: #{tpu_custom_call.1} parent=31 // pred_check
        %p223 = pneg %p46
      $region34: #{tpu_custom_call.1} parent=31 // pred_check_branch
        %225 = sbr.rel (%p223) target = $region36
      $region35: #{tpu_custom_call.1} parent=31 // pred_region
        %s226 = smul.u32 16, %s20
        %p227 = scmp.lt.s32.totalorder %s19, 1
        %s228 = scalar_select %p227, %s19, 1
        %p229 = scmp.lt.s32.totalorder %s226, 15
        %s230 = scalar_select %p229, %s226, 15
        %s231 = smul.addr %s230, 2
        %s232 = smul.addr %s228, 32
        %s233 = sadd.s32 %s231, %s232
        %s234 = smul.addr %s233, 8
        %s235 = scalar_lea.vmem %s0, %s234
        %s236 = smul.u32 16, %s20
      $region36: #{tpu_custom_call.1} parent=31 // pred_fallthru
        _
      // Predicated region
      $region37: #{tpu_custom_call.1} parent=31 // pred_check
        %p237 = pneg %p74
      $region38: #{tpu_custom_call.1} parent=31 // pred_check_branch
        %239 = sbr.rel (%p237) target = $region40
      $region39: #{tpu_custom_call.1} parent=31 // pred_region
        %p240 = scmp.lt.s32.totalorder %s19, 1
        %s241 = scalar_select %p240, %s19, 1
        %p242 = scmp.lt.s32.totalorder %s20, 0
        %s243 = scalar_select %p242, %s20, 0
        %s244 = smul.addr %s243, 4
        %s245 = smul.addr %s241, 4
        %s246 = sadd.s32 %s244, %s245
        %s247 = smul.addr %s246, 8
        %s248 = scalar_lea.vmem %s1, %s247
      $region40: #{tpu_custom_call.1} parent=31 // pred_fallthru
        _
    $region32: #{tpu_custom_call.1} parent=5 // pred_fallthru
      _
    %p249 = scmp.le.s32.totalorder 1, %s12
    %p250 = scmp.lt.s32.totalorder %s12, 3
    %p251 = pnand %p249, %p250
    %p252 = pneg %p251
    // Predicated region
    $region41: #{tpu_custom_call.1} parent=5 // pred_check
      _
    $region42: #{tpu_custom_call.1} parent=5 // pred_check_branch
      %254 = sbr.rel (%p251) target = $region44
    $region43: #{tpu_custom_call.1} parent=5 // pred_region
      %s255 = ssub.s32 %s12, 1
      %s256 = smul.u32 16, %s22
      %p257 = scmp.lt.s32.totalorder %s21, 1
      %s258 = scalar_select %p257, %s21, 1
      %p259 = scmp.lt.s32.totalorder %s256, 15
      %s260 = scalar_select %p259, %s256, 15
      %s261 = smul.addr %s260, 2
      %s262 = smul.addr %s258, 32
      %s263 = sadd.s32 %s261, %s262
      %s264 = smul.addr %s263, 8
      %s265 = scalar_lea.vmem %s0, %s264
      %p266 = pneg %p52
      %p267 = pneg %p49
      %p268 = scmp.lt.s32.totalorder %s21, 1
      %s269 = scalar_select %p268, %s21, 1
      %p270 = scmp.lt.s32.totalorder %s22, 0
      %s271 = scalar_select %p270, %s22, 0
      %s272 = smul.addr %s271, 4
      %s273 = smul.addr %s269, 4
      %s274 = sadd.s32 %s272, %s273
      %s275 = smul.addr %s274, 8
      %s276 = scalar_lea.vmem %s1, %s275
      %p277 = pneg %p80
      %p278 = pneg %p77
      %p279 = pneg %p101
      %p280 = pneg %p98
      %p281 = pneg %p122
      %p282 = pneg %p119
      %p283 = pneg %p143
      %p284 = pneg %p140
      %p285 = pneg %p164
      %p286 = pneg %p161
      %p287 = pneg %p192
      %p288 = pneg %p189
      %s289 = smul.u32 16, %s22
      %p290 = scmp.lt.s32.totalorder %s21, 1
      %s291 = scalar_select %p290, %s21, 1
      %p292 = scmp.lt.s32.totalorder %s289, 15
      %s293 = scalar_select %p292, %s289, 15
      %s294 = smul.addr %s293, 2
      %s295 = smul.addr %s291, 128
      %s296 = sadd.s32 %s294, %s295
      %s297 = smul.addr %s296, 8
      %s298 = scalar_lea.vmem %s6, %s297
      %s299 = smul.u32 16, %s22
      %p300 = scmp.lt.s32.totalorder %s21, 1
      %s301 = scalar_select %p300, %s21, 1
      %p302 = scmp.lt.s32.totalorder %s299, 15
      %s303 = scalar_select %p302, %s299, 15
      %s304 = smul.addr %s303, 2
      %s305 = smul.addr %s301, 32
      %s306 = sadd.s32 %s304, %s305
      %s307 = smul.addr %s306, 8
      %s308 = scalar_lea.vmem %s0, %s307
      %s309 = smul.u32 16, %s22
      %p310 = scmp.lt.s32.totalorder %s21, 1
      %s311 = scalar_select %p310, %s21, 1
      %p312 = scmp.lt.s32.totalorder %s22, 0
      %s313 = scalar_select %p312, %s22, 0
      %s314 = smul.addr %s313, 4
      %s315 = smul.addr %s311, 4
      %s316 = sadd.s32 %s314, %s315
      %s317 = smul.addr %s316, 8
      %s318 = scalar_lea.vmem %s1, %s317
      %s319 = smul.u32 16, %s22
      %p320 = scmp.lt.s32.totalorder %s21, 1
      %s321 = scalar_select %p320, %s21, 1
      %p322 = scmp.lt.s32.totalorder %s319, 15
      %s323 = scalar_select %p322, %s319, 15
      %s324 = smul.addr %s323, 2
      %s325 = smul.addr %s321, 128
      %s326 = sadd.s32 %s324, %s325
      %s327 = smul.addr %s326, 8
      %s328 = scalar_lea.vmem %s6, %s327
      %s329 = smul.u32 16, %s22
      %vm331 = vcmask 31744
      %332 = vst.msk [vmem:[#allocation2] sm:$0xff] %vm331, 0.0
      %333 = vst.msk [vmem:[#allocation2 + $0x8] sm:$0xff] %vm331, 0.0
      %vm334 = vcmask 25600
      %335 = vst.msk [vmem:[#allocation2 + $0x10] sm:$0x3] %vm334, 0.0
      %336 = vst.msk [vmem:[#allocation2 + $0x18] sm:$0xff] %vm331, 0.0
      %337 = vst.msk [vmem:[#allocation2 + $0x20] sm:$0xff] %vm331, 0.0
      %338 = vst.msk [vmem:[#allocation2 + $0x28] sm:$0x3] %vm334, 0.0
      %339 = vst.msk [vmem:[#allocation2 + $0x30] sm:$0xff] %vm331, 0.0
      %340 = vst.msk [vmem:[#allocation2 + $0x38] sm:$0xff] %vm331, 0.0
      %341 = vst.msk [vmem:[#allocation2 + $0x40] sm:$0x3] %vm334, 0.0
      %342 = vst.msk [vmem:[#allocation2 + $0x48] sm:$0xff] %vm331, 0.0
      %343 = vst.msk [vmem:[#allocation2 + $0x50] sm:$0xff] %vm331, 0.0
      %344 = vst.msk [vmem:[#allocation2 + $0x58] sm:$0x3] %vm334, 0.0
      %345 = vst.msk [vmem:[#allocation2 + $0x60] sm:$0xff] %vm331, 0.0
      %346 = vst.msk [vmem:[#allocation2 + $0x68] sm:$0xff] %vm331, 0.0
      %347 = vst.msk [vmem:[#allocation2 + $0x70] sm:$0x3] %vm334, 0.0
      %348 = vst.msk [vmem:[#allocation2 + $0x78] sm:$0xff] %vm331, 0.0
      %349 = vst.msk [vmem:[#allocation2 + $0x80] sm:$0xff] %vm331, 0.0
      %350 = vst.msk [vmem:[#allocation2 + $0x88] sm:$0x3] %vm334, 0.0
      %351 = vst.msk [vmem:[#allocation2 + $0x90] sm:$0xff] %vm331, 0.0
      %352 = vst.msk [vmem:[#allocation2 + $0x98] sm:$0xff] %vm331, 0.0
      %353 = vst.msk [vmem:[#allocation2 + $0xa0] sm:$0x3] %vm334, 0.0
      %354 = vst.msk [vmem:[#allocation2 + $0xa8] sm:$0xff] %vm331, 0.0
      %355 = vst.msk [vmem:[#allocation2 + $0xb0] sm:$0xff] %vm331, 0.0
      %356 = vst.msk [vmem:[#allocation2 + $0xb8] sm:$0x3] %vm334, 0.0
      %357 = vst.msk [vmem:[#allocation2 + $0xc0] sm:$0xff] %vm331, 0.0
      %358 = vst.msk [vmem:[#allocation2 + $0xc8] sm:$0xff] %vm331, 0.0
      %359 = vst.msk [vmem:[#allocation2 + $0xd0] sm:$0x3] %vm334, 0.0
      %360 = vst.msk [vmem:[#allocation2 + $0xd8] sm:$0xff] %vm331, 0.0
      %361 = vst.msk [vmem:[#allocation2 + $0xe0] sm:$0xff] %vm331, 0.0
      %362 = vst.msk [vmem:[#allocation2 + $0xe8] sm:$0x3] %vm334, 0.0
      %363 = vst.msk [vmem:[#allocation2 + $0xf0] sm:$0xff] %vm331, 0.0
      %364 = vst.msk [vmem:[#allocation2 + $0xf8] sm:$0xff] %vm331, 0.0
      %365 = vst.msk [vmem:[#allocation2 + $0x100] sm:$0x3] %vm334, 0.0
      %366 = vst.msk [vmem:[#allocation2 + $0x108] sm:$0xff] %vm331, 0.0
      %367 = vst.msk [vmem:[#allocation2 + $0x110] sm:$0xff] %vm331, 0.0
      %368 = vst.msk [vmem:[#allocation2 + $0x118] sm:$0x3] %vm334, 0.0
      %369 = vst.msk [vmem:[#allocation2 + $0x120] sm:$0xff] %vm331, 0.0
      %370 = vst.msk [vmem:[#allocation2 + $0x128] sm:$0xff] %vm331, 0.0
      %371 = vst.msk [vmem:[#allocation2 + $0x130] sm:$0x3] %vm334, 0.0
      %372 = vst.msk [vmem:[#allocation2 + $0x138] sm:$0xff] %vm331, 0.0
      %373 = vst.msk [vmem:[#allocation2 + $0x140] sm:$0xff] %vm331, 0.0
      %374 = vst.msk [vmem:[#allocation2 + $0x148] sm:$0x3] %vm334, 0.0
      %375 = vst.msk [vmem:[#allocation2 + $0x150] sm:$0xff] %vm331, 0.0
      %376 = vst.msk [vmem:[#allocation2 + $0x158] sm:$0xff] %vm331, 0.0
      %377 = vst.msk [vmem:[#allocation2 + $0x160] sm:$0x3] %vm334, 0.0
      %378 = vst.msk [vmem:[#allocation2 + $0x168] sm:$0xff] %vm331, 0.0
      %379 = vst.msk [vmem:[#allocation2 + $0x170] sm:$0xff] %vm331, 0.0
      %380 = vst.msk [vmem:[#allocation2 + $0x178] sm:$0x3] %vm334, 0.0
      %381 = vst.msk [vmem:[#allocation2 + $0x180] sm:$0xff] %vm331, 0.0
      %382 = vst.msk [vmem:[#allocation2 + $0x188] sm:$0xff] %vm331, 0.0
      %383 = vst.msk [vmem:[#allocation2 + $0x190] sm:$0x3] %vm334, 0.0
      %384 = vst.msk [vmem:[#allocation2 + $0x198] sm:$0xff] %vm331, 0.0
      %385 = vst.msk [vmem:[#allocation2 + $0x1a0] sm:$0xff] %vm331, 0.0
      %386 = vst.msk [vmem:[#allocation2 + $0x1a8] sm:$0x3] %vm334, 0.0
      %v387 = vld [vmem:[%s318] sm:$0xff]
      %v388 = vld [vmem:[%s318 + $0x8] sm:$0xff]
      %389 = vst.msk [vmem:[#allocation2 + $0x1] sm:$0xff] %vm331, %v387
      %390 = vst.msk [vmem:[#allocation2 + $0x9] sm:$0xff] %vm331, %v388
      %s391 = scalar_lea.vmem %s318, 16
      %v392 = vld [vmem:[%s391] sm:$0xff]
      %v393 = vld [vmem:[%s391 + $0x8] sm:$0xff]
      %s394 = scalar_lea.vmem [#allocation2], 408
      %395 = vst.msk [vmem:[%s394 + $0x1] sm:$0xff] %vm331, %v392
      %396 = vst.msk [vmem:[%s394 + $0x9] sm:$0xff] %vm331, %v393
      %v397 = vld [vmem:[%s308] sm:$0xff]
      %v398 = vld [vmem:[%s308 + $0x8] sm:$0xff]
      %v399 = vld [vmem:[%s308 + $0x10] sm:$0xff]
      %v400 = vld [vmem:[%s308 + $0x18] sm:$0xff]
      %v401 = vld [vmem:[%s308 + $0x20] sm:$0xff]
      %v402 = vld [vmem:[%s308 + $0x28] sm:$0xff]
      %v403 = vld [vmem:[%s308 + $0x30] sm:$0xff]
      %v404 = vld [vmem:[%s308 + $0x38] sm:$0xff]
      %v405 = vld [vmem:[%s308 + $0x40] sm:$0xff]
      %v406 = vld [vmem:[%s308 + $0x48] sm:$0xff]
      %v407 = vld [vmem:[%s308 + $0x50] sm:$0xff]
      %v408 = vld [vmem:[%s308 + $0x58] sm:$0xff]
      %v409 = vld [vmem:[%s308 + $0x60] sm:$0xff]
      %v410 = vld [vmem:[%s308 + $0x68] sm:$0xff]
      %v411 = vld [vmem:[%s308 + $0x70] sm:$0xff]
      %v412 = vld [vmem:[%s308 + $0x78] sm:$0xff]
      %v413 = vld [vmem:[%s308 + $0x80] sm:$0xff]
      %v414 = vld [vmem:[%s308 + $0x88] sm:$0xff]
      %v415 = vld [vmem:[%s308 + $0x90] sm:$0xff]
      %v416 = vld [vmem:[%s308 + $0x98] sm:$0xff]
      %v417 = vld [vmem:[%s308 + $0xa0] sm:$0xff]
      %v418 = vld [vmem:[%s308 + $0xa8] sm:$0xff]
      %v419 = vld [vmem:[%s308 + $0xb0] sm:$0xff]
      %v420 = vld [vmem:[%s308 + $0xb8] sm:$0xff]
      %v421 = vld [vmem:[%s308 + $0xc0] sm:$0xff]
      %v422 = vld [vmem:[%s308 + $0xc8] sm:$0xff]
      %v423 = vld [vmem:[%s308 + $0xd0] sm:$0xff]
      %v424 = vld [vmem:[%s308 + $0xd8] sm:$0xff]
      %v425 = vld [vmem:[%s308 + $0xe0] sm:$0xff]
      %v426 = vld [vmem:[%s308 + $0xe8] sm:$0xff]
      %v427 = vld [vmem:[%s308 + $0xf0] sm:$0xff]
      %v428 = vld [vmem:[%s308 + $0xf8] sm:$0xff]
      %s429 = scalar_lea.vmem [#allocation2], 24
      %430 = vst.msk [vmem:[%s429 + $0x1] sm:$0xff] %vm331, %v397
      %431 = vst.msk [vmem:[%s429 + $0x9] sm:$0xff] %vm331, %v398
      %432 = vst.msk [vmem:[%s429 + $0x19] sm:$0xff] %vm331, %v399
      %433 = vst.msk [vmem:[%s429 + $0x21] sm:$0xff] %vm331, %v400
      %434 = vst.msk [vmem:[%s429 + $0x31] sm:$0xff] %vm331, %v401
      %435 = vst.msk [vmem:[%s429 + $0x39] sm:$0xff] %vm331, %v402
      %436 = vst.msk [vmem:[%s429 + $0x49] sm:$0xff] %vm331, %v403
      %437 = vst.msk [vmem:[%s429 + $0x51] sm:$0xff] %vm331, %v404
      %438 = vst.msk [vmem:[%s429 + $0x61] sm:$0xff] %vm331, %v405
      %439 = vst.msk [vmem:[%s429 + $0x69] sm:$0xff] %vm331, %v406
      %440 = vst.msk [vmem:[%s429 + $0x79] sm:$0xff] %vm331, %v407
      %441 = vst.msk [vmem:[%s429 + $0x81] sm:$0xff] %vm331, %v408
      %442 = vst.msk [vmem:[%s429 + $0x91] sm:$0xff] %vm331, %v409
      %443 = vst.msk [vmem:[%s429 + $0x99] sm:$0xff] %vm331, %v410
      %444 = vst.msk [vmem:[%s429 + $0xa9] sm:$0xff] %vm331, %v411
      %445 = vst.msk [vmem:[%s429 + $0xb1] sm:$0xff] %vm331, %v412
      %446 = vst.msk [vmem:[%s429 + $0xc1] sm:$0xff] %vm331, %v413
      %447 = vst.msk [vmem:[%s429 + $0xc9] sm:$0xff] %vm331, %v414
      %448 = vst.msk [vmem:[%s429 + $0xd9] sm:$0xff] %vm331, %v415
      %449 = vst.msk [vmem:[%s429 + $0xe1] sm:$0xff] %vm331, %v416
      %450 = vst.msk [vmem:[%s429 + $0xf1] sm:$0xff] %vm331, %v417
      %451 = vst.msk [vmem:[%s429 + $0xf9] sm:$0xff] %vm331, %v418
      %452 = vst.msk [vmem:[%s429 + $0x109] sm:$0xff] %vm331, %v419
      %453 = vst.msk [vmem:[%s429 + $0x111] sm:$0xff] %vm331, %v420
      %454 = vst.msk [vmem:[%s429 + $0x121] sm:$0xff] %vm331, %v421
      %455 = vst.msk [vmem:[%s429 + $0x129] sm:$0xff] %vm331, %v422
      %456 = vst.msk [vmem:[%s429 + $0x139] sm:$0xff] %vm331, %v423
      %457 = vst.msk [vmem:[%s429 + $0x141] sm:$0xff] %vm331, %v424
      %458 = vst.msk [vmem:[%s429 + $0x151] sm:$0xff] %vm331, %v425
      %459 = vst.msk [vmem:[%s429 + $0x159] sm:$0xff] %vm331, %v426
      %460 = vst.msk [vmem:[%s429 + $0x169] sm:$0xff] %vm331, %v427
      %461 = vst.msk [vmem:[%s429 + $0x171] sm:$0xff] %vm331, %v428
      %v462 = vld [vmem:[%s2] sm:$0xff]
      %v463 = vld [vmem:[%s2 + $0x8] sm:$0xff]
      %v464 = vld [vmem:[%s3] sm:$0x1]
      %v465 = vld [vmem:[%s4] sm:$0x3]
      %v466 = vld [vmem:[%s5] sm:$0x1]
      %v467 = vld [vmem:[#allocation2] sm:$0xff]
      %v468 = vld [vmem:[#allocation2 + $0x8] sm:$0xff]
      %v469 = vld [vmem:[#allocation2 + $0x18] sm:$0xff]
      %v470 = vld [vmem:[#allocation2 + $0x20] sm:$0xff]
      %v471 = vld [vmem:[#allocation2 + $0x30] sm:$0xff]
      %v472 = vld [vmem:[#allocation2 + $0x38] sm:$0xff]
      %v473 = vld [vmem:[#allocation2 + $0x48] sm:$0xff]
      %v474 = vld [vmem:[#allocation2 + $0x50] sm:$0xff]
      %v475 = vld [vmem:[#allocation2 + $0x60] sm:$0xff]
      %v476 = vld [vmem:[#allocation2 + $0x68] sm:$0xff]
      %v477 = vld [vmem:[#allocation2 + $0x78] sm:$0xff]
      %v478 = vld [vmem:[#allocation2 + $0x80] sm:$0xff]
      %v479 = vld [vmem:[#allocation2 + $0x90] sm:$0xff]
      %v480 = vld [vmem:[#allocation2 + $0x98] sm:$0xff]
      %v481 = vld [vmem:[#allocation2 + $0xa8] sm:$0xff]
      %v482 = vld [vmem:[#allocation2 + $0xb0] sm:$0xff]
      %v483 = vld [vmem:[#allocation2 + $0xc0] sm:$0xff]
      %v484 = vld [vmem:[#allocation2 + $0xc8] sm:$0xff]
      %v485 = vld [vmem:[#allocation2 + $0xd8] sm:$0xff]
      %v486 = vld [vmem:[#allocation2 + $0xe0] sm:$0xff]
      %v487 = vld [vmem:[#allocation2 + $0xf0] sm:$0xff]
      %v488 = vld [vmem:[#allocation2 + $0xf8] sm:$0xff]
      %v489 = vld [vmem:[#allocation2 + $0x108] sm:$0xff]
      %v490 = vld [vmem:[#allocation2 + $0x110] sm:$0xff]
      %v491 = vld [vmem:[#allocation2 + $0x120] sm:$0xff]
      %v492 = vld [vmem:[#allocation2 + $0x128] sm:$0xff]
      %v493 = vld [vmem:[#allocation2 + $0x138] sm:$0xff]
      %v494 = vld [vmem:[#allocation2 + $0x140] sm:$0xff]
      %v495 = vld [vmem:[#allocation2 + $0x150] sm:$0xff]
      %v496 = vld [vmem:[#allocation2 + $0x158] sm:$0xff]
      %v497 = vld [vmem:[#allocation2 + $0x168] sm:$0xff]
      %v498 = vld [vmem:[#allocation2 + $0x170] sm:$0xff]
      %v499 = vlaneseq
      %v500 = vshrl.u32 %v499, 7
      %v501 = vsub.s32 0, %v500
      %v502 = vrot.slane %v462, %v501
      %v503 = vmul.f32 %v467, %v502
      %v504 = vmul.f32 %v468, %v502
      %v505 = vmul.f32 %v469, %v502
      %v506 = vmul.f32 %v470, %v502
      %v507 = vmul.f32 %v471, %v502
      %v508 = vmul.f32 %v472, %v502
      %v509 = vmul.f32 %v473, %v502
      %v510 = vmul.f32 %v474, %v502
      %v511 = vmul.f32 %v475, %v502
      %v512 = vmul.f32 %v476, %v502
      %v513 = vmul.f32 %v477, %v502
      %v514 = vmul.f32 %v478, %v502
      %v515 = vmul.f32 %v479, %v502
      %v516 = vmul.f32 %v480, %v502
      %v517 = vmul.f32 %v481, %v502
      %v518 = vmul.f32 %v482, %v502
      %v519 = vmul.f32 %v483, %v502
      %v520 = vmul.f32 %v484, %v502
      %v521 = vmul.f32 %v485, %v502
      %v522 = vmul.f32 %v486, %v502
      %v523 = vmul.f32 %v487, %v502
      %v524 = vmul.f32 %v488, %v502
      %v525 = vmul.f32 %v489, %v502
      %v526 = vmul.f32 %v490, %v502
      %v527 = vmul.f32 %v491, %v502
      %v528 = vmul.f32 %v492, %v502
      %v529 = vmul.f32 %v493, %v502
      %v530 = vmul.f32 %v494, %v502
      %v531 = vmul.f32 %v495, %v502
      %v532 = vmul.f32 %v496, %v502
      %v533 = vmul.f32 %v497, %v502
      %v534 = vmul.f32 %v498, %v502
      %v535 = vld [vmem:[#allocation2 + $0x1] sm:$0xff]
      %v536 = vld [vmem:[#allocation2 + $0x9] sm:$0xff]
      %v537 = vld [vmem:[#allocation2 + $0x19] sm:$0xff]
      %v538 = vld [vmem:[#allocation2 + $0x21] sm:$0xff]
      %v539 = vld [vmem:[#allocation2 + $0x31] sm:$0xff]
      %v540 = vld [vmem:[#allocation2 + $0x39] sm:$0xff]
      %v541 = vld [vmem:[#allocation2 + $0x49] sm:$0xff]
      %v542 = vld [vmem:[#allocation2 + $0x51] sm:$0xff]
      %v543 = vld [vmem:[#allocation2 + $0x61] sm:$0xff]
      %v544 = vld [vmem:[#allocation2 + $0x69] sm:$0xff]
      %v545 = vld [vmem:[#allocation2 + $0x79] sm:$0xff]
      %v546 = vld [vmem:[#allocation2 + $0x81] sm:$0xff]
      %v547 = vld [vmem:[#allocation2 + $0x91] sm:$0xff]
      %v548 = vld [vmem:[#allocation2 + $0x99] sm:$0xff]
      %v549 = vld [vmem:[#allocation2 + $0xa9] sm:$0xff]
      %v550 = vld [vmem:[#allocation2 + $0xb1] sm:$0xff]
      %v551 = vld [vmem:[#allocation2 + $0xc1] sm:$0xff]
      %v552 = vld [vmem:[#allocation2 + $0xc9] sm:$0xff]
      %v553 = vld [vmem:[#allocation2 + $0xd9] sm:$0xff]
      %v554 = vld [vmem:[#allocation2 + $0xe1] sm:$0xff]
      %v555 = vld [vmem:[#allocation2 + $0xf1] sm:$0xff]
      %v556 = vld [vmem:[#allocation2 + $0xf9] sm:$0xff]
      %v557 = vld [vmem:[#allocation2 + $0x109] sm:$0xff]
      %v558 = vld [vmem:[#allocation2 + $0x111] sm:$0xff]
      %v559 = vld [vmem:[#allocation2 + $0x121] sm:$0xff]
      %v560 = vld [vmem:[#allocation2 + $0x129] sm:$0xff]
      %v561 = vld [vmem:[#allocation2 + $0x139] sm:$0xff]
      %v562 = vld [vmem:[#allocation2 + $0x141] sm:$0xff]
      %v563 = vld [vmem:[#allocation2 + $0x151] sm:$0xff]
      %v564 = vld [vmem:[#allocation2 + $0x159] sm:$0xff]
      %v565 = vld [vmem:[#allocation2 + $0x169] sm:$0xff]
      %v566 = vld [vmem:[#allocation2 + $0x171] sm:$0xff]
      %v567 = vlaneseq
      %v568 = vshrl.u32 %v567, 7
      %v569 = vsub.s32 1, %v568
      %v570 = vrot.slane %v462, %v569
      %v571 = vmul.f32 %v535, %v570
      %v572 = vmul.f32 %v536, %v570
      %v573 = vmul.f32 %v537, %v570
      %v574 = vmul.f32 %v538, %v570
      %v575 = vmul.f32 %v539, %v570
      %v576 = vmul.f32 %v540, %v570
      %v577 = vmul.f32 %v541, %v570
      %v578 = vmul.f32 %v542, %v570
      %v579 = vmul.f32 %v543, %v570
      %v580 = vmul.f32 %v544, %v570
      %v581 = vmul.f32 %v545, %v570
      %v582 = vmul.f32 %v546, %v570
      %v583 = vmul.f32 %v547, %v570
      %v584 = vmul.f32 %v548, %v570
      %v585 = vmul.f32 %v549, %v570
      %v586 = vmul.f32 %v550, %v570
      %v587 = vmul.f32 %v551, %v570
      %v588 = vmul.f32 %v552, %v570
      %v589 = vmul.f32 %v553, %v570
      %v590 = vmul.f32 %v554, %v570
      %v591 = vmul.f32 %v555, %v570
      %v592 = vmul.f32 %v556, %v570
      %v593 = vmul.f32 %v557, %v570
      %v594 = vmul.f32 %v558, %v570
      %v595 = vmul.f32 %v559, %v570
      %v596 = vmul.f32 %v560, %v570
      %v597 = vmul.f32 %v561, %v570
      %v598 = vmul.f32 %v562, %v570
      %v599 = vmul.f32 %v563, %v570
      %v600 = vmul.f32 %v564, %v570
      %v601 = vmul.f32 %v565, %v570
      %v602 = vmul.f32 %v566, %v570
      %v603 = vadd.f32 %v503, %v571
      %v604 = vadd.f32 %v504, %v572
      %v605 = vadd.f32 %v505, %v573
      %v606 = vadd.f32 %v506, %v574
      %v607 = vadd.f32 %v507, %v575
      %v608 = vadd.f32 %v508, %v576
      %v609 = vadd.f32 %v509, %v577
      %v610 = vadd.f32 %v510, %v578
      %v611 = vadd.f32 %v511, %v579
      %v612 = vadd.f32 %v512, %v580
      %v613 = vadd.f32 %v513, %v581
      %v614 = vadd.f32 %v514, %v582
      %v615 = vadd.f32 %v515, %v583
      %v616 = vadd.f32 %v516, %v584
      %v617 = vadd.f32 %v517, %v585
      %v618 = vadd.f32 %v518, %v586
      %v619 = vadd.f32 %v519, %v587
      %v620 = vadd.f32 %v520, %v588
      %v621 = vadd.f32 %v521, %v589
      %v622 = vadd.f32 %v522, %v590
      %v623 = vadd.f32 %v523, %v591
      %v624 = vadd.f32 %v524, %v592
      %v625 = vadd.f32 %v525, %v593
      %v626 = vadd.f32 %v526, %v594
      %v627 = vadd.f32 %v527, %v595
      %v628 = vadd.f32 %v528, %v596
      %v629 = vadd.f32 %v529, %v597
      %v630 = vadd.f32 %v530, %v598
      %v631 = vadd.f32 %v531, %v599
      %v632 = vadd.f32 %v532, %v600
      %v633 = vadd.f32 %v533, %v601
      %v634 = vadd.f32 %v534, %v602
      %v635 = vld [vmem:[%s429] sm:$0xff]
      %v636 = vld [vmem:[%s429 + $0x8] sm:$0xff]
      %v637 = vld [vmem:[%s429 + $0x18] sm:$0xff]
      %v638 = vld [vmem:[%s429 + $0x20] sm:$0xff]
      %v639 = vld [vmem:[%s429 + $0x30] sm:$0xff]
      %v640 = vld [vmem:[%s429 + $0x38] sm:$0xff]
      %v641 = vld [vmem:[%s429 + $0x48] sm:$0xff]
      %v642 = vld [vmem:[%s429 + $0x50] sm:$0xff]
      %v643 = vld [vmem:[%s429 + $0x60] sm:$0xff]
      %v644 = vld [vmem:[%s429 + $0x68] sm:$0xff]
      %v645 = vld [vmem:[%s429 + $0x78] sm:$0xff]
      %v646 = vld [vmem:[%s429 + $0x80] sm:$0xff]
      %v647 = vld [vmem:[%s429 + $0x90] sm:$0xff]
      %v648 = vld [vmem:[%s429 + $0x98] sm:$0xff]
      %v649 = vld [vmem:[%s429 + $0xa8] sm:$0xff]
      %v650 = vld [vmem:[%s429 + $0xb0] sm:$0xff]
      %v651 = vld [vmem:[%s429 + $0xc0] sm:$0xff]
      %v652 = vld [vmem:[%s429 + $0xc8] sm:$0xff]
      %v653 = vld [vmem:[%s429 + $0xd8] sm:$0xff]
      %v654 = vld [vmem:[%s429 + $0xe0] sm:$0xff]
      %v655 = vld [vmem:[%s429 + $0xf0] sm:$0xff]
      %v656 = vld [vmem:[%s429 + $0xf8] sm:$0xff]
      %v657 = vld [vmem:[%s429 + $0x108] sm:$0xff]
      %v658 = vld [vmem:[%s429 + $0x110] sm:$0xff]
      %v659 = vld [vmem:[%s429 + $0x120] sm:$0xff]
      %v660 = vld [vmem:[%s429 + $0x128] sm:$0xff]
      %v661 = vld [vmem:[%s429 + $0x138] sm:$0xff]
      %v662 = vld [vmem:[%s429 + $0x140] sm:$0xff]
      %v663 = vld [vmem:[%s429 + $0x150] sm:$0xff]
      %v664 = vld [vmem:[%s429 + $0x158] sm:$0xff]
      %v665 = vld [vmem:[%s429 + $0x168] sm:$0xff]
      %v666 = vld [vmem:[%s429 + $0x170] sm:$0xff]
      %v667 = vlaneseq
      %v668 = vshrl.u32 %v667, 7
      %v669 = vsub.s32 2, %v668
      %v670 = vrot.slane %v462, %v669
      %v671 = vmul.f32 %v635, %v670
      %v672 = vmul.f32 %v636, %v670
      %v673 = vmul.f32 %v637, %v670
      %v674 = vmul.f32 %v638, %v670
      %v675 = vmul.f32 %v639, %v670
      %v676 = vmul.f32 %v640, %v670
      %v677 = vmul.f32 %v641, %v670
      %v678 = vmul.f32 %v642, %v670
      %v679 = vmul.f32 %v643, %v670
      %v680 = vmul.f32 %v644, %v670
      %v681 = vmul.f32 %v645, %v670
      %v682 = vmul.f32 %v646, %v670
      %v683 = vmul.f32 %v647, %v670
      %v684 = vmul.f32 %v648, %v670
      %v685 = vmul.f32 %v649, %v670
      %v686 = vmul.f32 %v650, %v670
      %v687 = vmul.f32 %v651, %v670
      %v688 = vmul.f32 %v652, %v670
      %v689 = vmul.f32 %v653, %v670
      %v690 = vmul.f32 %v654, %v670
      %v691 = vmul.f32 %v655, %v670
      %v692 = vmul.f32 %v656, %v670
      %v693 = vmul.f32 %v657, %v670
      %v694 = vmul.f32 %v658, %v670
      %v695 = vmul.f32 %v659, %v670
      %v696 = vmul.f32 %v660, %v670
      %v697 = vmul.f32 %v661, %v670
      %v698 = vmul.f32 %v662, %v670
      %v699 = vmul.f32 %v663, %v670
      %v700 = vmul.f32 %v664, %v670
      %v701 = vmul.f32 %v665, %v670
      %v702 = vmul.f32 %v666, %v670
      %v703 = vadd.f32 %v603, %v671
      %v704 = vadd.f32 %v604, %v672
      %v705 = vadd.f32 %v605, %v673
      %v706 = vadd.f32 %v606, %v674
      %v707 = vadd.f32 %v607, %v675
      %v708 = vadd.f32 %v608, %v676
      %v709 = vadd.f32 %v609, %v677
      %v710 = vadd.f32 %v610, %v678
      %v711 = vadd.f32 %v611, %v679
      %v712 = vadd.f32 %v612, %v680
      %v713 = vadd.f32 %v613, %v681
      %v714 = vadd.f32 %v614, %v682
      %v715 = vadd.f32 %v615, %v683
      %v716 = vadd.f32 %v616, %v684
      %v717 = vadd.f32 %v617, %v685
      %v718 = vadd.f32 %v618, %v686
      %v719 = vadd.f32 %v619, %v687
      %v720 = vadd.f32 %v620, %v688
      %v721 = vadd.f32 %v621, %v689
      %v722 = vadd.f32 %v622, %v690
      %v723 = vadd.f32 %v623, %v691
      %v724 = vadd.f32 %v624, %v692
      %v725 = vadd.f32 %v625, %v693
      %v726 = vadd.f32 %v626, %v694
      %v727 = vadd.f32 %v627, %v695
      %v728 = vadd.f32 %v628, %v696
      %v729 = vadd.f32 %v629, %v697
      %v730 = vadd.f32 %v630, %v698
      %v731 = vadd.f32 %v631, %v699
      %v732 = vadd.f32 %v632, %v700
      %v733 = vadd.f32 %v633, %v701
      %v734 = vadd.f32 %v634, %v702
      %v735 = vld [vmem:[%s429 + $0x1] sm:$0xff]
      %v736 = vld [vmem:[%s429 + $0x9] sm:$0xff]
      %v737 = vld [vmem:[%s429 + $0x19] sm:$0xff]
      %v738 = vld [vmem:[%s429 + $0x21] sm:$0xff]
      %v739 = vld [vmem:[%s429 + $0x31] sm:$0xff]
      %v740 = vld [vmem:[%s429 + $0x39] sm:$0xff]
      %v741 = vld [vmem:[%s429 + $0x49] sm:$0xff]
      %v742 = vld [vmem:[%s429 + $0x51] sm:$0xff]
      %v743 = vld [vmem:[%s429 + $0x61] sm:$0xff]
      %v744 = vld [vmem:[%s429 + $0x69] sm:$0xff]
      %v745 = vld [vmem:[%s429 + $0x79] sm:$0xff]
      %v746 = vld [vmem:[%s429 + $0x81] sm:$0xff]
      %v747 = vld [vmem:[%s429 + $0x91] sm:$0xff]
      %v748 = vld [vmem:[%s429 + $0x99] sm:$0xff]
      %v749 = vld [vmem:[%s429 + $0xa9] sm:$0xff]
      %v750 = vld [vmem:[%s429 + $0xb1] sm:$0xff]
      %v751 = vld [vmem:[%s429 + $0xc1] sm:$0xff]
      %v752 = vld [vmem:[%s429 + $0xc9] sm:$0xff]
      %v753 = vld [vmem:[%s429 + $0xd9] sm:$0xff]
      %v754 = vld [vmem:[%s429 + $0xe1] sm:$0xff]
      %v755 = vld [vmem:[%s429 + $0xf1] sm:$0xff]
      %v756 = vld [vmem:[%s429 + $0xf9] sm:$0xff]
      %v757 = vld [vmem:[%s429 + $0x109] sm:$0xff]
      %v758 = vld [vmem:[%s429 + $0x111] sm:$0xff]
      %v759 = vld [vmem:[%s429 + $0x121] sm:$0xff]
      %v760 = vld [vmem:[%s429 + $0x129] sm:$0xff]
      %v761 = vld [vmem:[%s429 + $0x139] sm:$0xff]
      %v762 = vld [vmem:[%s429 + $0x141] sm:$0xff]
      %v763 = vld [vmem:[%s429 + $0x151] sm:$0xff]
      %v764 = vld [vmem:[%s429 + $0x159] sm:$0xff]
      %v765 = vld [vmem:[%s429 + $0x169] sm:$0xff]
      %v766 = vld [vmem:[%s429 + $0x171] sm:$0xff]
      %v767 = vlaneseq
      %v768 = vshrl.u32 %v767, 7
      %v769 = vsub.s32 3, %v768
      %v770 = vrot.slane %v462, %v769
      %v771 = vmul.f32 %v735, %v770
      %v772 = vmul.f32 %v736, %v770
      %v773 = vmul.f32 %v737, %v770
      %v774 = vmul.f32 %v738, %v770
      %v775 = vmul.f32 %v739, %v770
      %v776 = vmul.f32 %v740, %v770
      %v777 = vmul.f32 %v741, %v770
      %v778 = vmul.f32 %v742, %v770
      %v779 = vmul.f32 %v743, %v770
      %v780 = vmul.f32 %v744, %v770
      %v781 = vmul.f32 %v745, %v770
      %v782 = vmul.f32 %v746, %v770
      %v783 = vmul.f32 %v747, %v770
      %v784 = vmul.f32 %v748, %v770
      %v785 = vmul.f32 %v749, %v770
      %v786 = vmul.f32 %v750, %v770
      %v787 = vmul.f32 %v751, %v770
      %v788 = vmul.f32 %v752, %v770
      %v789 = vmul.f32 %v753, %v770
      %v790 = vmul.f32 %v754, %v770
      %v791 = vmul.f32 %v755, %v770
      %v792 = vmul.f32 %v756, %v770
      %v793 = vmul.f32 %v757, %v770
      %v794 = vmul.f32 %v758, %v770
      %v795 = vmul.f32 %v759, %v770
      %v796 = vmul.f32 %v760, %v770
      %v797 = vmul.f32 %v761, %v770
      %v798 = vmul.f32 %v762, %v770
      %v799 = vmul.f32 %v763, %v770
      %v800 = vmul.f32 %v764, %v770
      %v801 = vmul.f32 %v765, %v770
      %v802 = vmul.f32 %v766, %v770
      %v803 = vadd.f32 %v703, %v771
      %v804 = vadd.f32 %v704, %v772
      %v805 = vadd.f32 %v705, %v773
      %v806 = vadd.f32 %v706, %v774
      %v807 = vadd.f32 %v707, %v775
      %v808 = vadd.f32 %v708, %v776
      %v809 = vadd.f32 %v709, %v777
      %v810 = vadd.f32 %v710, %v778
      %v811 = vadd.f32 %v711, %v779
      %v812 = vadd.f32 %v712, %v780
      %v813 = vadd.f32 %v713, %v781
      %v814 = vadd.f32 %v714, %v782
      %v815 = vadd.f32 %v715, %v783
      %v816 = vadd.f32 %v716, %v784
      %v817 = vadd.f32 %v717, %v785
      %v818 = vadd.f32 %v718, %v786
      %v819 = vadd.f32 %v719, %v787
      %v820 = vadd.f32 %v720, %v788
      %v821 = vadd.f32 %v721, %v789
      %v822 = vadd.f32 %v722, %v790
      %v823 = vadd.f32 %v723, %v791
      %v824 = vadd.f32 %v724, %v792
      %v825 = vadd.f32 %v725, %v793
      %v826 = vadd.f32 %v726, %v794
      %v827 = vadd.f32 %v727, %v795
      %v828 = vadd.f32 %v728, %v796
      %v829 = vadd.f32 %v729, %v797
      %v830 = vadd.f32 %v730, %v798
      %v831 = vadd.f32 %v731, %v799
      %v832 = vadd.f32 %v732, %v800
      %v833 = vadd.f32 %v733, %v801
      %v834 = vadd.f32 %v734, %v802
      %v836 = vlaneseq
      %v837 = vshrl.u32 %v836, 7
      %v838 = vsub.s32 0, %v837
      %v839 = vrot.slane %v464, %v838
      %v841 = vadd.f32 %v803, %v839
      %v842 = vadd.f32 %v804, %v839
      %v843 = vadd.f32 %v805, %v839
      %v844 = vadd.f32 %v806, %v839
      %v845 = vadd.f32 %v807, %v839
      %v846 = vadd.f32 %v808, %v839
      %v847 = vadd.f32 %v809, %v839
      %v848 = vadd.f32 %v810, %v839
      %v849 = vadd.f32 %v811, %v839
      %v850 = vadd.f32 %v812, %v839
      %v851 = vadd.f32 %v813, %v839
      %v852 = vadd.f32 %v814, %v839
      %v853 = vadd.f32 %v815, %v839
      %v854 = vadd.f32 %v816, %v839
      %v855 = vadd.f32 %v817, %v839
      %v856 = vadd.f32 %v818, %v839
      %v857 = vadd.f32 %v819, %v839
      %v858 = vadd.f32 %v820, %v839
      %v859 = vadd.f32 %v821, %v839
      %v860 = vadd.f32 %v822, %v839
      %v861 = vadd.f32 %v823, %v839
      %v862 = vadd.f32 %v824, %v839
      %v863 = vadd.f32 %v825, %v839
      %v864 = vadd.f32 %v826, %v839
      %v865 = vadd.f32 %v827, %v839
      %v866 = vadd.f32 %v828, %v839
      %v867 = vadd.f32 %v829, %v839
      %v868 = vadd.f32 %v830, %v839
      %v869 = vadd.f32 %v831, %v839
      %v870 = vadd.f32 %v832, %v839
      %v871 = vadd.f32 %v833, %v839
      %v872 = vadd.f32 %v834, %v839
      %v873 = vmax.f32 %v841, 0.0
      %v874 = vmax.f32 %v842, 0.0
      %v875 = vmax.f32 %v843, 0.0
      %v876 = vmax.f32 %v844, 0.0
      %v877 = vmax.f32 %v845, 0.0
      %v878 = vmax.f32 %v846, 0.0
      %v879 = vmax.f32 %v847, 0.0
      %v880 = vmax.f32 %v848, 0.0
      %v881 = vmax.f32 %v849, 0.0
      %v882 = vmax.f32 %v850, 0.0
      %v883 = vmax.f32 %v851, 0.0
      %v884 = vmax.f32 %v852, 0.0
      %v885 = vmax.f32 %v853, 0.0
      %v886 = vmax.f32 %v854, 0.0
      %v887 = vmax.f32 %v855, 0.0
      %v888 = vmax.f32 %v856, 0.0
      %v889 = vmax.f32 %v857, 0.0
      %v890 = vmax.f32 %v858, 0.0
      %v891 = vmax.f32 %v859, 0.0
      %v892 = vmax.f32 %v860, 0.0
      %v893 = vmax.f32 %v861, 0.0
      %v894 = vmax.f32 %v862, 0.0
      %v895 = vmax.f32 %v863, 0.0
      %v896 = vmax.f32 %v864, 0.0
      %v897 = vmax.f32 %v865, 0.0
      %v898 = vmax.f32 %v866, 0.0
      %v899 = vmax.f32 %v867, 0.0
      %v900 = vmax.f32 %v868, 0.0
      %v901 = vmax.f32 %v869, 0.0
      %v902 = vmax.f32 %v870, 0.0
      %v903 = vmax.f32 %v871, 0.0
      %v904 = vmax.f32 %v872, 0.0
      %v905 = vpack.c.bf16 %v874, %v873
      %v906 = vpack.c.bf16 %v876, %v875
      %v907 = vpack.c.bf16 %v878, %v877
      %v908 = vpack.c.bf16 %v880, %v879
      %v909 = vpack.c.bf16 %v882, %v881
      %v910 = vpack.c.bf16 %v884, %v883
      %v911 = vpack.c.bf16 %v886, %v885
      %v912 = vpack.c.bf16 %v888, %v887
      %v913 = vpack.c.bf16 %v890, %v889
      %v914 = vpack.c.bf16 %v892, %v891
      %v915 = vpack.c.bf16 %v894, %v893
      %v916 = vpack.c.bf16 %v896, %v895
      %v917 = vpack.c.bf16 %v898, %v897
      %v918 = vpack.c.bf16 %v900, %v899
      %v919 = vpack.c.bf16 %v902, %v901
      %v920 = vpack.c.bf16 %v904, %v903
      %v922 = vlaneseq
      %v923 = vshrl.u32 %v922, 7
      %v924 = vsub.s32 0, %v923
      %v925 = vrot.slane %v466, %v924
      %v928 = vsel %vm331, %v905, 0
      %v931 = vsel %vm331, %v906, 0
      %v934 = vsel %vm331, %v907, 0
      %v937 = vsel %vm331, %v908, 0
      %v940 = vsel %vm331, %v909, 0
      %v943 = vsel %vm331, %v910, 0
      %v946 = vsel %vm331, %v911, 0
      %v949 = vsel %vm331, %v912, 0
      %v952 = vsel %vm331, %v913, 0
      %v955 = vsel %vm331, %v914, 0
      %v958 = vsel %vm331, %v915, 0
      %v961 = vsel %vm331, %v916, 0
      %v964 = vsel %vm331, %v917, 0
      %v967 = vsel %vm331, %v918, 0
      %v970 = vsel %vm331, %v919, 0
      %v973 = vsel %vm331, %v920, 0
      %vm975 = vcmask 1041408
      %v977 = vsel %vm975, %v465, 0
      %979 = vmatprep.subr.bf16.mxu0 0
      %980 = vmatpush1.bf16.msra.mxu0 %v977
      %981 = vmatprep.subr.bf16.mxu0 0
      %982 = vmatpush1.bf16.msra.mxu0 0
      %983 = vmatprep.subr.bf16.mxu0 0
      %984 = vmatpush1.bf16.msra.mxu0 0
      %985 = vmatprep.subr.bf16.mxu0 0
      %986 = vmatpush1.bf16.msra.mxu0 0
      %987 = vmatprep.subr.bf16.mxu0 0
      %988 = vmatpush1.bf16.msra.mxu0 0
      %989 = vmatprep.subr.bf16.mxu0 0
      %990 = vmatpush1.bf16.msra.mxu0 0
      %991 = vmatprep.subr.bf16.mxu0 0
      %992 = vmatpush1.bf16.msra.mxu0 0
      %993 = vmatprep.subr.bf16.mxu0 0
      %994 = vmatpush1.bf16.msra.mxu0 0
      %995 = vmatprep.subr.bf16.mxu0 0
      %996 = vmatpush1.bf16.msra.mxu0 0
      %997 = vmatprep.subr.bf16.mxu0 0
      %998 = vmatpush1.bf16.msra.mxu0 0
      %999 = vmatprep.subr.bf16.mxu0 0
      %1000 = vmatpush1.bf16.msra.mxu0 0
      %1001 = vmatprep.subr.bf16.mxu0 0
      %1002 = vmatpush1.bf16.msra.mxu0 0
      %1003 = vmatprep.subr.bf16.mxu0 0
      %1004 = vmatpush1.bf16.msra.mxu0 0
      %1005 = vmatprep.subr.bf16.mxu0 0
      %1006 = vmatpush1.bf16.msra.mxu0 0
      %1007 = vmatprep.subr.bf16.mxu0 0
      %1008 = vmatpush1.bf16.msra.mxu0 0
      %1009 = vmatprep.subr.bf16.mxu0 0
      %1010 = vmatpush1.bf16.msra.mxu0 0
      %1011 = vmatprep.mubr.bf16.mxu0 0
      %1012 = vmatmul.mubr.bf16.gmra.mrb[0].mxu0 %v928
      %v1013 = vpop.f32.mrb[0].mxu0
      %v1014 = vadd.f32 %v925, %v1013
      %v1015 = vpop.f32.mrb[0].mxu0
      %v1016 = vpop.f32.mrb[0].mxu0
      %v1017 = vadd.f32 %v925, %v1016
      %v1018 = vpop.f32.mrb[0].mxu0
      %1019 = vmatprep.mubr.bf16.mxu0 0
      %1020 = vmatmul.mubr.bf16.gmra.mrb[0].mxu0 %v931
      %v1021 = vpop.f32.mrb[0].mxu0
      %v1022 = vadd.f32 %v925, %v1021
      %v1023 = vpop.f32.mrb[0].mxu0
      %v1024 = vpop.f32.mrb[0].mxu0
      %v1025 = vadd.f32 %v925, %v1024
      %v1026 = vpop.f32.mrb[0].mxu0
      %1027 = vmatprep.mubr.bf16.mxu0 0
      %1028 = vmatmul.mubr.bf16.gmra.mrb[0].mxu0 %v934
      %v1029 = vpop.f32.mrb[0].mxu0
      %v1030 = vadd.f32 %v925, %v1029
      %v1031 = vpop.f32.mrb[0].mxu0
      %v1032 = vpop.f32.mrb[0].mxu0
      %v1033 = vadd.f32 %v925, %v1032
      %v1034 = vpop.f32.mrb[0].mxu0
      %1035 = vmatprep.mubr.bf16.mxu0 0
      %1036 = vmatmul.mubr.bf16.gmra.mrb[0].mxu0 %v937
      %v1037 = vpop.f32.mrb[0].mxu0
      %v1038 = vadd.f32 %v925, %v1037
      %v1039 = vpop.f32.mrb[0].mxu0
      %v1040 = vpop.f32.mrb[0].mxu0
      %v1041 = vadd.f32 %v925, %v1040
      %v1042 = vpop.f32.mrb[0].mxu0
      %1043 = vmatprep.mubr.bf16.mxu0 0
      %1044 = vmatmul.mubr.bf16.gmra.mrb[0].mxu0 %v940
      %v1045 = vpop.f32.mrb[0].mxu0
      %v1046 = vadd.f32 %v925, %v1045
      %v1047 = vpop.f32.mrb[0].mxu0
      %v1048 = vpop.f32.mrb[0].mxu0
      %v1049 = vadd.f32 %v925, %v1048
      %v1050 = vpop.f32.mrb[0].mxu0
      %1051 = vmatprep.mubr.bf16.mxu0 0
      %1052 = vmatmul.mubr.bf16.gmra.mrb[0].mxu0 %v943
      %v1053 = vpop.f32.mrb[0].mxu0
      %v1054 = vadd.f32 %v925, %v1053
      %v1055 = vpop.f32.mrb[0].mxu0
      %v1056 = vpop.f32.mrb[0].mxu0
      %v1057 = vadd.f32 %v925, %v1056
      %v1058 = vpop.f32.mrb[0].mxu0
      %1059 = vmatprep.mubr.bf16.mxu0 0
      %1060 = vmatmul.mubr.bf16.gmra.mrb[0].mxu0 %v946
      %v1061 = vpop.f32.mrb[0].mxu0
      %v1062 = vadd.f32 %v925, %v1061
      %v1063 = vpop.f32.mrb[0].mxu0
      %v1064 = vpop.f32.mrb[0].mxu0
      %v1065 = vadd.f32 %v925, %v1064
      %v1066 = vpop.f32.mrb[0].mxu0
      %1067 = vmatprep.mubr.bf16.mxu0 0
      %1068 = vmatmul.mubr.bf16.gmra.mrb[0].mxu0 %v949
      %v1069 = vpop.f32.mrb[0].mxu0
      %v1070 = vadd.f32 %v925, %v1069
      %v1071 = vpop.f32.mrb[0].mxu0
      %v1072 = vpop.f32.mrb[0].mxu0
      %v1073 = vadd.f32 %v925, %v1072
      %v1074 = vpop.f32.mrb[0].mxu0
      %1075 = vmatprep.mubr.bf16.mxu0 0
      %1076 = vmatmul.mubr.bf16.gmra.mrb[0].mxu0 %v952
      %v1077 = vpop.f32.mrb[0].mxu0
      %v1078 = vadd.f32 %v925, %v1077
      %v1079 = vpop.f32.mrb[0].mxu0
      %v1080 = vpop.f32.mrb[0].mxu0
      %v1081 = vadd.f32 %v925, %v1080
      %v1082 = vpop.f32.mrb[0].mxu0
      %1083 = vmatprep.mubr.bf16.mxu0 0
      %1084 = vmatmul.mubr.bf16.gmra.mrb[0].mxu0 %v955
      %v1085 = vpop.f32.mrb[0].mxu0
      %v1086 = vadd.f32 %v925, %v1085
      %v1087 = vpop.f32.mrb[0].mxu0
      %v1088 = vpop.f32.mrb[0].mxu0
      %v1089 = vadd.f32 %v925, %v1088
      %v1090 = vpop.f32.mrb[0].mxu0
      %1091 = vmatprep.mubr.bf16.mxu0 0
      %1092 = vmatmul.mubr.bf16.gmra.mrb[0].mxu0 %v958
      %v1093 = vpop.f32.mrb[0].mxu0
      %v1094 = vadd.f32 %v925, %v1093
      %v1095 = vpop.f32.mrb[0].mxu0
      %v1096 = vpop.f32.mrb[0].mxu0
      %v1097 = vadd.f32 %v925, %v1096
      %v1098 = vpop.f32.mrb[0].mxu0
      %1099 = vmatprep.mubr.bf16.mxu0 0
      %1100 = vmatmul.mubr.bf16.gmra.mrb[0].mxu0 %v961
      %v1101 = vpop.f32.mrb[0].mxu0
      %v1102 = vadd.f32 %v925, %v1101
      %v1103 = vpop.f32.mrb[0].mxu0
      %v1104 = vpop.f32.mrb[0].mxu0
      %v1105 = vadd.f32 %v925, %v1104
      %v1106 = vpop.f32.mrb[0].mxu0
      %1107 = vmatprep.mubr.bf16.mxu0 0
      %1108 = vmatmul.mubr.bf16.gmra.mrb[0].mxu0 %v964
      %v1109 = vpop.f32.mrb[0].mxu0
      %v1110 = vadd.f32 %v925, %v1109
      %v1111 = vpop.f32.mrb[0].mxu0
      %v1112 = vpop.f32.mrb[0].mxu0
      %v1113 = vadd.f32 %v925, %v1112
      %v1114 = vpop.f32.mrb[0].mxu0
      %1115 = vmatprep.mubr.bf16.mxu0 0
      %1116 = vmatmul.mubr.bf16.gmra.mrb[0].mxu0 %v967
      %v1117 = vpop.f32.mrb[0].mxu0
      %v1118 = vadd.f32 %v925, %v1117
      %v1119 = vpop.f32.mrb[0].mxu0
      %v1120 = vpop.f32.mrb[0].mxu0
      %v1121 = vadd.f32 %v925, %v1120
      %v1122 = vpop.f32.mrb[0].mxu0
      %1123 = vmatprep.mubr.bf16.mxu0 0
      %1124 = vmatmul.mubr.bf16.gmra.mrb[0].mxu0 %v970
      %v1125 = vpop.f32.mrb[0].mxu0
      %v1126 = vadd.f32 %v925, %v1125
      %v1127 = vpop.f32.mrb[0].mxu0
      %v1128 = vpop.f32.mrb[0].mxu0
      %v1129 = vadd.f32 %v925, %v1128
      %v1130 = vpop.f32.mrb[0].mxu0
      %1131 = vmatprep.mubr.bf16.mxu0 0
      %1132 = vmatmul.mubr.bf16.gmra.mrb[0].mxu0 %v973
      %v1133 = vpop.f32.mrb[0].mxu0
      %v1134 = vadd.f32 %v925, %v1133
      %v1135 = vpop.f32.mrb[0].mxu0
      %v1136 = vpop.f32.mrb[0].mxu0
      %v1137 = vadd.f32 %v925, %v1136
      %v1138 = vpop.f32.mrb[0].mxu0
      %1139 = vdwg.mxu0
      %vm1140 = vcmask 64512
      %1141 = vst.msk [vmem:[%s328] sm:$0xff] %vm1140, %v1014
      %1142 = vst.msk [vmem:[%s328 + $0x8] sm:$0xff] %vm1140, %v1017
      %1143 = vst.msk [vmem:[%s328 + $0x10] sm:$0xff] %vm1140, %v1022
      %1144 = vst.msk [vmem:[%s328 + $0x18] sm:$0xff] %vm1140, %v1025
      %1145 = vst.msk [vmem:[%s328 + $0x20] sm:$0xff] %vm1140, %v1030
      %1146 = vst.msk [vmem:[%s328 + $0x28] sm:$0xff] %vm1140, %v1033
      %1147 = vst.msk [vmem:[%s328 + $0x30] sm:$0xff] %vm1140, %v1038
      %1148 = vst.msk [vmem:[%s328 + $0x38] sm:$0xff] %vm1140, %v1041
      %1149 = vst.msk [vmem:[%s328 + $0x40] sm:$0xff] %vm1140, %v1046
      %1150 = vst.msk [vmem:[%s328 + $0x48] sm:$0xff] %vm1140, %v1049
      %1151 = vst.msk [vmem:[%s328 + $0x50] sm:$0xff] %vm1140, %v1054
      %1152 = vst.msk [vmem:[%s328 + $0x58] sm:$0xff] %vm1140, %v1057
      %1153 = vst.msk [vmem:[%s328 + $0x60] sm:$0xff] %vm1140, %v1062
      %1154 = vst.msk [vmem:[%s328 + $0x68] sm:$0xff] %vm1140, %v1065
      %1155 = vst.msk [vmem:[%s328 + $0x70] sm:$0xff] %vm1140, %v1070
      %1156 = vst.msk [vmem:[%s328 + $0x78] sm:$0xff] %vm1140, %v1073
      %1157 = vst.msk [vmem:[%s328 + $0x80] sm:$0xff] %vm1140, %v1078
      %1158 = vst.msk [vmem:[%s328 + $0x88] sm:$0xff] %vm1140, %v1081
      %1159 = vst.msk [vmem:[%s328 + $0x90] sm:$0xff] %vm1140, %v1086
      %1160 = vst.msk [vmem:[%s328 + $0x98] sm:$0xff] %vm1140, %v1089
      %1161 = vst.msk [vmem:[%s328 + $0xa0] sm:$0xff] %vm1140, %v1094
      %1162 = vst.msk [vmem:[%s328 + $0xa8] sm:$0xff] %vm1140, %v1097
      %1163 = vst.msk [vmem:[%s328 + $0xb0] sm:$0xff] %vm1140, %v1102
      %1164 = vst.msk [vmem:[%s328 + $0xb8] sm:$0xff] %vm1140, %v1105
      %1165 = vst.msk [vmem:[%s328 + $0xc0] sm:$0xff] %vm1140, %v1110
      %1166 = vst.msk [vmem:[%s328 + $0xc8] sm:$0xff] %vm1140, %v1113
      %1167 = vst.msk [vmem:[%s328 + $0xd0] sm:$0xff] %vm1140, %v1118
      %1168 = vst.msk [vmem:[%s328 + $0xd8] sm:$0xff] %vm1140, %v1121
      %1169 = vst.msk [vmem:[%s328 + $0xe0] sm:$0xff] %vm1140, %v1126
      %1170 = vst.msk [vmem:[%s328 + $0xe8] sm:$0xff] %vm1140, %v1129
      %1171 = vst.msk [vmem:[%s328 + $0xf0] sm:$0xff] %vm1140, %v1134
      %1172 = vst.msk [vmem:[%s328 + $0xf8] sm:$0xff] %vm1140, %v1137
      %v1173 = vld [vmem:[#allocation2 + $0x1] sm:$0xff]
      %v1174 = vld [vmem:[#allocation2 + $0x9] sm:$0xff]
      %v1175 = vld [vmem:[#allocation2 + $0x19] sm:$0xff]
      %v1176 = vld [vmem:[#allocation2 + $0x21] sm:$0xff]
      %v1177 = vld [vmem:[#allocation2 + $0x31] sm:$0xff]
      %v1178 = vld [vmem:[#allocation2 + $0x39] sm:$0xff]
      %v1179 = vld [vmem:[#allocation2 + $0x49] sm:$0xff]
      %v1180 = vld [vmem:[#allocation2 + $0x51] sm:$0xff]
      %v1181 = vld [vmem:[#allocation2 + $0x61] sm:$0xff]
      %v1182 = vld [vmem:[#allocation2 + $0x69] sm:$0xff]
      %v1183 = vld [vmem:[#allocation2 + $0x79] sm:$0xff]
      %v1184 = vld [vmem:[#allocation2 + $0x81] sm:$0xff]
      %v1185 = vld [vmem:[#allocation2 + $0x91] sm:$0xff]
      %v1186 = vld [vmem:[#allocation2 + $0x99] sm:$0xff]
      %v1187 = vld [vmem:[#allocation2 + $0xa9] sm:$0xff]
      %v1188 = vld [vmem:[#allocation2 + $0xb1] sm:$0xff]
      %v1189 = vld [vmem:[#allocation2 + $0xc1] sm:$0xff]
      %v1190 = vld [vmem:[#allocation2 + $0xc9] sm:$0xff]
      %v1191 = vld [vmem:[#allocation2 + $0xd9] sm:$0xff]
      %v1192 = vld [vmem:[#allocation2 + $0xe1] sm:$0xff]
      %v1193 = vld [vmem:[#allocation2 + $0xf1] sm:$0xff]
      %v1194 = vld [vmem:[#allocation2 + $0xf9] sm:$0xff]
      %v1195 = vld [vmem:[#allocation2 + $0x109] sm:$0xff]
      %v1196 = vld [vmem:[#allocation2 + $0x111] sm:$0xff]
      %v1197 = vld [vmem:[#allocation2 + $0x121] sm:$0xff]
      %v1198 = vld [vmem:[#allocation2 + $0x129] sm:$0xff]
      %v1199 = vld [vmem:[#allocation2 + $0x139] sm:$0xff]
      %v1200 = vld [vmem:[#allocation2 + $0x141] sm:$0xff]
      %v1201 = vld [vmem:[#allocation2 + $0x151] sm:$0xff]
      %v1202 = vld [vmem:[#allocation2 + $0x159] sm:$0xff]
      %v1203 = vld [vmem:[#allocation2 + $0x169] sm:$0xff]
      %v1204 = vld [vmem:[#allocation2 + $0x171] sm:$0xff]
      %v1205 = vlaneseq
      %v1206 = vshrl.u32 %v1205, 7
      %v1207 = vsub.s32 4, %v1206
      %v1208 = vrot.slane %v462, %v1207
      %v1209 = vmul.f32 %v1173, %v1208
      %v1210 = vmul.f32 %v1174, %v1208
      %v1211 = vmul.f32 %v1175, %v1208
      %v1212 = vmul.f32 %v1176, %v1208
      %v1213 = vmul.f32 %v1177, %v1208
      %v1214 = vmul.f32 %v1178, %v1208
      %v1215 = vmul.f32 %v1179, %v1208
      %v1216 = vmul.f32 %v1180, %v1208
      %v1217 = vmul.f32 %v1181, %v1208
      %v1218 = vmul.f32 %v1182, %v1208
      %v1219 = vmul.f32 %v1183, %v1208
      %v1220 = vmul.f32 %v1184, %v1208
      %v1221 = vmul.f32 %v1185, %v1208
      %v1222 = vmul.f32 %v1186, %v1208
      %v1223 = vmul.f32 %v1187, %v1208
      %v1224 = vmul.f32 %v1188, %v1208
      %v1225 = vmul.f32 %v1189, %v1208
      %v1226 = vmul.f32 %v1190, %v1208
      %v1227 = vmul.f32 %v1191, %v1208
      %v1228 = vmul.f32 %v1192, %v1208
      %v1229 = vmul.f32 %v1193, %v1208
      %v1230 = vmul.f32 %v1194, %v1208
      %v1231 = vmul.f32 %v1195, %v1208
      %v1232 = vmul.f32 %v1196, %v1208
      %v1233 = vmul.f32 %v1197, %v1208
      %v1234 = vmul.f32 %v1198, %v1208
      %v1235 = vmul.f32 %v1199, %v1208
      %v1236 = vmul.f32 %v1200, %v1208
      %v1237 = vmul.f32 %v1201, %v1208
      %v1238 = vmul.f32 %v1202, %v1208
      %v1239 = vmul.f32 %v1203, %v1208
      %v1240 = vmul.f32 %v1204, %v1208
      %v1241 = vld [vmem:[#allocation2 + $0x2] sm:$0xff]
      %v1242 = vld [vmem:[#allocation2 + $0xa] sm:$0xff]
      %v1243 = vld [vmem:[#allocation2 + $0x1a] sm:$0xff]
      %v1244 = vld [vmem:[#allocation2 + $0x22] sm:$0xff]
      %v1245 = vld [vmem:[#allocation2 + $0x32] sm:$0xff]
      %v1246 = vld [vmem:[#allocation2 + $0x3a] sm:$0xff]
      %v1247 = vld [vmem:[#allocation2 + $0x4a] sm:$0xff]
      %v1248 = vld [vmem:[#allocation2 + $0x52] sm:$0xff]
      %v1249 = vld [vmem:[#allocation2 + $0x62] sm:$0xff]
      %v1250 = vld [vmem:[#allocation2 + $0x6a] sm:$0xff]
      %v1251 = vld [vmem:[#allocation2 + $0x7a] sm:$0xff]
      %v1252 = vld [vmem:[#allocation2 + $0x82] sm:$0xff]
      %v1253 = vld [vmem:[#allocation2 + $0x92] sm:$0xff]
      %v1254 = vld [vmem:[#allocation2 + $0x9a] sm:$0xff]
      %v1255 = vld [vmem:[#allocation2 + $0xaa] sm:$0xff]
      %v1256 = vld [vmem:[#allocation2 + $0xb2] sm:$0xff]
      %v1257 = vld [vmem:[#allocation2 + $0xc2] sm:$0xff]
      %v1258 = vld [vmem:[#allocation2 + $0xca] sm:$0xff]
      %v1259 = vld [vmem:[#allocation2 + $0xda] sm:$0xff]
      %v1260 = vld [vmem:[#allocation2 + $0xe2] sm:$0xff]
      %v1261 = vld [vmem:[#allocation2 + $0xf2] sm:$0xff]
      %v1262 = vld [vmem:[#allocation2 + $0xfa] sm:$0xff]
      %v1263 = vld [vmem:[#allocation2 + $0x10a] sm:$0xff]
      %v1264 = vld [vmem:[#allocation2 + $0x112] sm:$0xff]
      %v1265 = vld [vmem:[#allocation2 + $0x122] sm:$0xff]
      %v1266 = vld [vmem:[#allocation2 + $0x12a] sm:$0xff]
      %v1267 = vld [vmem:[#allocation2 + $0x13a] sm:$0xff]
      %v1268 = vld [vmem:[#allocation2 + $0x142] sm:$0xff]
      %v1269 = vld [vmem:[#allocation2 + $0x152] sm:$0xff]
      %v1270 = vld [vmem:[#allocation2 + $0x15a] sm:$0xff]
      %v1271 = vld [vmem:[#allocation2 + $0x16a] sm:$0xff]
      %v1272 = vld [vmem:[#allocation2 + $0x172] sm:$0xff]
      %v1273 = vlaneseq
      %v1274 = vshrl.u32 %v1273, 7
      %v1275 = vsub.s32 5, %v1274
      %v1276 = vrot.slane %v462, %v1275
      %v1277 = vmul.f32 %v1241, %v1276
      %v1278 = vmul.f32 %v1242, %v1276
      %v1279 = vmul.f32 %v1243, %v1276
      %v1280 = vmul.f32 %v1244, %v1276
      %v1281 = vmul.f32 %v1245, %v1276
      %v1282 = vmul.f32 %v1246, %v1276
      %v1283 = vmul.f32 %v1247, %v1276
      %v1284 = vmul.f32 %v1248, %v1276
      %v1285 = vmul.f32 %v1249, %v1276
      %v1286 = vmul.f32 %v1250, %v1276
      %v1287 = vmul.f32 %v1251, %v1276
      %v1288 = vmul.f32 %v1252, %v1276
      %v1289 = vmul.f32 %v1253, %v1276
      %v1290 = vmul.f32 %v1254, %v1276
      %v1291 = vmul.f32 %v1255, %v1276
      %v1292 = vmul.f32 %v1256, %v1276
      %v1293 = vmul.f32 %v1257, %v1276
      %v1294 = vmul.f32 %v1258, %v1276
      %v1295 = vmul.f32 %v1259, %v1276
      %v1296 = vmul.f32 %v1260, %v1276
      %v1297 = vmul.f32 %v1261, %v1276
      %v1298 = vmul.f32 %v1262, %v1276
      %v1299 = vmul.f32 %v1263, %v1276
      %v1300 = vmul.f32 %v1264, %v1276
      %v1301 = vmul.f32 %v1265, %v1276
      %v1302 = vmul.f32 %v1266, %v1276
      %v1303 = vmul.f32 %v1267, %v1276
      %v1304 = vmul.f32 %v1268, %v1276
      %v1305 = vmul.f32 %v1269, %v1276
      %v1306 = vmul.f32 %v1270, %v1276
      %v1307 = vmul.f32 %v1271, %v1276
      %v1308 = vmul.f32 %v1272, %v1276
      %v1309 = vadd.f32 %v1209, %v1277
      %v1310 = vadd.f32 %v1210, %v1278
      %v1311 = vadd.f32 %v1211, %v1279
      %v1312 = vadd.f32 %v1212, %v1280
      %v1313 = vadd.f32 %v1213, %v1281
      %v1314 = vadd.f32 %v1214, %v1282
      %v1315 = vadd.f32 %v1215, %v1283
      %v1316 = vadd.f32 %v1216, %v1284
      %v1317 = vadd.f32 %v1217, %v1285
      %v1318 = vadd.f32 %v1218, %v1286
      %v1319 = vadd.f32 %v1219, %v1287
      %v1320 = vadd.f32 %v1220, %v1288
      %v1321 = vadd.f32 %v1221, %v1289
      %v1322 = vadd.f32 %v1222, %v1290
      %v1323 = vadd.f32 %v1223, %v1291
      %v1324 = vadd.f32 %v1224, %v1292
      %v1325 = vadd.f32 %v1225, %v1293
      %v1326 = vadd.f32 %v1226, %v1294
      %v1327 = vadd.f32 %v1227, %v1295
      %v1328 = vadd.f32 %v1228, %v1296
      %v1329 = vadd.f32 %v1229, %v1297
      %v1330 = vadd.f32 %v1230, %v1298
      %v1331 = vadd.f32 %v1231, %v1299
      %v1332 = vadd.f32 %v1232, %v1300
      %v1333 = vadd.f32 %v1233, %v1301
      %v1334 = vadd.f32 %v1234, %v1302
      %v1335 = vadd.f32 %v1235, %v1303
      %v1336 = vadd.f32 %v1236, %v1304
      %v1337 = vadd.f32 %v1237, %v1305
      %v1338 = vadd.f32 %v1238, %v1306
      %v1339 = vadd.f32 %v1239, %v1307
      %v1340 = vadd.f32 %v1240, %v1308
      %v1341 = vld [vmem:[%s429 + $0x1] sm:$0xff]
      %v1342 = vld [vmem:[%s429 + $0x9] sm:$0xff]
      %v1343 = vld [vmem:[%s429 + $0x19] sm:$0xff]
      %v1344 = vld [vmem:[%s429 + $0x21] sm:$0xff]
      %v1345 = vld [vmem:[%s429 + $0x31] sm:$0xff]
      %v1346 = vld [vmem:[%s429 + $0x39] sm:$0xff]
      %v1347 = vld [vmem:[%s429 + $0x49] sm:$0xff]
      %v1348 = vld [vmem:[%s429 + $0x51] sm:$0xff]
      %v1349 = vld [vmem:[%s429 + $0x61] sm:$0xff]
      %v1350 = vld [vmem:[%s429 + $0x69] sm:$0xff]
      %v1351 = vld [vmem:[%s429 + $0x79] sm:$0xff]
      %v1352 = vld [vmem:[%s429 + $0x81] sm:$0xff]
      %v1353 = vld [vmem:[%s429 + $0x91] sm:$0xff]
      %v1354 = vld [vmem:[%s429 + $0x99] sm:$0xff]
      %v1355 = vld [vmem:[%s429 + $0xa9] sm:$0xff]
      %v1356 = vld [vmem:[%s429 + $0xb1] sm:$0xff]
      %v1357 = vld [vmem:[%s429 + $0xc1] sm:$0xff]
      %v1358 = vld [vmem:[%s429 + $0xc9] sm:$0xff]
      %v1359 = vld [vmem:[%s429 + $0xd9] sm:$0xff]
      %v1360 = vld [vmem:[%s429 + $0xe1] sm:$0xff]
      %v1361 = vld [vmem:[%s429 + $0xf1] sm:$0xff]
      %v1362 = vld [vmem:[%s429 + $0xf9] sm:$0xff]
      %v1363 = vld [vmem:[%s429 + $0x109] sm:$0xff]
      %v1364 = vld [vmem:[%s429 + $0x111] sm:$0xff]
      %v1365 = vld [vmem:[%s429 + $0x121] sm:$0xff]
      %v1366 = vld [vmem:[%s429 + $0x129] sm:$0xff]
      %v1367 = vld [vmem:[%s429 + $0x139] sm:$0xff]
      %v1368 = vld [vmem:[%s429 + $0x141] sm:$0xff]
      %v1369 = vld [vmem:[%s429 + $0x151] sm:$0xff]
      %v1370 = vld [vmem:[%s429 + $0x159] sm:$0xff]
      %v1371 = vld [vmem:[%s429 + $0x169] sm:$0xff]
      %v1372 = vld [vmem:[%s429 + $0x171] sm:$0xff]
      %v1373 = vlaneseq
      %v1374 = vshrl.u32 %v1373, 7
      %v1375 = vsub.s32 6, %v1374
      %v1376 = vrot.slane %v462, %v1375
      %v1377 = vmul.f32 %v1341, %v1376
      %v1378 = vmul.f32 %v1342, %v1376
      %v1379 = vmul.f32 %v1343, %v1376
      %v1380 = vmul.f32 %v1344, %v1376
      %v1381 = vmul.f32 %v1345, %v1376
      %v1382 = vmul.f32 %v1346, %v1376
      %v1383 = vmul.f32 %v1347, %v1376
      %v1384 = vmul.f32 %v1348, %v1376
      %v1385 = vmul.f32 %v1349, %v1376
      %v1386 = vmul.f32 %v1350, %v1376
      %v1387 = vmul.f32 %v1351, %v1376
      %v1388 = vmul.f32 %v1352, %v1376
      %v1389 = vmul.f32 %v1353, %v1376
      %v1390 = vmul.f32 %v1354, %v1376
      %v1391 = vmul.f32 %v1355, %v1376
      %v1392 = vmul.f32 %v1356, %v1376
      %v1393 = vmul.f32 %v1357, %v1376
      %v1394 = vmul.f32 %v1358, %v1376
      %v1395 = vmul.f32 %v1359, %v1376
      %v1396 = vmul.f32 %v1360, %v1376
      %v1397 = vmul.f32 %v1361, %v1376
      %v1398 = vmul.f32 %v1362, %v1376
      %v1399 = vmul.f32 %v1363, %v1376
      %v1400 = vmul.f32 %v1364, %v1376
      %v1401 = vmul.f32 %v1365, %v1376
      %v1402 = vmul.f32 %v1366, %v1376
      %v1403 = vmul.f32 %v1367, %v1376
      %v1404 = vmul.f32 %v1368, %v1376
      %v1405 = vmul.f32 %v1369, %v1376
      %v1406 = vmul.f32 %v1370, %v1376
      %v1407 = vmul.f32 %v1371, %v1376
      %v1408 = vmul.f32 %v1372, %v1376
      %v1409 = vadd.f32 %v1309, %v1377
      %v1410 = vadd.f32 %v1310, %v1378
      %v1411 = vadd.f32 %v1311, %v1379
      %v1412 = vadd.f32 %v1312, %v1380
      %v1413 = vadd.f32 %v1313, %v1381
      %v1414 = vadd.f32 %v1314, %v1382
      %v1415 = vadd.f32 %v1315, %v1383
      %v1416 = vadd.f32 %v1316, %v1384
      %v1417 = vadd.f32 %v1317, %v1385
      %v1418 = vadd.f32 %v1318, %v1386
      %v1419 = vadd.f32 %v1319, %v1387
      %v1420 = vadd.f32 %v1320, %v1388
      %v1421 = vadd.f32 %v1321, %v1389
      %v1422 = vadd.f32 %v1322, %v1390
      %v1423 = vadd.f32 %v1323, %v1391
      %v1424 = vadd.f32 %v1324, %v1392
      %v1425 = vadd.f32 %v1325, %v1393
      %v1426 = vadd.f32 %v1326, %v1394
      %v1427 = vadd.f32 %v1327, %v1395
      %v1428 = vadd.f32 %v1328, %v1396
      %v1429 = vadd.f32 %v1329, %v1397
      %v1430 = vadd.f32 %v1330, %v1398
      %v1431 = vadd.f32 %v1331, %v1399
      %v1432 = vadd.f32 %v1332, %v1400
      %v1433 = vadd.f32 %v1333, %v1401
      %v1434 = vadd.f32 %v1334, %v1402
      %v1435 = vadd.f32 %v1335, %v1403
      %v1436 = vadd.f32 %v1336, %v1404
      %v1437 = vadd.f32 %v1337, %v1405
      %v1438 = vadd.f32 %v1338, %v1406
      %v1439 = vadd.f32 %v1339, %v1407
      %v1440 = vadd.f32 %v1340, %v1408
      %v1441 = vld [vmem:[%s429 + $0x2] sm:$0xff]
      %v1442 = vld [vmem:[%s429 + $0xa] sm:$0xff]
      %v1443 = vld [vmem:[%s429 + $0x1a] sm:$0xff]
      %v1444 = vld [vmem:[%s429 + $0x22] sm:$0xff]
      %v1445 = vld [vmem:[%s429 + $0x32] sm:$0xff]
      %v1446 = vld [vmem:[%s429 + $0x3a] sm:$0xff]
      %v1447 = vld [vmem:[%s429 + $0x4a] sm:$0xff]
      %v1448 = vld [vmem:[%s429 + $0x52] sm:$0xff]
      %v1449 = vld [vmem:[%s429 + $0x62] sm:$0xff]
      %v1450 = vld [vmem:[%s429 + $0x6a] sm:$0xff]
      %v1451 = vld [vmem:[%s429 + $0x7a] sm:$0xff]
      %v1452 = vld [vmem:[%s429 + $0x82] sm:$0xff]
      %v1453 = vld [vmem:[%s429 + $0x92] sm:$0xff]
      %v1454 = vld [vmem:[%s429 + $0x9a] sm:$0xff]
      %v1455 = vld [vmem:[%s429 + $0xaa] sm:$0xff]
      %v1456 = vld [vmem:[%s429 + $0xb2] sm:$0xff]
      %v1457 = vld [vmem:[%s429 + $0xc2] sm:$0xff]
      %v1458 = vld [vmem:[%s429 + $0xca] sm:$0xff]
      %v1459 = vld [vmem:[%s429 + $0xda] sm:$0xff]
      %v1460 = vld [vmem:[%s429 + $0xe2] sm:$0xff]
      %v1461 = vld [vmem:[%s429 + $0xf2] sm:$0xff]
      %v1462 = vld [vmem:[%s429 + $0xfa] sm:$0xff]
      %v1463 = vld [vmem:[%s429 + $0x10a] sm:$0xff]
      %v1464 = vld [vmem:[%s429 + $0x112] sm:$0xff]
      %v1465 = vld [vmem:[%s429 + $0x122] sm:$0xff]
      %v1466 = vld [vmem:[%s429 + $0x12a] sm:$0xff]
      %v1467 = vld [vmem:[%s429 + $0x13a] sm:$0xff]
      %v1468 = vld [vmem:[%s429 + $0x142] sm:$0xff]
      %v1469 = vld [vmem:[%s429 + $0x152] sm:$0xff]
      %v1470 = vld [vmem:[%s429 + $0x15a] sm:$0xff]
      %v1471 = vld [vmem:[%s429 + $0x16a] sm:$0xff]
      %v1472 = vld [vmem:[%s429 + $0x172] sm:$0xff]
      %v1473 = vlaneseq
      %v1474 = vshrl.u32 %v1473, 7
      %v1475 = vsub.s32 7, %v1474
      %v1476 = vrot.slane %v462, %v1475
      %v1477 = vmul.f32 %v1441, %v1476
      %v1478 = vmul.f32 %v1442, %v1476
      %v1479 = vmul.f32 %v1443, %v1476
      %v1480 = vmul.f32 %v1444, %v1476
      %v1481 = vmul.f32 %v1445, %v1476
      %v1482 = vmul.f32 %v1446, %v1476
      %v1483 = vmul.f32 %v1447, %v1476
      %v1484 = vmul.f32 %v1448, %v1476
      %v1485 = vmul.f32 %v1449, %v1476
      %v1486 = vmul.f32 %v1450, %v1476
      %v1487 = vmul.f32 %v1451, %v1476
      %v1488 = vmul.f32 %v1452, %v1476
      %v1489 = vmul.f32 %v1453, %v1476
      %v1490 = vmul.f32 %v1454, %v1476
      %v1491 = vmul.f32 %v1455, %v1476
      %v1492 = vmul.f32 %v1456, %v1476
      %v1493 = vmul.f32 %v1457, %v1476
      %v1494 = vmul.f32 %v1458, %v1476
      %v1495 = vmul.f32 %v1459, %v1476
      %v1496 = vmul.f32 %v1460, %v1476
      %v1497 = vmul.f32 %v1461, %v1476
      %v1498 = vmul.f32 %v1462, %v1476
      %v1499 = vmul.f32 %v1463, %v1476
      %v1500 = vmul.f32 %v1464, %v1476
      %v1501 = vmul.f32 %v1465, %v1476
      %v1502 = vmul.f32 %v1466, %v1476
      %v1503 = vmul.f32 %v1467, %v1476
      %v1504 = vmul.f32 %v1468, %v1476
      %v1505 = vmul.f32 %v1469, %v1476
      %v1506 = vmul.f32 %v1470, %v1476
      %v1507 = vmul.f32 %v1471, %v1476
      %v1508 = vmul.f32 %v1472, %v1476
      %v1509 = vadd.f32 %v1409, %v1477
      %v1510 = vadd.f32 %v1410, %v1478
      %v1511 = vadd.f32 %v1411, %v1479
      %v1512 = vadd.f32 %v1412, %v1480
      %v1513 = vadd.f32 %v1413, %v1481
      %v1514 = vadd.f32 %v1414, %v1482
      %v1515 = vadd.f32 %v1415, %v1483
      %v1516 = vadd.f32 %v1416, %v1484
      %v1517 = vadd.f32 %v1417, %v1485
      %v1518 = vadd.f32 %v1418, %v1486
      %v1519 = vadd.f32 %v1419, %v1487
      %v1520 = vadd.f32 %v1420, %v1488
      %v1521 = vadd.f32 %v1421, %v1489
      %v1522 = vadd.f32 %v1422, %v1490
      %v1523 = vadd.f32 %v1423, %v1491
      %v1524 = vadd.f32 %v1424, %v1492
      %v1525 = vadd.f32 %v1425, %v1493
      %v1526 = vadd.f32 %v1426, %v1494
      %v1527 = vadd.f32 %v1427, %v1495
      %v1528 = vadd.f32 %v1428, %v1496
      %v1529 = vadd.f32 %v1429, %v1497
      %v1530 = vadd.f32 %v1430, %v1498
      %v1531 = vadd.f32 %v1431, %v1499
      %v1532 = vadd.f32 %v1432, %v1500
      %v1533 = vadd.f32 %v1433, %v1501
      %v1534 = vadd.f32 %v1434, %v1502
      %v1535 = vadd.f32 %v1435, %v1503
      %v1536 = vadd.f32 %v1436, %v1504
      %v1537 = vadd.f32 %v1437, %v1505
      %v1538 = vadd.f32 %v1438, %v1506
      %v1539 = vadd.f32 %v1439, %v1507
      %v1540 = vadd.f32 %v1440, %v1508
      %v1541 = vadd.f32 %v1509, %v839
      %v1542 = vadd.f32 %v1510, %v839
      %v1543 = vadd.f32 %v1511, %v839
      %v1544 = vadd.f32 %v1512, %v839
      %v1545 = vadd.f32 %v1513, %v839
      %v1546 = vadd.f32 %v1514, %v839
      %v1547 = vadd.f32 %v1515, %v839
      %v1548 = vadd.f32 %v1516, %v839
      %v1549 = vadd.f32 %v1517, %v839
      %v1550 = vadd.f32 %v1518, %v839
      %v1551 = vadd.f32 %v1519, %v839
      %v1552 = vadd.f32 %v1520, %v839
      %v1553 = vadd.f32 %v1521, %v839
      %v1554 = vadd.f32 %v1522, %v839
      %v1555 = vadd.f32 %v1523, %v839
      %v1556 = vadd.f32 %v1524, %v839
      %v1557 = vadd.f32 %v1525, %v839
      %v1558 = vadd.f32 %v1526, %v839
      %v1559 = vadd.f32 %v1527, %v839
      %v1560 = vadd.f32 %v1528, %v839
      %v1561 = vadd.f32 %v1529, %v839
      %v1562 = vadd.f32 %v1530, %v839
      %v1563 = vadd.f32 %v1531, %v839
      %v1564 = vadd.f32 %v1532, %v839
      %v1565 = vadd.f32 %v1533, %v839
      %v1566 = vadd.f32 %v1534, %v839
      %v1567 = vadd.f32 %v1535, %v839
      %v1568 = vadd.f32 %v1536, %v839
      %v1569 = vadd.f32 %v1537, %v839
      %v1570 = vadd.f32 %v1538, %v839
      %v1571 = vadd.f32 %v1539, %v839
      %v1572 = vadd.f32 %v1540, %v839
      %v1573 = vmax.f32 %v1541, 0.0
      %v1574 = vmax.f32 %v1542, 0.0
      %v1575 = vmax.f32 %v1543, 0.0
      %v1576 = vmax.f32 %v1544, 0.0
      %v1577 = vmax.f32 %v1545, 0.0
      %v1578 = vmax.f32 %v1546, 0.0
      %v1579 = vmax.f32 %v1547, 0.0
      %v1580 = vmax.f32 %v1548, 0.0
      %v1581 = vmax.f32 %v1549, 0.0
      %v1582 = vmax.f32 %v1550, 0.0
      %v1583 = vmax.f32 %v1551, 0.0
      %v1584 = vmax.f32 %v1552, 0.0
      %v1585 = vmax.f32 %v1553, 0.0
      %v1586 = vmax.f32 %v1554, 0.0
      %v1587 = vmax.f32 %v1555, 0.0
      %v1588 = vmax.f32 %v1556, 0.0
      %v1589 = vmax.f32 %v1557, 0.0
      %v1590 = vmax.f32 %v1558, 0.0
      %v1591 = vmax.f32 %v1559, 0.0
      %v1592 = vmax.f32 %v1560, 0.0
      %v1593 = vmax.f32 %v1561, 0.0
      %v1594 = vmax.f32 %v1562, 0.0
      %v1595 = vmax.f32 %v1563, 0.0
      %v1596 = vmax.f32 %v1564, 0.0
      %v1597 = vmax.f32 %v1565, 0.0
      %v1598 = vmax.f32 %v1566, 0.0
      %v1599 = vmax.f32 %v1567, 0.0
      %v1600 = vmax.f32 %v1568, 0.0
      %v1601 = vmax.f32 %v1569, 0.0
      %v1602 = vmax.f32 %v1570, 0.0
      %v1603 = vmax.f32 %v1571, 0.0
      %v1604 = vmax.f32 %v1572, 0.0
      %v1605 = vpack.c.bf16 %v1574, %v1573
      %v1606 = vpack.c.bf16 %v1576, %v1575
      %v1607 = vpack.c.bf16 %v1578, %v1577
      %v1608 = vpack.c.bf16 %v1580, %v1579
      %v1609 = vpack.c.bf16 %v1582, %v1581
      %v1610 = vpack.c.bf16 %v1584, %v1583
      %v1611 = vpack.c.bf16 %v1586, %v1585
      %v1612 = vpack.c.bf16 %v1588, %v1587
      %v1613 = vpack.c.bf16 %v1590, %v1589
      %v1614 = vpack.c.bf16 %v1592, %v1591
      %v1615 = vpack.c.bf16 %v1594, %v1593
      %v1616 = vpack.c.bf16 %v1596, %v1595
      %v1617 = vpack.c.bf16 %v1598, %v1597
      %v1618 = vpack.c.bf16 %v1600, %v1599
      %v1619 = vpack.c.bf16 %v1602, %v1601
      %v1620 = vpack.c.bf16 %v1604, %v1603
      %v1622 = vsel %vm331, %v1605, 0
      %v1625 = vsel %vm331, %v1606, 0
      %v1628 = vsel %vm331, %v1607, 0
      %v1631 = vsel %vm331, %v1608, 0
      %v1634 = vsel %vm331, %v1609, 0
      %v1637 = vsel %vm331, %v1610, 0
      %v1640 = vsel %vm331, %v1611, 0
      %v1643 = vsel %vm331, %v1612, 0
      %v1646 = vsel %vm331, %v1613, 0
      %v1649 = vsel %vm331, %v1614, 0
      %v1652 = vsel %vm331, %v1615, 0
      %v1655 = vsel %vm331, %v1616, 0
      %v1658 = vsel %vm331, %v1617, 0
      %v1661 = vsel %vm331, %v1618, 0
      %v1664 = vsel %vm331, %v1619, 0
      %v1667 = vsel %vm331, %v1620, 0
      %1669 = vmatprep.subr.bf16.mxu0 0
      %1670 = vmatpush1.bf16.msra.mxu0 %v977
      %1671 = vmatprep.subr.bf16.mxu0 0
      %1672 = vmatpush1.bf16.msra.mxu0 0
      %1673 = vmatprep.subr.bf16.mxu0 0
      %1674 = vmatpush1.bf16.msra.mxu0 0
      %1675 = vmatprep.subr.bf16.mxu0 0
      %1676 = vmatpush1.bf16.msra.mxu0 0
      %1677 = vmatprep.subr.bf16.mxu0 0
      %1678 = vmatpush1.bf16.msra.mxu0 0
      %1679 = vmatprep.subr.bf16.mxu0 0
      %1680 = vmatpush1.bf16.msra.mxu0 0
      %1681 = vmatprep.subr.bf16.mxu0 0
      %1682 = vmatpush1.bf16.msra.mxu0 0
      %1683 = vmatprep.subr.bf16.mxu0 0
      %1684 = vmatpush1.bf16.msra.mxu0 0
      %1685 = vmatprep.subr.bf16.mxu0 0
      %1686 = vmatpush1.bf16.msra.mxu0 0
      %1687 = vmatprep.subr.bf16.mxu0 0
      %1688 = vmatpush1.bf16.msra.mxu0 0
      %1689 = vmatprep.subr.bf16.mxu0 0
      %1690 = vmatpush1.bf16.msra.mxu0 0
      %1691 = vmatprep.subr.bf16.mxu0 0
      %1692 = vmatpush1.bf16.msra.mxu0 0
      %1693 = vmatprep.subr.bf16.mxu0 0
      %1694 = vmatpush1.bf16.msra.mxu0 0
      %1695 = vmatprep.subr.bf16.mxu0 0
      %1696 = vmatpush1.bf16.msra.mxu0 0
      %1697 = vmatprep.subr.bf16.mxu0 0
      %1698 = vmatpush1.bf16.msra.mxu0 0
      %1699 = vmatprep.subr.bf16.mxu0 0
      %1700 = vmatpush1.bf16.msra.mxu0 0
      %1701 = vmatprep.mubr.bf16.mxu0 0
      %1702 = vmatmul.mubr.bf16.gmra.mrb[0].mxu0 %v1622
      %v1703 = vpop.f32.mrb[0].mxu0
      %v1704 = vadd.f32 %v925, %v1703
      %v1705 = vpop.f32.mrb[0].mxu0
      %v1706 = vpop.f32.mrb[0].mxu0
      %v1707 = vadd.f32 %v925, %v1706
      %v1708 = vpop.f32.mrb[0].mxu0
      %1709 = vmatprep.mubr.bf16.mxu0 0
      %1710 = vmatmul.mubr.bf16.gmra.mrb[0].mxu0 %v1625
      %v1711 = vpop.f32.mrb[0].mxu0
      %v1712 = vadd.f32 %v925, %v1711
      %v1713 = vpop.f32.mrb[0].mxu0
      %v1714 = vpop.f32.mrb[0].mxu0
      %v1715 = vadd.f32 %v925, %v1714
      %v1716 = vpop.f32.mrb[0].mxu0
      %1717 = vmatprep.mubr.bf16.mxu0 0
      %1718 = vmatmul.mubr.bf16.gmra.mrb[0].mxu0 %v1628
      %v1719 = vpop.f32.mrb[0].mxu0
      %v1720 = vadd.f32 %v925, %v1719
      %v1721 = vpop.f32.mrb[0].mxu0
      %v1722 = vpop.f32.mrb[0].mxu0
      %v1723 = vadd.f32 %v925, %v1722
      %v1724 = vpop.f32.mrb[0].mxu0
      %1725 = vmatprep.mubr.bf16.mxu0 0
      %1726 = vmatmul.mubr.bf16.gmra.mrb[0].mxu0 %v1631
      %v1727 = vpop.f32.mrb[0].mxu0
      %v1728 = vadd.f32 %v925, %v1727
      %v1729 = vpop.f32.mrb[0].mxu0
      %v1730 = vpop.f32.mrb[0].mxu0
      %v1731 = vadd.f32 %v925, %v1730
      %v1732 = vpop.f32.mrb[0].mxu0
      %1733 = vmatprep.mubr.bf16.mxu0 0
      %1734 = vmatmul.mubr.bf16.gmra.mrb[0].mxu0 %v1634
      %v1735 = vpop.f32.mrb[0].mxu0
      %v1736 = vadd.f32 %v925, %v1735
      %v1737 = vpop.f32.mrb[0].mxu0
      %v1738 = vpop.f32.mrb[0].mxu0
      %v1739 = vadd.f32 %v925, %v1738
      %v1740 = vpop.f32.mrb[0].mxu0
      %1741 = vmatprep.mubr.bf16.mxu0 0
      %1742 = vmatmul.mubr.bf16.gmra.mrb[0].mxu0 %v1637
      %v1743 = vpop.f32.mrb[0].mxu0
      %v1744 = vadd.f32 %v925, %v1743
      %v1745 = vpop.f32.mrb[0].mxu0
      %v1746 = vpop.f32.mrb[0].mxu0
      %v1747 = vadd.f32 %v925, %v1746
      %v1748 = vpop.f32.mrb[0].mxu0
      %1749 = vmatprep.mubr.bf16.mxu0 0
      %1750 = vmatmul.mubr.bf16.gmra.mrb[0].mxu0 %v1640
      %v1751 = vpop.f32.mrb[0].mxu0
      %v1752 = vadd.f32 %v925, %v1751
      %v1753 = vpop.f32.mrb[0].mxu0
      %v1754 = vpop.f32.mrb[0].mxu0
      %v1755 = vadd.f32 %v925, %v1754
      %v1756 = vpop.f32.mrb[0].mxu0
      %1757 = vmatprep.mubr.bf16.mxu0 0
      %1758 = vmatmul.mubr.bf16.gmra.mrb[0].mxu0 %v1643
      %v1759 = vpop.f32.mrb[0].mxu0
      %v1760 = vadd.f32 %v925, %v1759
      %v1761 = vpop.f32.mrb[0].mxu0
      %v1762 = vpop.f32.mrb[0].mxu0
      %v1763 = vadd.f32 %v925, %v1762
      %v1764 = vpop.f32.mrb[0].mxu0
      %1765 = vmatprep.mubr.bf16.mxu0 0
      %1766 = vmatmul.mubr.bf16.gmra.mrb[0].mxu0 %v1646
      %v1767 = vpop.f32.mrb[0].mxu0
      %v1768 = vadd.f32 %v925, %v1767
      %v1769 = vpop.f32.mrb[0].mxu0
      %v1770 = vpop.f32.mrb[0].mxu0
      %v1771 = vadd.f32 %v925, %v1770
      %v1772 = vpop.f32.mrb[0].mxu0
      %1773 = vmatprep.mubr.bf16.mxu0 0
      %1774 = vmatmul.mubr.bf16.gmra.mrb[0].mxu0 %v1649
      %v1775 = vpop.f32.mrb[0].mxu0
      %v1776 = vadd.f32 %v925, %v1775
      %v1777 = vpop.f32.mrb[0].mxu0
      %v1778 = vpop.f32.mrb[0].mxu0
      %v1779 = vadd.f32 %v925, %v1778
      %v1780 = vpop.f32.mrb[0].mxu0
      %1781 = vmatprep.mubr.bf16.mxu0 0
      %1782 = vmatmul.mubr.bf16.gmra.mrb[0].mxu0 %v1652
      %v1783 = vpop.f32.mrb[0].mxu0
      %v1784 = vadd.f32 %v925, %v1783
      %v1785 = vpop.f32.mrb[0].mxu0
      %v1786 = vpop.f32.mrb[0].mxu0
      %v1787 = vadd.f32 %v925, %v1786
      %v1788 = vpop.f32.mrb[0].mxu0
      %1789 = vmatprep.mubr.bf16.mxu0 0
      %1790 = vmatmul.mubr.bf16.gmra.mrb[0].mxu0 %v1655
      %v1791 = vpop.f32.mrb[0].mxu0
      %v1792 = vadd.f32 %v925, %v1791
      %v1793 = vpop.f32.mrb[0].mxu0
      %v1794 = vpop.f32.mrb[0].mxu0
      %v1795 = vadd.f32 %v925, %v1794
      %v1796 = vpop.f32.mrb[0].mxu0
      %1797 = vmatprep.mubr.bf16.mxu0 0
      %1798 = vmatmul.mubr.bf16.gmra.mrb[0].mxu0 %v1658
      %v1799 = vpop.f32.mrb[0].mxu0
      %v1800 = vadd.f32 %v925, %v1799
      %v1801 = vpop.f32.mrb[0].mxu0
      %v1802 = vpop.f32.mrb[0].mxu0
      %v1803 = vadd.f32 %v925, %v1802
      %v1804 = vpop.f32.mrb[0].mxu0
      %1805 = vmatprep.mubr.bf16.mxu0 0
      %1806 = vmatmul.mubr.bf16.gmra.mrb[0].mxu0 %v1661
      %v1807 = vpop.f32.mrb[0].mxu0
      %v1808 = vadd.f32 %v925, %v1807
      %v1809 = vpop.f32.mrb[0].mxu0
      %v1810 = vpop.f32.mrb[0].mxu0
      %v1811 = vadd.f32 %v925, %v1810
      %v1812 = vpop.f32.mrb[0].mxu0
      %1813 = vmatprep.mubr.bf16.mxu0 0
      %1814 = vmatmul.mubr.bf16.gmra.mrb[0].mxu0 %v1664
      %v1815 = vpop.f32.mrb[0].mxu0
      %v1816 = vadd.f32 %v925, %v1815
      %v1817 = vpop.f32.mrb[0].mxu0
      %v1818 = vpop.f32.mrb[0].mxu0
      %v1819 = vadd.f32 %v925, %v1818
      %v1820 = vpop.f32.mrb[0].mxu0
      %1821 = vmatprep.mubr.bf16.mxu0 0
      %1822 = vmatmul.mubr.bf16.gmra.mrb[0].mxu0 %v1667
      %v1823 = vpop.f32.mrb[0].mxu0
      %v1824 = vadd.f32 %v925, %v1823
      %v1825 = vpop.f32.mrb[0].mxu0
      %v1826 = vpop.f32.mrb[0].mxu0
      %v1827 = vadd.f32 %v925, %v1826
      %v1828 = vpop.f32.mrb[0].mxu0
      %1829 = vdwg.mxu0
      %s1830 = scalar_lea.vmem %s328, 256
      %1831 = vst.msk [vmem:[%s1830] sm:$0xff] %vm1140, %v1704
      %1832 = vst.msk [vmem:[%s1830 + $0x8] sm:$0xff] %vm1140, %v1707
      %1833 = vst.msk [vmem:[%s1830 + $0x10] sm:$0xff] %vm1140, %v1712
      %1834 = vst.msk [vmem:[%s1830 + $0x18] sm:$0xff] %vm1140, %v1715
      %1835 = vst.msk [vmem:[%s1830 + $0x20] sm:$0xff] %vm1140, %v1720
      %1836 = vst.msk [vmem:[%s1830 + $0x28] sm:$0xff] %vm1140, %v1723
      %1837 = vst.msk [vmem:[%s1830 + $0x30] sm:$0xff] %vm1140, %v1728
      %1838 = vst.msk [vmem:[%s1830 + $0x38] sm:$0xff] %vm1140, %v1731
      %1839 = vst.msk [vmem:[%s1830 + $0x40] sm:$0xff] %vm1140, %v1736
      %1840 = vst.msk [vmem:[%s1830 + $0x48] sm:$0xff] %vm1140, %v1739
      %1841 = vst.msk [vmem:[%s1830 + $0x50] sm:$0xff] %vm1140, %v1744
      %1842 = vst.msk [vmem:[%s1830 + $0x58] sm:$0xff] %vm1140, %v1747
      %1843 = vst.msk [vmem:[%s1830 + $0x60] sm:$0xff] %vm1140, %v1752
      %1844 = vst.msk [vmem:[%s1830 + $0x68] sm:$0xff] %vm1140, %v1755
      %1845 = vst.msk [vmem:[%s1830 + $0x70] sm:$0xff] %vm1140, %v1760
      %1846 = vst.msk [vmem:[%s1830 + $0x78] sm:$0xff] %vm1140, %v1763
      %1847 = vst.msk [vmem:[%s1830 + $0x80] sm:$0xff] %vm1140, %v1768
      %1848 = vst.msk [vmem:[%s1830 + $0x88] sm:$0xff] %vm1140, %v1771
      %1849 = vst.msk [vmem:[%s1830 + $0x90] sm:$0xff] %vm1140, %v1776
      %1850 = vst.msk [vmem:[%s1830 + $0x98] sm:$0xff] %vm1140, %v1779
      %1851 = vst.msk [vmem:[%s1830 + $0xa0] sm:$0xff] %vm1140, %v1784
      %1852 = vst.msk [vmem:[%s1830 + $0xa8] sm:$0xff] %vm1140, %v1787
      %1853 = vst.msk [vmem:[%s1830 + $0xb0] sm:$0xff] %vm1140, %v1792
      %1854 = vst.msk [vmem:[%s1830 + $0xb8] sm:$0xff] %vm1140, %v1795
      %1855 = vst.msk [vmem:[%s1830 + $0xc0] sm:$0xff] %vm1140, %v1800
      %1856 = vst.msk [vmem:[%s1830 + $0xc8] sm:$0xff] %vm1140, %v1803
      %1857 = vst.msk [vmem:[%s1830 + $0xd0] sm:$0xff] %vm1140, %v1808
      %1858 = vst.msk [vmem:[%s1830 + $0xd8] sm:$0xff] %vm1140, %v1811
      %1859 = vst.msk [vmem:[%s1830 + $0xe0] sm:$0xff] %vm1140, %v1816
      %1860 = vst.msk [vmem:[%s1830 + $0xe8] sm:$0xff] %vm1140, %v1819
      %1861 = vst.msk [vmem:[%s1830 + $0xf0] sm:$0xff] %vm1140, %v1824
      %1862 = vst.msk [vmem:[%s1830 + $0xf8] sm:$0xff] %vm1140, %v1827
      %v1863 = vld [vmem:[%s429] sm:$0xff]
      %v1864 = vld [vmem:[%s429 + $0x8] sm:$0xff]
      %v1865 = vld [vmem:[%s429 + $0x18] sm:$0xff]
      %v1866 = vld [vmem:[%s429 + $0x20] sm:$0xff]
      %v1867 = vld [vmem:[%s429 + $0x30] sm:$0xff]
      %v1868 = vld [vmem:[%s429 + $0x38] sm:$0xff]
      %v1869 = vld [vmem:[%s429 + $0x48] sm:$0xff]
      %v1870 = vld [vmem:[%s429 + $0x50] sm:$0xff]
      %v1871 = vld [vmem:[%s429 + $0x60] sm:$0xff]
      %v1872 = vld [vmem:[%s429 + $0x68] sm:$0xff]
      %v1873 = vld [vmem:[%s429 + $0x78] sm:$0xff]
      %v1874 = vld [vmem:[%s429 + $0x80] sm:$0xff]
      %v1875 = vld [vmem:[%s429 + $0x90] sm:$0xff]
      %v1876 = vld [vmem:[%s429 + $0x98] sm:$0xff]
      %v1877 = vld [vmem:[%s429 + $0xa8] sm:$0xff]
      %v1878 = vld [vmem:[%s429 + $0xb0] sm:$0xff]
      %v1879 = vld [vmem:[%s429 + $0xc0] sm:$0xff]
      %v1880 = vld [vmem:[%s429 + $0xc8] sm:$0xff]
      %v1881 = vld [vmem:[%s429 + $0xd8] sm:$0xff]
      %v1882 = vld [vmem:[%s429 + $0xe0] sm:$0xff]
      %v1883 = vld [vmem:[%s429 + $0xf0] sm:$0xff]
      %v1884 = vld [vmem:[%s429 + $0xf8] sm:$0xff]
      %v1885 = vld [vmem:[%s429 + $0x108] sm:$0xff]
      %v1886 = vld [vmem:[%s429 + $0x110] sm:$0xff]
      %v1887 = vld [vmem:[%s429 + $0x120] sm:$0xff]
      %v1888 = vld [vmem:[%s429 + $0x128] sm:$0xff]
      %v1889 = vld [vmem:[%s429 + $0x138] sm:$0xff]
      %v1890 = vld [vmem:[%s429 + $0x140] sm:$0xff]
      %v1891 = vld [vmem:[%s429 + $0x150] sm:$0xff]
      %v1892 = vld [vmem:[%s429 + $0x158] sm:$0xff]
      %v1893 = vld [vmem:[%s429 + $0x168] sm:$0xff]
      %v1894 = vld [vmem:[%s429 + $0x170] sm:$0xff]
      %v1895 = vlaneseq
      %v1896 = vshrl.u32 %v1895, 7
      %v1897 = vsub.s32 0, %v1896
      %v1898 = vrot.slane %v463, %v1897
      %v1899 = vmul.f32 %v1863, %v1898
      %v1900 = vmul.f32 %v1864, %v1898
      %v1901 = vmul.f32 %v1865, %v1898
      %v1902 = vmul.f32 %v1866, %v1898
      %v1903 = vmul.f32 %v1867, %v1898
      %v1904 = vmul.f32 %v1868, %v1898
      %v1905 = vmul.f32 %v1869, %v1898
      %v1906 = vmul.f32 %v1870, %v1898
      %v1907 = vmul.f32 %v1871, %v1898
      %v1908 = vmul.f32 %v1872, %v1898
      %v1909 = vmul.f32 %v1873, %v1898
      %v1910 = vmul.f32 %v1874, %v1898
      %v1911 = vmul.f32 %v1875, %v1898
      %v1912 = vmul.f32 %v1876, %v1898
      %v1913 = vmul.f32 %v1877, %v1898
      %v1914 = vmul.f32 %v1878, %v1898
      %v1915 = vmul.f32 %v1879, %v1898
      %v1916 = vmul.f32 %v1880, %v1898
      %v1917 = vmul.f32 %v1881, %v1898
      %v1918 = vmul.f32 %v1882, %v1898
      %v1919 = vmul.f32 %v1883, %v1898
      %v1920 = vmul.f32 %v1884, %v1898
      %v1921 = vmul.f32 %v1885, %v1898
      %v1922 = vmul.f32 %v1886, %v1898
      %v1923 = vmul.f32 %v1887, %v1898
      %v1924 = vmul.f32 %v1888, %v1898
      %v1925 = vmul.f32 %v1889, %v1898
      %v1926 = vmul.f32 %v1890, %v1898
      %v1927 = vmul.f32 %v1891, %v1898
      %v1928 = vmul.f32 %v1892, %v1898
      %v1929 = vmul.f32 %v1893, %v1898
      %v1930 = vmul.f32 %v1894, %v1898
      %v1931 = vld [vmem:[%s429 + $0x1] sm:$0xff]
      %v1932 = vld [vmem:[%s429 + $0x9] sm:$0xff]
      %v1933 = vld [vmem:[%s429 + $0x19] sm:$0xff]
      %v1934 = vld [vmem:[%s429 + $0x21] sm:$0xff]
      %v1935 = vld [vmem:[%s429 + $0x31] sm:$0xff]
      %v1936 = vld [vmem:[%s429 + $0x39] sm:$0xff]
      %v1937 = vld [vmem:[%s429 + $0x49] sm:$0xff]
      %v1938 = vld [vmem:[%s429 + $0x51] sm:$0xff]
      %v1939 = vld [vmem:[%s429 + $0x61] sm:$0xff]
      %v1940 = vld [vmem:[%s429 + $0x69] sm:$0xff]
      %v1941 = vld [vmem:[%s429 + $0x79] sm:$0xff]
      %v1942 = vld [vmem:[%s429 + $0x81] sm:$0xff]
      %v1943 = vld [vmem:[%s429 + $0x91] sm:$0xff]
      %v1944 = vld [vmem:[%s429 + $0x99] sm:$0xff]
      %v1945 = vld [vmem:[%s429 + $0xa9] sm:$0xff]
      %v1946 = vld [vmem:[%s429 + $0xb1] sm:$0xff]
      %v1947 = vld [vmem:[%s429 + $0xc1] sm:$0xff]
      %v1948 = vld [vmem:[%s429 + $0xc9] sm:$0xff]
      %v1949 = vld [vmem:[%s429 + $0xd9] sm:$0xff]
      %v1950 = vld [vmem:[%s429 + $0xe1] sm:$0xff]
      %v1951 = vld [vmem:[%s429 + $0xf1] sm:$0xff]
      %v1952 = vld [vmem:[%s429 + $0xf9] sm:$0xff]
      %v1953 = vld [vmem:[%s429 + $0x109] sm:$0xff]
      %v1954 = vld [vmem:[%s429 + $0x111] sm:$0xff]
      %v1955 = vld [vmem:[%s429 + $0x121] sm:$0xff]
      %v1956 = vld [vmem:[%s429 + $0x129] sm:$0xff]
      %v1957 = vld [vmem:[%s429 + $0x139] sm:$0xff]
      %v1958 = vld [vmem:[%s429 + $0x141] sm:$0xff]
      %v1959 = vld [vmem:[%s429 + $0x151] sm:$0xff]
      %v1960 = vld [vmem:[%s429 + $0x159] sm:$0xff]
      %v1961 = vld [vmem:[%s429 + $0x169] sm:$0xff]
      %v1962 = vld [vmem:[%s429 + $0x171] sm:$0xff]
      %v1963 = vlaneseq
      %v1964 = vshrl.u32 %v1963, 7
      %v1965 = vsub.s32 1, %v1964
      %v1966 = vrot.slane %v463, %v1965
      %v1967 = vmul.f32 %v1931, %v1966
      %v1968 = vmul.f32 %v1932, %v1966
      %v1969 = vmul.f32 %v1933, %v1966
      %v1970 = vmul.f32 %v1934, %v1966
      %v1971 = vmul.f32 %v1935, %v1966
      %v1972 = vmul.f32 %v1936, %v1966
      %v1973 = vmul.f32 %v1937, %v1966
      %v1974 = vmul.f32 %v1938, %v1966
      %v1975 = vmul.f32 %v1939, %v1966
      %v1976 = vmul.f32 %v1940, %v1966
      %v1977 = vmul.f32 %v1941, %v1966
      %v1978 = vmul.f32 %v1942, %v1966
      %v1979 = vmul.f32 %v1943, %v1966
      %v1980 = vmul.f32 %v1944, %v1966
      %v1981 = vmul.f32 %v1945, %v1966
      %v1982 = vmul.f32 %v1946, %v1966
      %v1983 = vmul.f32 %v1947, %v1966
      %v1984 = vmul.f32 %v1948, %v1966
      %v1985 = vmul.f32 %v1949, %v1966
      %v1986 = vmul.f32 %v1950, %v1966
      %v1987 = vmul.f32 %v1951, %v1966
      %v1988 = vmul.f32 %v1952, %v1966
      %v1989 = vmul.f32 %v1953, %v1966
      %v1990 = vmul.f32 %v1954, %v1966
      %v1991 = vmul.f32 %v1955, %v1966
      %v1992 = vmul.f32 %v1956, %v1966
      %v1993 = vmul.f32 %v1957, %v1966
      %v1994 = vmul.f32 %v1958, %v1966
      %v1995 = vmul.f32 %v1959, %v1966
      %v1996 = vmul.f32 %v1960, %v1966
      %v1997 = vmul.f32 %v1961, %v1966
      %v1998 = vmul.f32 %v1962, %v1966
      %v1999 = vadd.f32 %v1899, %v1967
      %v2000 = vadd.f32 %v1900, %v1968
      %v2001 = vadd.f32 %v1901, %v1969
      %v2002 = vadd.f32 %v1902, %v1970
      %v2003 = vadd.f32 %v1903, %v1971
      %v2004 = vadd.f32 %v1904, %v1972
      %v2005 = vadd.f32 %v1905, %v1973
      %v2006 = vadd.f32 %v1906, %v1974
      %v2007 = vadd.f32 %v1907, %v1975
      %v2008 = vadd.f32 %v1908, %v1976
      %v2009 = vadd.f32 %v1909, %v1977
      %v2010 = vadd.f32 %v1910, %v1978
      %v2011 = vadd.f32 %v1911, %v1979
      %v2012 = vadd.f32 %v1912, %v1980
      %v2013 = vadd.f32 %v1913, %v1981
      %v2014 = vadd.f32 %v1914, %v1982
      %v2015 = vadd.f32 %v1915, %v1983
      %v2016 = vadd.f32 %v1916, %v1984
      %v2017 = vadd.f32 %v1917, %v1985
      %v2018 = vadd.f32 %v1918, %v1986
      %v2019 = vadd.f32 %v1919, %v1987
      %v2020 = vadd.f32 %v1920, %v1988
      %v2021 = vadd.f32 %v1921, %v1989
      %v2022 = vadd.f32 %v1922, %v1990
      %v2023 = vadd.f32 %v1923, %v1991
      %v2024 = vadd.f32 %v1924, %v1992
      %v2025 = vadd.f32 %v1925, %v1993
      %v2026 = vadd.f32 %v1926, %v1994
      %v2027 = vadd.f32 %v1927, %v1995
      %v2028 = vadd.f32 %v1928, %v1996
      %v2029 = vadd.f32 %v1929, %v1997
      %v2030 = vadd.f32 %v1930, %v1998
      %s2031 = scalar_lea.vmem [#allocation2], 48
      %v2032 = vld [vmem:[%s2031] sm:$0xff]
      %v2033 = vld [vmem:[%s2031 + $0x8] sm:$0xff]
      %v2034 = vld [vmem:[%s2031 + $0x18] sm:$0xff]
      %v2035 = vld [vmem:[%s2031 + $0x20] sm:$0xff]
      %v2036 = vld [vmem:[%s2031 + $0x30] sm:$0xff]
      %v2037 = vld [vmem:[%s2031 + $0x38] sm:$0xff]
      %v2038 = vld [vmem:[%s2031 + $0x48] sm:$0xff]
      %v2039 = vld [vmem:[%s2031 + $0x50] sm:$0xff]
      %v2040 = vld [vmem:[%s2031 + $0x60] sm:$0xff]
      %v2041 = vld [vmem:[%s2031 + $0x68] sm:$0xff]
      %v2042 = vld [vmem:[%s2031 + $0x78] sm:$0xff]
      %v2043 = vld [vmem:[%s2031 + $0x80] sm:$0xff]
      %v2044 = vld [vmem:[%s2031 + $0x90] sm:$0xff]
      %v2045 = vld [vmem:[%s2031 + $0x98] sm:$0xff]
      %v2046 = vld [vmem:[%s2031 + $0xa8] sm:$0xff]
      %v2047 = vld [vmem:[%s2031 + $0xb0] sm:$0xff]
      %v2048 = vld [vmem:[%s2031 + $0xc0] sm:$0xff]
      %v2049 = vld [vmem:[%s2031 + $0xc8] sm:$0xff]
      %v2050 = vld [vmem:[%s2031 + $0xd8] sm:$0xff]
      %v2051 = vld [vmem:[%s2031 + $0xe0] sm:$0xff]
      %v2052 = vld [vmem:[%s2031 + $0xf0] sm:$0xff]
      %v2053 = vld [vmem:[%s2031 + $0xf8] sm:$0xff]
      %v2054 = vld [vmem:[%s2031 + $0x108] sm:$0xff]
      %v2055 = vld [vmem:[%s2031 + $0x110] sm:$0xff]
      %v2056 = vld [vmem:[%s2031 + $0x120] sm:$0xff]
      %v2057 = vld [vmem:[%s2031 + $0x128] sm:$0xff]
      %v2058 = vld [vmem:[%s2031 + $0x138] sm:$0xff]
      %v2059 = vld [vmem:[%s2031 + $0x140] sm:$0xff]
      %v2060 = vld [vmem:[%s2031 + $0x150] sm:$0xff]
      %v2061 = vld [vmem:[%s2031 + $0x158] sm:$0xff]
      %v2062 = vld [vmem:[%s2031 + $0x168] sm:$0xff]
      %v2063 = vld [vmem:[%s2031 + $0x170] sm:$0xff]
      %v2064 = vlaneseq
      %v2065 = vshrl.u32 %v2064, 7
      %v2066 = vsub.s32 2, %v2065
      %v2067 = vrot.slane %v463, %v2066
      %v2068 = vmul.f32 %v2032, %v2067
      %v2069 = vmul.f32 %v2033, %v2067
      %v2070 = vmul.f32 %v2034, %v2067
      %v2071 = vmul.f32 %v2035, %v2067
      %v2072 = vmul.f32 %v2036, %v2067
      %v2073 = vmul.f32 %v2037, %v2067
      %v2074 = vmul.f32 %v2038, %v2067
      %v2075 = vmul.f32 %v2039, %v2067
      %v2076 = vmul.f32 %v2040, %v2067
      %v2077 = vmul.f32 %v2041, %v2067
      %v2078 = vmul.f32 %v2042, %v2067
      %v2079 = vmul.f32 %v2043, %v2067
      %v2080 = vmul.f32 %v2044, %v2067
      %v2081 = vmul.f32 %v2045, %v2067
      %v2082 = vmul.f32 %v2046, %v2067
      %v2083 = vmul.f32 %v2047, %v2067
      %v2084 = vmul.f32 %v2048, %v2067
      %v2085 = vmul.f32 %v2049, %v2067
      %v2086 = vmul.f32 %v2050, %v2067
      %v2087 = vmul.f32 %v2051, %v2067
      %v2088 = vmul.f32 %v2052, %v2067
      %v2089 = vmul.f32 %v2053, %v2067
      %v2090 = vmul.f32 %v2054, %v2067
      %v2091 = vmul.f32 %v2055, %v2067
      %v2092 = vmul.f32 %v2056, %v2067
      %v2093 = vmul.f32 %v2057, %v2067
      %v2094 = vmul.f32 %v2058, %v2067
      %v2095 = vmul.f32 %v2059, %v2067
      %v2096 = vmul.f32 %v2060, %v2067
      %v2097 = vmul.f32 %v2061, %v2067
      %v2098 = vmul.f32 %v2062, %v2067
      %v2099 = vmul.f32 %v2063, %v2067
      %v2100 = vadd.f32 %v1999, %v2068
      %v2101 = vadd.f32 %v2000, %v2069
      %v2102 = vadd.f32 %v2001, %v2070
      %v2103 = vadd.f32 %v2002, %v2071
      %v2104 = vadd.f32 %v2003, %v2072
      %v2105 = vadd.f32 %v2004, %v2073
      %v2106 = vadd.f32 %v2005, %v2074
      %v2107 = vadd.f32 %v2006, %v2075
      %v2108 = vadd.f32 %v2007, %v2076
      %v2109 = vadd.f32 %v2008, %v2077
      %v2110 = vadd.f32 %v2009, %v2078
      %v2111 = vadd.f32 %v2010, %v2079
      %v2112 = vadd.f32 %v2011, %v2080
      %v2113 = vadd.f32 %v2012, %v2081
      %v2114 = vadd.f32 %v2013, %v2082
      %v2115 = vadd.f32 %v2014, %v2083
      %v2116 = vadd.f32 %v2015, %v2084
      %v2117 = vadd.f32 %v2016, %v2085
      %v2118 = vadd.f32 %v2017, %v2086
      %v2119 = vadd.f32 %v2018, %v2087
      %v2120 = vadd.f32 %v2019, %v2088
      %v2121 = vadd.f32 %v2020, %v2089
      %v2122 = vadd.f32 %v2021, %v2090
      %v2123 = vadd.f32 %v2022, %v2091
      %v2124 = vadd.f32 %v2023, %v2092
      %v2125 = vadd.f32 %v2024, %v2093
      %v2126 = vadd.f32 %v2025, %v2094
      %v2127 = vadd.f32 %v2026, %v2095
      %v2128 = vadd.f32 %v2027, %v2096
      %v2129 = vadd.f32 %v2028, %v2097
      %v2130 = vadd.f32 %v2029, %v2098
      %v2131 = vadd.f32 %v2030, %v2099
      %v2132 = vld [vmem:[%s2031 + $0x1] sm:$0xff]
      %v2133 = vld [vmem:[%s2031 + $0x9] sm:$0xff]
      %v2134 = vld [vmem:[%s2031 + $0x19] sm:$0xff]
      %v2135 = vld [vmem:[%s2031 + $0x21] sm:$0xff]
      %v2136 = vld [vmem:[%s2031 + $0x31] sm:$0xff]
      %v2137 = vld [vmem:[%s2031 + $0x39] sm:$0xff]
      %v2138 = vld [vmem:[%s2031 + $0x49] sm:$0xff]
      %v2139 = vld [vmem:[%s2031 + $0x51] sm:$0xff]
      %v2140 = vld [vmem:[%s2031 + $0x61] sm:$0xff]
      %v2141 = vld [vmem:[%s2031 + $0x69] sm:$0xff]
      %v2142 = vld [vmem:[%s2031 + $0x79] sm:$0xff]
      %v2143 = vld [vmem:[%s2031 + $0x81] sm:$0xff]
      %v2144 = vld [vmem:[%s2031 + $0x91] sm:$0xff]
      %v2145 = vld [vmem:[%s2031 + $0x99] sm:$0xff]
      %v2146 = vld [vmem:[%s2031 + $0xa9] sm:$0xff]
      %v2147 = vld [vmem:[%s2031 + $0xb1] sm:$0xff]
      %v2148 = vld [vmem:[%s2031 + $0xc1] sm:$0xff]
      %v2149 = vld [vmem:[%s2031 + $0xc9] sm:$0xff]
      %v2150 = vld [vmem:[%s2031 + $0xd9] sm:$0xff]
      %v2151 = vld [vmem:[%s2031 + $0xe1] sm:$0xff]
      %v2152 = vld [vmem:[%s2031 + $0xf1] sm:$0xff]
      %v2153 = vld [vmem:[%s2031 + $0xf9] sm:$0xff]
      %v2154 = vld [vmem:[%s2031 + $0x109] sm:$0xff]
      %v2155 = vld [vmem:[%s2031 + $0x111] sm:$0xff]
      %v2156 = vld [vmem:[%s2031 + $0x121] sm:$0xff]
      %v2157 = vld [vmem:[%s2031 + $0x129] sm:$0xff]
      %v2158 = vld [vmem:[%s2031 + $0x139] sm:$0xff]
      %v2159 = vld [vmem:[%s2031 + $0x141] sm:$0xff]
      %v2160 = vld [vmem:[%s2031 + $0x151] sm:$0xff]
      %v2161 = vld [vmem:[%s2031 + $0x159] sm:$0xff]
      %v2162 = vld [vmem:[%s2031 + $0x169] sm:$0xff]
      %v2163 = vld [vmem:[%s2031 + $0x171] sm:$0xff]
      %v2164 = vlaneseq
      %v2165 = vshrl.u32 %v2164, 7
      %v2166 = vsub.s32 3, %v2165
      %v2167 = vrot.slane %v463, %v2166
      %v2168 = vmul.f32 %v2132, %v2167
      %v2169 = vmul.f32 %v2133, %v2167
      %v2170 = vmul.f32 %v2134, %v2167
      %v2171 = vmul.f32 %v2135, %v2167
      %v2172 = vmul.f32 %v2136, %v2167
      %v2173 = vmul.f32 %v2137, %v2167
      %v2174 = vmul.f32 %v2138, %v2167
      %v2175 = vmul.f32 %v2139, %v2167
      %v2176 = vmul.f32 %v2140, %v2167
      %v2177 = vmul.f32 %v2141, %v2167
      %v2178 = vmul.f32 %v2142, %v2167
      %v2179 = vmul.f32 %v2143, %v2167
      %v2180 = vmul.f32 %v2144, %v2167
      %v2181 = vmul.f32 %v2145, %v2167
      %v2182 = vmul.f32 %v2146, %v2167
      %v2183 = vmul.f32 %v2147, %v2167
      %v2184 = vmul.f32 %v2148, %v2167
      %v2185 = vmul.f32 %v2149, %v2167
      %v2186 = vmul.f32 %v2150, %v2167
      %v2187 = vmul.f32 %v2151, %v2167
      %v2188 = vmul.f32 %v2152, %v2167
      %v2189 = vmul.f32 %v2153, %v2167
      %v2190 = vmul.f32 %v2154, %v2167
      %v2191 = vmul.f32 %v2155, %v2167
      %v2192 = vmul.f32 %v2156, %v2167
      %v2193 = vmul.f32 %v2157, %v2167
      %v2194 = vmul.f32 %v2158, %v2167
      %v2195 = vmul.f32 %v2159, %v2167
      %v2196 = vmul.f32 %v2160, %v2167
      %v2197 = vmul.f32 %v2161, %v2167
      %v2198 = vmul.f32 %v2162, %v2167
      %v2199 = vmul.f32 %v2163, %v2167
      %v2200 = vadd.f32 %v2100, %v2168
      %v2201 = vadd.f32 %v2101, %v2169
      %v2202 = vadd.f32 %v2102, %v2170
      %v2203 = vadd.f32 %v2103, %v2171
      %v2204 = vadd.f32 %v2104, %v2172
      %v2205 = vadd.f32 %v2105, %v2173
      %v2206 = vadd.f32 %v2106, %v2174
      %v2207 = vadd.f32 %v2107, %v2175
      %v2208 = vadd.f32 %v2108, %v2176
      %v2209 = vadd.f32 %v2109, %v2177
      %v2210 = vadd.f32 %v2110, %v2178
      %v2211 = vadd.f32 %v2111, %v2179
      %v2212 = vadd.f32 %v2112, %v2180
      %v2213 = vadd.f32 %v2113, %v2181
      %v2214 = vadd.f32 %v2114, %v2182
      %v2215 = vadd.f32 %v2115, %v2183
      %v2216 = vadd.f32 %v2116, %v2184
      %v2217 = vadd.f32 %v2117, %v2185
      %v2218 = vadd.f32 %v2118, %v2186
      %v2219 = vadd.f32 %v2119, %v2187
      %v2220 = vadd.f32 %v2120, %v2188
      %v2221 = vadd.f32 %v2121, %v2189
      %v2222 = vadd.f32 %v2122, %v2190
      %v2223 = vadd.f32 %v2123, %v2191
      %v2224 = vadd.f32 %v2124, %v2192
      %v2225 = vadd.f32 %v2125, %v2193
      %v2226 = vadd.f32 %v2126, %v2194
      %v2227 = vadd.f32 %v2127, %v2195
      %v2228 = vadd.f32 %v2128, %v2196
      %v2229 = vadd.f32 %v2129, %v2197
      %v2230 = vadd.f32 %v2130, %v2198
      %v2231 = vadd.f32 %v2131, %v2199
      %v2232 = vadd.f32 %v2200, %v839
      %v2233 = vadd.f32 %v2201, %v839
      %v2234 = vadd.f32 %v2202, %v839
      %v2235 = vadd.f32 %v2203, %v839
      %v2236 = vadd.f32 %v2204, %v839
      %v2237 = vadd.f32 %v2205, %v839
      %v2238 = vadd.f32 %v2206, %v839
      %v2239 = vadd.f32 %v2207, %v839
      %v2240 = vadd.f32 %v2208, %v839
      %v2241 = vadd.f32 %v2209, %v839
      %v2242 = vadd.f32 %v2210, %v839
      %v2243 = vadd.f32 %v2211, %v839
      %v2244 = vadd.f32 %v2212, %v839
      %v2245 = vadd.f32 %v2213, %v839
      %v2246 = vadd.f32 %v2214, %v839
      %v2247 = vadd.f32 %v2215, %v839
      %v2248 = vadd.f32 %v2216, %v839
      %v2249 = vadd.f32 %v2217, %v839
      %v2250 = vadd.f32 %v2218, %v839
      %v2251 = vadd.f32 %v2219, %v839
      %v2252 = vadd.f32 %v2220, %v839
      %v2253 = vadd.f32 %v2221, %v839
      %v2254 = vadd.f32 %v2222, %v839
      %v2255 = vadd.f32 %v2223, %v839
      %v2256 = vadd.f32 %v2224, %v839
      %v2257 = vadd.f32 %v2225, %v839
      %v2258 = vadd.f32 %v2226, %v839
      %v2259 = vadd.f32 %v2227, %v839
      %v2260 = vadd.f32 %v2228, %v839
      %v2261 = vadd.f32 %v2229, %v839
      %v2262 = vadd.f32 %v2230, %v839
      %v2263 = vadd.f32 %v2231, %v839
      %v2264 = vmax.f32 %v2232, 0.0
      %v2265 = vmax.f32 %v2233, 0.0
      %v2266 = vmax.f32 %v2234, 0.0
      %v2267 = vmax.f32 %v2235, 0.0
      %v2268 = vmax.f32 %v2236, 0.0
      %v2269 = vmax.f32 %v2237, 0.0
      %v2270 = vmax.f32 %v2238, 0.0
      %v2271 = vmax.f32 %v2239, 0.0
      %v2272 = vmax.f32 %v2240, 0.0
      %v2273 = vmax.f32 %v2241, 0.0
      %v2274 = vmax.f32 %v2242, 0.0
      %v2275 = vmax.f32 %v2243, 0.0
      %v2276 = vmax.f32 %v2244, 0.0
      %v2277 = vmax.f32 %v2245, 0.0
      %v2278 = vmax.f32 %v2246, 0.0
      %v2279 = vmax.f32 %v2247, 0.0
      %v2280 = vmax.f32 %v2248, 0.0
      %v2281 = vmax.f32 %v2249, 0.0
      %v2282 = vmax.f32 %v2250, 0.0
      %v2283 = vmax.f32 %v2251, 0.0
      %v2284 = vmax.f32 %v2252, 0.0
      %v2285 = vmax.f32 %v2253, 0.0
      %v2286 = vmax.f32 %v2254, 0.0
      %v2287 = vmax.f32 %v2255, 0.0
      %v2288 = vmax.f32 %v2256, 0.0
      %v2289 = vmax.f32 %v2257, 0.0
      %v2290 = vmax.f32 %v2258, 0.0
      %v2291 = vmax.f32 %v2259, 0.0
      %v2292 = vmax.f32 %v2260, 0.0
      %v2293 = vmax.f32 %v2261, 0.0
      %v2294 = vmax.f32 %v2262, 0.0
      %v2295 = vmax.f32 %v2263, 0.0
      %v2296 = vpack.c.bf16 %v2265, %v2264
      %v2297 = vpack.c.bf16 %v2267, %v2266
      %v2298 = vpack.c.bf16 %v2269, %v2268
      %v2299 = vpack.c.bf16 %v2271, %v2270
      %v2300 = vpack.c.bf16 %v2273, %v2272
      %v2301 = vpack.c.bf16 %v2275, %v2274
      %v2302 = vpack.c.bf16 %v2277, %v2276
      %v2303 = vpack.c.bf16 %v2279, %v2278
      %v2304 = vpack.c.bf16 %v2281, %v2280
      %v2305 = vpack.c.bf16 %v2283, %v2282
      %v2306 = vpack.c.bf16 %v2285, %v2284
      %v2307 = vpack.c.bf16 %v2287, %v2286
      %v2308 = vpack.c.bf16 %v2289, %v2288
      %v2309 = vpack.c.bf16 %v2291, %v2290
      %v2310 = vpack.c.bf16 %v2293, %v2292
      %v2311 = vpack.c.bf16 %v2295, %v2294
      %v2313 = vsel %vm331, %v2296, 0
      %v2316 = vsel %vm331, %v2297, 0
      %v2319 = vsel %vm331, %v2298, 0
      %v2322 = vsel %vm331, %v2299, 0
      %v2325 = vsel %vm331, %v2300, 0
      %v2328 = vsel %vm331, %v2301, 0
      %v2331 = vsel %vm331, %v2302, 0
      %v2334 = vsel %vm331, %v2303, 0
      %v2337 = vsel %vm331, %v2304, 0
      %v2340 = vsel %vm331, %v2305, 0
      %v2343 = vsel %vm331, %v2306, 0
      %v2346 = vsel %vm331, %v2307, 0
      %v2349 = vsel %vm331, %v2308, 0
      %v2352 = vsel %vm331, %v2309, 0
      %v2355 = vsel %vm331, %v2310, 0
      %v2358 = vsel %vm331, %v2311, 0
      %2360 = vmatprep.subr.bf16.mxu0 0
      %2361 = vmatpush1.bf16.msra.mxu0 %v977
      %2362 = vmatprep.subr.bf16.mxu0 0
      %2363 = vmatpush1.bf16.msra.mxu0 0
      %2364 = vmatprep.subr.bf16.mxu0 0
      %2365 = vmatpush1.bf16.msra.mxu0 0
      %2366 = vmatprep.subr.bf16.mxu0 0
      %2367 = vmatpush1.bf16.msra.mxu0 0
      %2368 = vmatprep.subr.bf16.mxu0 0
      %2369 = vmatpush1.bf16.msra.mxu0 0
      %2370 = vmatprep.subr.bf16.mxu0 0
      %2371 = vmatpush1.bf16.msra.mxu0 0
      %2372 = vmatprep.subr.bf16.mxu0 0
      %2373 = vmatpush1.bf16.msra.mxu0 0
      %2374 = vmatprep.subr.bf16.mxu0 0
      %2375 = vmatpush1.bf16.msra.mxu0 0
      %2376 = vmatprep.subr.bf16.mxu0 0
      %2377 = vmatpush1.bf16.msra.mxu0 0
      %2378 = vmatprep.subr.bf16.mxu0 0
      %2379 = vmatpush1.bf16.msra.mxu0 0
      %2380 = vmatprep.subr.bf16.mxu0 0
      %2381 = vmatpush1.bf16.msra.mxu0 0
      %2382 = vmatprep.subr.bf16.mxu0 0
      %2383 = vmatpush1.bf16.msra.mxu0 0
      %2384 = vmatprep.subr.bf16.mxu0 0
      %2385 = vmatpush1.bf16.msra.mxu0 0
      %2386 = vmatprep.subr.bf16.mxu0 0
      %2387 = vmatpush1.bf16.msra.mxu0 0
      %2388 = vmatprep.subr.bf16.mxu0 0
      %2389 = vmatpush1.bf16.msra.mxu0 0
      %2390 = vmatprep.subr.bf16.mxu0 0
      %2391 = vmatpush1.bf16.msra.mxu0 0
      %2392 = vmatprep.mubr.bf16.mxu0 0
      %2393 = vmatmul.mubr.bf16.gmra.mrb[0].mxu0 %v2313
      %v2394 = vpop.f32.mrb[0].mxu0
      %v2395 = vadd.f32 %v925, %v2394
      %v2396 = vpop.f32.mrb[0].mxu0
      %v2397 = vpop.f32.mrb[0].mxu0
      %v2398 = vadd.f32 %v925, %v2397
      %v2399 = vpop.f32.mrb[0].mxu0
      %2400 = vmatprep.mubr.bf16.mxu0 0
      %2401 = vmatmul.mubr.bf16.gmra.mrb[0].mxu0 %v2316
      %v2402 = vpop.f32.mrb[0].mxu0
      %v2403 = vadd.f32 %v925, %v2402
      %v2404 = vpop.f32.mrb[0].mxu0
      %v2405 = vpop.f32.mrb[0].mxu0
      %v2406 = vadd.f32 %v925, %v2405
      %v2407 = vpop.f32.mrb[0].mxu0
      %2408 = vmatprep.mubr.bf16.mxu0 0
      %2409 = vmatmul.mubr.bf16.gmra.mrb[0].mxu0 %v2319
      %v2410 = vpop.f32.mrb[0].mxu0
      %v2411 = vadd.f32 %v925, %v2410
      %v2412 = vpop.f32.mrb[0].mxu0
      %v2413 = vpop.f32.mrb[0].mxu0
      %v2414 = vadd.f32 %v925, %v2413
      %v2415 = vpop.f32.mrb[0].mxu0
      %2416 = vmatprep.mubr.bf16.mxu0 0
      %2417 = vmatmul.mubr.bf16.gmra.mrb[0].mxu0 %v2322
      %v2418 = vpop.f32.mrb[0].mxu0
      %v2419 = vadd.f32 %v925, %v2418
      %v2420 = vpop.f32.mrb[0].mxu0
      %v2421 = vpop.f32.mrb[0].mxu0
      %v2422 = vadd.f32 %v925, %v2421
      %v2423 = vpop.f32.mrb[0].mxu0
      %2424 = vmatprep.mubr.bf16.mxu0 0
      %2425 = vmatmul.mubr.bf16.gmra.mrb[0].mxu0 %v2325
      %v2426 = vpop.f32.mrb[0].mxu0
      %v2427 = vadd.f32 %v925, %v2426
      %v2428 = vpop.f32.mrb[0].mxu0
      %v2429 = vpop.f32.mrb[0].mxu0
      %v2430 = vadd.f32 %v925, %v2429
      %v2431 = vpop.f32.mrb[0].mxu0
      %2432 = vmatprep.mubr.bf16.mxu0 0
      %2433 = vmatmul.mubr.bf16.gmra.mrb[0].mxu0 %v2328
      %v2434 = vpop.f32.mrb[0].mxu0
      %v2435 = vadd.f32 %v925, %v2434
      %v2436 = vpop.f32.mrb[0].mxu0
      %v2437 = vpop.f32.mrb[0].mxu0
      %v2438 = vadd.f32 %v925, %v2437
      %v2439 = vpop.f32.mrb[0].mxu0
      %2440 = vmatprep.mubr.bf16.mxu0 0
      %2441 = vmatmul.mubr.bf16.gmra.mrb[0].mxu0 %v2331
      %v2442 = vpop.f32.mrb[0].mxu0
      %v2443 = vadd.f32 %v925, %v2442
      %v2444 = vpop.f32.mrb[0].mxu0
      %v2445 = vpop.f32.mrb[0].mxu0
      %v2446 = vadd.f32 %v925, %v2445
      %v2447 = vpop.f32.mrb[0].mxu0
      %2448 = vmatprep.mubr.bf16.mxu0 0
      %2449 = vmatmul.mubr.bf16.gmra.mrb[0].mxu0 %v2334
      %v2450 = vpop.f32.mrb[0].mxu0
      %v2451 = vadd.f32 %v925, %v2450
      %v2452 = vpop.f32.mrb[0].mxu0
      %v2453 = vpop.f32.mrb[0].mxu0
      %v2454 = vadd.f32 %v925, %v2453
      %v2455 = vpop.f32.mrb[0].mxu0
      %2456 = vmatprep.mubr.bf16.mxu0 0
      %2457 = vmatmul.mubr.bf16.gmra.mrb[0].mxu0 %v2337
      %v2458 = vpop.f32.mrb[0].mxu0
      %v2459 = vadd.f32 %v925, %v2458
      %v2460 = vpop.f32.mrb[0].mxu0
      %v2461 = vpop.f32.mrb[0].mxu0
      %v2462 = vadd.f32 %v925, %v2461
      %v2463 = vpop.f32.mrb[0].mxu0
      %2464 = vmatprep.mubr.bf16.mxu0 0
      %2465 = vmatmul.mubr.bf16.gmra.mrb[0].mxu0 %v2340
      %v2466 = vpop.f32.mrb[0].mxu0
      %v2467 = vadd.f32 %v925, %v2466
      %v2468 = vpop.f32.mrb[0].mxu0
      %v2469 = vpop.f32.mrb[0].mxu0
      %v2470 = vadd.f32 %v925, %v2469
      %v2471 = vpop.f32.mrb[0].mxu0
      %2472 = vmatprep.mubr.bf16.mxu0 0
      %2473 = vmatmul.mubr.bf16.gmra.mrb[0].mxu0 %v2343
      %v2474 = vpop.f32.mrb[0].mxu0
      %v2475 = vadd.f32 %v925, %v2474
      %v2476 = vpop.f32.mrb[0].mxu0
      %v2477 = vpop.f32.mrb[0].mxu0
      %v2478 = vadd.f32 %v925, %v2477
      %v2479 = vpop.f32.mrb[0].mxu0
      %2480 = vmatprep.mubr.bf16.mxu0 0
      %2481 = vmatmul.mubr.bf16.gmra.mrb[0].mxu0 %v2346
      %v2482 = vpop.f32.mrb[0].mxu0
      %v2483 = vadd.f32 %v925, %v2482
      %v2484 = vpop.f32.mrb[0].mxu0
      %v2485 = vpop.f32.mrb[0].mxu0
      %v2486 = vadd.f32 %v925, %v2485
      %v2487 = vpop.f32.mrb[0].mxu0
      %2488 = vmatprep.mubr.bf16.mxu0 0
      %2489 = vmatmul.mubr.bf16.gmra.mrb[0].mxu0 %v2349
      %v2490 = vpop.f32.mrb[0].mxu0
      %v2491 = vadd.f32 %v925, %v2490
      %v2492 = vpop.f32.mrb[0].mxu0
      %v2493 = vpop.f32.mrb[0].mxu0
      %v2494 = vadd.f32 %v925, %v2493
      %v2495 = vpop.f32.mrb[0].mxu0
      %2496 = vmatprep.mubr.bf16.mxu0 0
      %2497 = vmatmul.mubr.bf16.gmra.mrb[0].mxu0 %v2352
      %v2498 = vpop.f32.mrb[0].mxu0
      %v2499 = vadd.f32 %v925, %v2498
      %v2500 = vpop.f32.mrb[0].mxu0
      %v2501 = vpop.f32.mrb[0].mxu0
      %v2502 = vadd.f32 %v925, %v2501
      %v2503 = vpop.f32.mrb[0].mxu0
      %2504 = vmatprep.mubr.bf16.mxu0 0
      %2505 = vmatmul.mubr.bf16.gmra.mrb[0].mxu0 %v2355
      %v2506 = vpop.f32.mrb[0].mxu0
      %v2507 = vadd.f32 %v925, %v2506
      %v2508 = vpop.f32.mrb[0].mxu0
      %v2509 = vpop.f32.mrb[0].mxu0
      %v2510 = vadd.f32 %v925, %v2509
      %v2511 = vpop.f32.mrb[0].mxu0
      %2512 = vmatprep.mubr.bf16.mxu0 0
      %2513 = vmatmul.mubr.bf16.gmra.mrb[0].mxu0 %v2358
      %v2514 = vpop.f32.mrb[0].mxu0
      %v2515 = vadd.f32 %v925, %v2514
      %v2516 = vpop.f32.mrb[0].mxu0
      %v2517 = vpop.f32.mrb[0].mxu0
      %v2518 = vadd.f32 %v925, %v2517
      %v2519 = vpop.f32.mrb[0].mxu0
      %2520 = vdwg.mxu0
      %s2521 = scalar_lea.vmem %s328, 512
      %2522 = vst.msk [vmem:[%s2521] sm:$0xff] %vm1140, %v2395
      %2523 = vst.msk [vmem:[%s2521 + $0x8] sm:$0xff] %vm1140, %v2398
      %2524 = vst.msk [vmem:[%s2521 + $0x10] sm:$0xff] %vm1140, %v2403
      %2525 = vst.msk [vmem:[%s2521 + $0x18] sm:$0xff] %vm1140, %v2406
      %2526 = vst.msk [vmem:[%s2521 + $0x20] sm:$0xff] %vm1140, %v2411
      %2527 = vst.msk [vmem:[%s2521 + $0x28] sm:$0xff] %vm1140, %v2414
      %2528 = vst.msk [vmem:[%s2521 + $0x30] sm:$0xff] %vm1140, %v2419
      %2529 = vst.msk [vmem:[%s2521 + $0x38] sm:$0xff] %vm1140, %v2422
      %2530 = vst.msk [vmem:[%s2521 + $0x40] sm:$0xff] %vm1140, %v2427
      %2531 = vst.msk [vmem:[%s2521 + $0x48] sm:$0xff] %vm1140, %v2430
      %2532 = vst.msk [vmem:[%s2521 + $0x50] sm:$0xff] %vm1140, %v2435
      %2533 = vst.msk [vmem:[%s2521 + $0x58] sm:$0xff] %vm1140, %v2438
      %2534 = vst.msk [vmem:[%s2521 + $0x60] sm:$0xff] %vm1140, %v2443
      %2535 = vst.msk [vmem:[%s2521 + $0x68] sm:$0xff] %vm1140, %v2446
      %2536 = vst.msk [vmem:[%s2521 + $0x70] sm:$0xff] %vm1140, %v2451
      %2537 = vst.msk [vmem:[%s2521 + $0x78] sm:$0xff] %vm1140, %v2454
      %2538 = vst.msk [vmem:[%s2521 + $0x80] sm:$0xff] %vm1140, %v2459
      %2539 = vst.msk [vmem:[%s2521 + $0x88] sm:$0xff] %vm1140, %v2462
      %2540 = vst.msk [vmem:[%s2521 + $0x90] sm:$0xff] %vm1140, %v2467
      %2541 = vst.msk [vmem:[%s2521 + $0x98] sm:$0xff] %vm1140, %v2470
      %2542 = vst.msk [vmem:[%s2521 + $0xa0] sm:$0xff] %vm1140, %v2475
      %2543 = vst.msk [vmem:[%s2521 + $0xa8] sm:$0xff] %vm1140, %v2478
      %2544 = vst.msk [vmem:[%s2521 + $0xb0] sm:$0xff] %vm1140, %v2483
      %2545 = vst.msk [vmem:[%s2521 + $0xb8] sm:$0xff] %vm1140, %v2486
      %2546 = vst.msk [vmem:[%s2521 + $0xc0] sm:$0xff] %vm1140, %v2491
      %2547 = vst.msk [vmem:[%s2521 + $0xc8] sm:$0xff] %vm1140, %v2494
      %2548 = vst.msk [vmem:[%s2521 + $0xd0] sm:$0xff] %vm1140, %v2499
      %2549 = vst.msk [vmem:[%s2521 + $0xd8] sm:$0xff] %vm1140, %v2502
      %2550 = vst.msk [vmem:[%s2521 + $0xe0] sm:$0xff] %vm1140, %v2507
      %2551 = vst.msk [vmem:[%s2521 + $0xe8] sm:$0xff] %vm1140, %v2510
      %2552 = vst.msk [vmem:[%s2521 + $0xf0] sm:$0xff] %vm1140, %v2515
      %2553 = vst.msk [vmem:[%s2521 + $0xf8] sm:$0xff] %vm1140, %v2518
      %v2554 = vld [vmem:[%s429 + $0x1] sm:$0xff]
      %v2555 = vld [vmem:[%s429 + $0x9] sm:$0xff]
      %v2556 = vld [vmem:[%s429 + $0x19] sm:$0xff]
      %v2557 = vld [vmem:[%s429 + $0x21] sm:$0xff]
      %v2558 = vld [vmem:[%s429 + $0x31] sm:$0xff]
      %v2559 = vld [vmem:[%s429 + $0x39] sm:$0xff]
      %v2560 = vld [vmem:[%s429 + $0x49] sm:$0xff]
      %v2561 = vld [vmem:[%s429 + $0x51] sm:$0xff]
      %v2562 = vld [vmem:[%s429 + $0x61] sm:$0xff]
      %v2563 = vld [vmem:[%s429 + $0x69] sm:$0xff]
      %v2564 = vld [vmem:[%s429 + $0x79] sm:$0xff]
      %v2565 = vld [vmem:[%s429 + $0x81] sm:$0xff]
      %v2566 = vld [vmem:[%s429 + $0x91] sm:$0xff]
      %v2567 = vld [vmem:[%s429 + $0x99] sm:$0xff]
      %v2568 = vld [vmem:[%s429 + $0xa9] sm:$0xff]
      %v2569 = vld [vmem:[%s429 + $0xb1] sm:$0xff]
      %v2570 = vld [vmem:[%s429 + $0xc1] sm:$0xff]
      %v2571 = vld [vmem:[%s429 + $0xc9] sm:$0xff]
      %v2572 = vld [vmem:[%s429 + $0xd9] sm:$0xff]
      %v2573 = vld [vmem:[%s429 + $0xe1] sm:$0xff]
      %v2574 = vld [vmem:[%s429 + $0xf1] sm:$0xff]
      %v2575 = vld [vmem:[%s429 + $0xf9] sm:$0xff]
      %v2576 = vld [vmem:[%s429 + $0x109] sm:$0xff]
      %v2577 = vld [vmem:[%s429 + $0x111] sm:$0xff]
      %v2578 = vld [vmem:[%s429 + $0x121] sm:$0xff]
      %v2579 = vld [vmem:[%s429 + $0x129] sm:$0xff]
      %v2580 = vld [vmem:[%s429 + $0x139] sm:$0xff]
      %v2581 = vld [vmem:[%s429 + $0x141] sm:$0xff]
      %v2582 = vld [vmem:[%s429 + $0x151] sm:$0xff]
      %v2583 = vld [vmem:[%s429 + $0x159] sm:$0xff]
      %v2584 = vld [vmem:[%s429 + $0x169] sm:$0xff]
      %v2585 = vld [vmem:[%s429 + $0x171] sm:$0xff]
      %v2586 = vlaneseq
      %v2587 = vshrl.u32 %v2586, 7
      %v2588 = vsub.s32 4, %v2587
      %v2589 = vrot.slane %v463, %v2588
      %v2590 = vmul.f32 %v2554, %v2589
      %v2591 = vmul.f32 %v2555, %v2589
      %v2592 = vmul.f32 %v2556, %v2589
      %v2593 = vmul.f32 %v2557, %v2589
      %v2594 = vmul.f32 %v2558, %v2589
      %v2595 = vmul.f32 %v2559, %v2589
      %v2596 = vmul.f32 %v2560, %v2589
      %v2597 = vmul.f32 %v2561, %v2589
      %v2598 = vmul.f32 %v2562, %v2589
      %v2599 = vmul.f32 %v2563, %v2589
      %v2600 = vmul.f32 %v2564, %v2589
      %v2601 = vmul.f32 %v2565, %v2589
      %v2602 = vmul.f32 %v2566, %v2589
      %v2603 = vmul.f32 %v2567, %v2589
      %v2604 = vmul.f32 %v2568, %v2589
      %v2605 = vmul.f32 %v2569, %v2589
      %v2606 = vmul.f32 %v2570, %v2589
      %v2607 = vmul.f32 %v2571, %v2589
      %v2608 = vmul.f32 %v2572, %v2589
      %v2609 = vmul.f32 %v2573, %v2589
      %v2610 = vmul.f32 %v2574, %v2589
      %v2611 = vmul.f32 %v2575, %v2589
      %v2612 = vmul.f32 %v2576, %v2589
      %v2613 = vmul.f32 %v2577, %v2589
      %v2614 = vmul.f32 %v2578, %v2589
      %v2615 = vmul.f32 %v2579, %v2589
      %v2616 = vmul.f32 %v2580, %v2589
      %v2617 = vmul.f32 %v2581, %v2589
      %v2618 = vmul.f32 %v2582, %v2589
      %v2619 = vmul.f32 %v2583, %v2589
      %v2620 = vmul.f32 %v2584, %v2589
      %v2621 = vmul.f32 %v2585, %v2589
      %v2622 = vld [vmem:[%s429 + $0x2] sm:$0xff]
      %v2623 = vld [vmem:[%s429 + $0xa] sm:$0xff]
      %v2624 = vld [vmem:[%s429 + $0x1a] sm:$0xff]
      %v2625 = vld [vmem:[%s429 + $0x22] sm:$0xff]
      %v2626 = vld [vmem:[%s429 + $0x32] sm:$0xff]
      %v2627 = vld [vmem:[%s429 + $0x3a] sm:$0xff]
      %v2628 = vld [vmem:[%s429 + $0x4a] sm:$0xff]
      %v2629 = vld [vmem:[%s429 + $0x52] sm:$0xff]
      %v2630 = vld [vmem:[%s429 + $0x62] sm:$0xff]
      %v2631 = vld [vmem:[%s429 + $0x6a] sm:$0xff]
      %v2632 = vld [vmem:[%s429 + $0x7a] sm:$0xff]
      %v2633 = vld [vmem:[%s429 + $0x82] sm:$0xff]
      %v2634 = vld [vmem:[%s429 + $0x92] sm:$0xff]
      %v2635 = vld [vmem:[%s429 + $0x9a] sm:$0xff]
      %v2636 = vld [vmem:[%s429 + $0xaa] sm:$0xff]
      %v2637 = vld [vmem:[%s429 + $0xb2] sm:$0xff]
      %v2638 = vld [vmem:[%s429 + $0xc2] sm:$0xff]
      %v2639 = vld [vmem:[%s429 + $0xca] sm:$0xff]
      %v2640 = vld [vmem:[%s429 + $0xda] sm:$0xff]
      %v2641 = vld [vmem:[%s429 + $0xe2] sm:$0xff]
      %v2642 = vld [vmem:[%s429 + $0xf2] sm:$0xff]
      %v2643 = vld [vmem:[%s429 + $0xfa] sm:$0xff]
      %v2644 = vld [vmem:[%s429 + $0x10a] sm:$0xff]
      %v2645 = vld [vmem:[%s429 + $0x112] sm:$0xff]
      %v2646 = vld [vmem:[%s429 + $0x122] sm:$0xff]
      %v2647 = vld [vmem:[%s429 + $0x12a] sm:$0xff]
      %v2648 = vld [vmem:[%s429 + $0x13a] sm:$0xff]
      %v2649 = vld [vmem:[%s429 + $0x142] sm:$0xff]
      %v2650 = vld [vmem:[%s429 + $0x152] sm:$0xff]
      %v2651 = vld [vmem:[%s429 + $0x15a] sm:$0xff]
      %v2652 = vld [vmem:[%s429 + $0x16a] sm:$0xff]
      %v2653 = vld [vmem:[%s429 + $0x172] sm:$0xff]
      %v2654 = vlaneseq
      %v2655 = vshrl.u32 %v2654, 7
      %v2656 = vsub.s32 5, %v2655
      %v2657 = vrot.slane %v463, %v2656
      %v2658 = vmul.f32 %v2622, %v2657
      %v2659 = vmul.f32 %v2623, %v2657
      %v2660 = vmul.f32 %v2624, %v2657
      %v2661 = vmul.f32 %v2625, %v2657
      %v2662 = vmul.f32 %v2626, %v2657
      %v2663 = vmul.f32 %v2627, %v2657
      %v2664 = vmul.f32 %v2628, %v2657
      %v2665 = vmul.f32 %v2629, %v2657
      %v2666 = vmul.f32 %v2630, %v2657
      %v2667 = vmul.f32 %v2631, %v2657
      %v2668 = vmul.f32 %v2632, %v2657
      %v2669 = vmul.f32 %v2633, %v2657
      %v2670 = vmul.f32 %v2634, %v2657
      %v2671 = vmul.f32 %v2635, %v2657
      %v2672 = vmul.f32 %v2636, %v2657
      %v2673 = vmul.f32 %v2637, %v2657
      %v2674 = vmul.f32 %v2638, %v2657
      %v2675 = vmul.f32 %v2639, %v2657
      %v2676 = vmul.f32 %v2640, %v2657
      %v2677 = vmul.f32 %v2641, %v2657
      %v2678 = vmul.f32 %v2642, %v2657
      %v2679 = vmul.f32 %v2643, %v2657
      %v2680 = vmul.f32 %v2644, %v2657
      %v2681 = vmul.f32 %v2645, %v2657
      %v2682 = vmul.f32 %v2646, %v2657
      %v2683 = vmul.f32 %v2647, %v2657
      %v2684 = vmul.f32 %v2648, %v2657
      %v2685 = vmul.f32 %v2649, %v2657
      %v2686 = vmul.f32 %v2650, %v2657
      %v2687 = vmul.f32 %v2651, %v2657
      %v2688 = vmul.f32 %v2652, %v2657
      %v2689 = vmul.f32 %v2653, %v2657
      %v2690 = vadd.f32 %v2590, %v2658
      %v2691 = vadd.f32 %v2591, %v2659
      %v2692 = vadd.f32 %v2592, %v2660
      %v2693 = vadd.f32 %v2593, %v2661
      %v2694 = vadd.f32 %v2594, %v2662
      %v2695 = vadd.f32 %v2595, %v2663
      %v2696 = vadd.f32 %v2596, %v2664
      %v2697 = vadd.f32 %v2597, %v2665
      %v2698 = vadd.f32 %v2598, %v2666
      %v2699 = vadd.f32 %v2599, %v2667
      %v2700 = vadd.f32 %v2600, %v2668
      %v2701 = vadd.f32 %v2601, %v2669
      %v2702 = vadd.f32 %v2602, %v2670
      %v2703 = vadd.f32 %v2603, %v2671
      %v2704 = vadd.f32 %v2604, %v2672
      %v2705 = vadd.f32 %v2605, %v2673
      %v2706 = vadd.f32 %v2606, %v2674
      %v2707 = vadd.f32 %v2607, %v2675
      %v2708 = vadd.f32 %v2608, %v2676
      %v2709 = vadd.f32 %v2609, %v2677
      %v2710 = vadd.f32 %v2610, %v2678
      %v2711 = vadd.f32 %v2611, %v2679
      %v2712 = vadd.f32 %v2612, %v2680
      %v2713 = vadd.f32 %v2613, %v2681
      %v2714 = vadd.f32 %v2614, %v2682
      %v2715 = vadd.f32 %v2615, %v2683
      %v2716 = vadd.f32 %v2616, %v2684
      %v2717 = vadd.f32 %v2617, %v2685
      %v2718 = vadd.f32 %v2618, %v2686
      %v2719 = vadd.f32 %v2619, %v2687
      %v2720 = vadd.f32 %v2620, %v2688
      %v2721 = vadd.f32 %v2621, %v2689
      %v2722 = vld [vmem:[%s2031 + $0x1] sm:$0xff]
      %v2723 = vld [vmem:[%s2031 + $0x9] sm:$0xff]
      %v2724 = vld [vmem:[%s2031 + $0x19] sm:$0xff]
      %v2725 = vld [vmem:[%s2031 + $0x21] sm:$0xff]
      %v2726 = vld [vmem:[%s2031 + $0x31] sm:$0xff]
      %v2727 = vld [vmem:[%s2031 + $0x39] sm:$0xff]
      %v2728 = vld [vmem:[%s2031 + $0x49] sm:$0xff]
      %v2729 = vld [vmem:[%s2031 + $0x51] sm:$0xff]
      %v2730 = vld [vmem:[%s2031 + $0x61] sm:$0xff]
      %v2731 = vld [vmem:[%s2031 + $0x69] sm:$0xff]
      %v2732 = vld [vmem:[%s2031 + $0x79] sm:$0xff]
      %v2733 = vld [vmem:[%s2031 + $0x81] sm:$0xff]
      %v2734 = vld [vmem:[%s2031 + $0x91] sm:$0xff]
      %v2735 = vld [vmem:[%s2031 + $0x99] sm:$0xff]
      %v2736 = vld [vmem:[%s2031 + $0xa9] sm:$0xff]
      %v2737 = vld [vmem:[%s2031 + $0xb1] sm:$0xff]
      %v2738 = vld [vmem:[%s2031 + $0xc1] sm:$0xff]
      %v2739 = vld [vmem:[%s2031 + $0xc9] sm:$0xff]
      %v2740 = vld [vmem:[%s2031 + $0xd9] sm:$0xff]
      %v2741 = vld [vmem:[%s2031 + $0xe1] sm:$0xff]
      %v2742 = vld [vmem:[%s2031 + $0xf1] sm:$0xff]
      %v2743 = vld [vmem:[%s2031 + $0xf9] sm:$0xff]
      %v2744 = vld [vmem:[%s2031 + $0x109] sm:$0xff]
      %v2745 = vld [vmem:[%s2031 + $0x111] sm:$0xff]
      %v2746 = vld [vmem:[%s2031 + $0x121] sm:$0xff]
      %v2747 = vld [vmem:[%s2031 + $0x129] sm:$0xff]
      %v2748 = vld [vmem:[%s2031 + $0x139] sm:$0xff]
      %v2749 = vld [vmem:[%s2031 + $0x141] sm:$0xff]
      %v2750 = vld [vmem:[%s2031 + $0x151] sm:$0xff]
      %v2751 = vld [vmem:[%s2031 + $0x159] sm:$0xff]
      %v2752 = vld [vmem:[%s2031 + $0x169] sm:$0xff]
      %v2753 = vld [vmem:[%s2031 + $0x171] sm:$0xff]
      %v2754 = vlaneseq
      %v2755 = vshrl.u32 %v2754, 7
      %v2756 = vsub.s32 6, %v2755
      %v2757 = vrot.slane %v463, %v2756
      %v2758 = vmul.f32 %v2722, %v2757
      %v2759 = vmul.f32 %v2723, %v2757
      %v2760 = vmul.f32 %v2724, %v2757
      %v2761 = vmul.f32 %v2725, %v2757
      %v2762 = vmul.f32 %v2726, %v2757
      %v2763 = vmul.f32 %v2727, %v2757
      %v2764 = vmul.f32 %v2728, %v2757
      %v2765 = vmul.f32 %v2729, %v2757
      %v2766 = vmul.f32 %v2730, %v2757
      %v2767 = vmul.f32 %v2731, %v2757
      %v2768 = vmul.f32 %v2732, %v2757
      %v2769 = vmul.f32 %v2733, %v2757
      %v2770 = vmul.f32 %v2734, %v2757
      %v2771 = vmul.f32 %v2735, %v2757
      %v2772 = vmul.f32 %v2736, %v2757
      %v2773 = vmul.f32 %v2737, %v2757
      %v2774 = vmul.f32 %v2738, %v2757
      %v2775 = vmul.f32 %v2739, %v2757
      %v2776 = vmul.f32 %v2740, %v2757
      %v2777 = vmul.f32 %v2741, %v2757
      %v2778 = vmul.f32 %v2742, %v2757
      %v2779 = vmul.f32 %v2743, %v2757
      %v2780 = vmul.f32 %v2744, %v2757
      %v2781 = vmul.f32 %v2745, %v2757
      %v2782 = vmul.f32 %v2746, %v2757
      %v2783 = vmul.f32 %v2747, %v2757
      %v2784 = vmul.f32 %v2748, %v2757
      %v2785 = vmul.f32 %v2749, %v2757
      %v2786 = vmul.f32 %v2750, %v2757
      %v2787 = vmul.f32 %v2751, %v2757
      %v2788 = vmul.f32 %v2752, %v2757
      %v2789 = vmul.f32 %v2753, %v2757
      %v2790 = vadd.f32 %v2690, %v2758
      %v2791 = vadd.f32 %v2691, %v2759
      %v2792 = vadd.f32 %v2692, %v2760
      %v2793 = vadd.f32 %v2693, %v2761
      %v2794 = vadd.f32 %v2694, %v2762
      %v2795 = vadd.f32 %v2695, %v2763
      %v2796 = vadd.f32 %v2696, %v2764
      %v2797 = vadd.f32 %v2697, %v2765
      %v2798 = vadd.f32 %v2698, %v2766
      %v2799 = vadd.f32 %v2699, %v2767
      %v2800 = vadd.f32 %v2700, %v2768
      %v2801 = vadd.f32 %v2701, %v2769
      %v2802 = vadd.f32 %v2702, %v2770
      %v2803 = vadd.f32 %v2703, %v2771
      %v2804 = vadd.f32 %v2704, %v2772
      %v2805 = vadd.f32 %v2705, %v2773
      %v2806 = vadd.f32 %v2706, %v2774
      %v2807 = vadd.f32 %v2707, %v2775
      %v2808 = vadd.f32 %v2708, %v2776
      %v2809 = vadd.f32 %v2709, %v2777
      %v2810 = vadd.f32 %v2710, %v2778
      %v2811 = vadd.f32 %v2711, %v2779
      %v2812 = vadd.f32 %v2712, %v2780
      %v2813 = vadd.f32 %v2713, %v2781
      %v2814 = vadd.f32 %v2714, %v2782
      %v2815 = vadd.f32 %v2715, %v2783
      %v2816 = vadd.f32 %v2716, %v2784
      %v2817 = vadd.f32 %v2717, %v2785
      %v2818 = vadd.f32 %v2718, %v2786
      %v2819 = vadd.f32 %v2719, %v2787
      %v2820 = vadd.f32 %v2720, %v2788
      %v2821 = vadd.f32 %v2721, %v2789
      %v2822 = vld [vmem:[%s2031 + $0x2] sm:$0xff]
      %v2823 = vld [vmem:[%s2031 + $0xa] sm:$0xff]
      %v2824 = vld [vmem:[%s2031 + $0x1a] sm:$0xff]
      %v2825 = vld [vmem:[%s2031 + $0x22] sm:$0xff]
      %v2826 = vld [vmem:[%s2031 + $0x32] sm:$0xff]
      %v2827 = vld [vmem:[%s2031 + $0x3a] sm:$0xff]
      %v2828 = vld [vmem:[%s2031 + $0x4a] sm:$0xff]
      %v2829 = vld [vmem:[%s2031 + $0x52] sm:$0xff]
      %v2830 = vld [vmem:[%s2031 + $0x62] sm:$0xff]
      %v2831 = vld [vmem:[%s2031 + $0x6a] sm:$0xff]
      %v2832 = vld [vmem:[%s2031 + $0x7a] sm:$0xff]
      %v2833 = vld [vmem:[%s2031 + $0x82] sm:$0xff]
      %v2834 = vld [vmem:[%s2031 + $0x92] sm:$0xff]
      %v2835 = vld [vmem:[%s2031 + $0x9a] sm:$0xff]
      %v2836 = vld [vmem:[%s2031 + $0xaa] sm:$0xff]
      %v2837 = vld [vmem:[%s2031 + $0xb2] sm:$0xff]
      %v2838 = vld [vmem:[%s2031 + $0xc2] sm:$0xff]
      %v2839 = vld [vmem:[%s2031 + $0xca] sm:$0xff]
      %v2840 = vld [vmem:[%s2031 + $0xda] sm:$0xff]
      %v2841 = vld [vmem:[%s2031 + $0xe2] sm:$0xff]
      %v2842 = vld [vmem:[%s2031 + $0xf2] sm:$0xff]
      %v2843 = vld [vmem:[%s2031 + $0xfa] sm:$0xff]
      %v2844 = vld [vmem:[%s2031 + $0x10a] sm:$0xff]
      %v2845 = vld [vmem:[%s2031 + $0x112] sm:$0xff]
      %v2846 = vld [vmem:[%s2031 + $0x122] sm:$0xff]
      %v2847 = vld [vmem:[%s2031 + $0x12a] sm:$0xff]
      %v2848 = vld [vmem:[%s2031 + $0x13a] sm:$0xff]
      %v2849 = vld [vmem:[%s2031 + $0x142] sm:$0xff]
      %v2850 = vld [vmem:[%s2031 + $0x152] sm:$0xff]
      %v2851 = vld [vmem:[%s2031 + $0x15a] sm:$0xff]
      %v2852 = vld [vmem:[%s2031 + $0x16a] sm:$0xff]
      %v2853 = vld [vmem:[%s2031 + $0x172] sm:$0xff]
      %v2854 = vlaneseq
      %v2855 = vshrl.u32 %v2854, 7
      %v2856 = vsub.s32 7, %v2855
      %v2857 = vrot.slane %v463, %v2856
      %v2858 = vmul.f32 %v2822, %v2857
      %v2859 = vmul.f32 %v2823, %v2857
      %v2860 = vmul.f32 %v2824, %v2857
      %v2861 = vmul.f32 %v2825, %v2857
      %v2862 = vmul.f32 %v2826, %v2857
      %v2863 = vmul.f32 %v2827, %v2857
      %v2864 = vmul.f32 %v2828, %v2857
      %v2865 = vmul.f32 %v2829, %v2857
      %v2866 = vmul.f32 %v2830, %v2857
      %v2867 = vmul.f32 %v2831, %v2857
      %v2868 = vmul.f32 %v2832, %v2857
      %v2869 = vmul.f32 %v2833, %v2857
      %v2870 = vmul.f32 %v2834, %v2857
      %v2871 = vmul.f32 %v2835, %v2857
      %v2872 = vmul.f32 %v2836, %v2857
      %v2873 = vmul.f32 %v2837, %v2857
      %v2874 = vmul.f32 %v2838, %v2857
      %v2875 = vmul.f32 %v2839, %v2857
      %v2876 = vmul.f32 %v2840, %v2857
      %v2877 = vmul.f32 %v2841, %v2857
      %v2878 = vmul.f32 %v2842, %v2857
      %v2879 = vmul.f32 %v2843, %v2857
      %v2880 = vmul.f32 %v2844, %v2857
      %v2881 = vmul.f32 %v2845, %v2857
      %v2882 = vmul.f32 %v2846, %v2857
      %v2883 = vmul.f32 %v2847, %v2857
      %v2884 = vmul.f32 %v2848, %v2857
      %v2885 = vmul.f32 %v2849, %v2857
      %v2886 = vmul.f32 %v2850, %v2857
      %v2887 = vmul.f32 %v2851, %v2857
      %v2888 = vmul.f32 %v2852, %v2857
      %v2889 = vmul.f32 %v2853, %v2857
      %v2890 = vadd.f32 %v2790, %v2858
      %v2891 = vadd.f32 %v2791, %v2859
      %v2892 = vadd.f32 %v2792, %v2860
      %v2893 = vadd.f32 %v2793, %v2861
      %v2894 = vadd.f32 %v2794, %v2862
      %v2895 = vadd.f32 %v2795, %v2863
      %v2896 = vadd.f32 %v2796, %v2864
      %v2897 = vadd.f32 %v2797, %v2865
      %v2898 = vadd.f32 %v2798, %v2866
      %v2899 = vadd.f32 %v2799, %v2867
      %v2900 = vadd.f32 %v2800, %v2868
      %v2901 = vadd.f32 %v2801, %v2869
      %v2902 = vadd.f32 %v2802, %v2870
      %v2903 = vadd.f32 %v2803, %v2871
      %v2904 = vadd.f32 %v2804, %v2872
      %v2905 = vadd.f32 %v2805, %v2873
      %v2906 = vadd.f32 %v2806, %v2874
      %v2907 = vadd.f32 %v2807, %v2875
      %v2908 = vadd.f32 %v2808, %v2876
      %v2909 = vadd.f32 %v2809, %v2877
      %v2910 = vadd.f32 %v2810, %v2878
      %v2911 = vadd.f32 %v2811, %v2879
      %v2912 = vadd.f32 %v2812, %v2880
      %v2913 = vadd.f32 %v2813, %v2881
      %v2914 = vadd.f32 %v2814, %v2882
      %v2915 = vadd.f32 %v2815, %v2883
      %v2916 = vadd.f32 %v2816, %v2884
      %v2917 = vadd.f32 %v2817, %v2885
      %v2918 = vadd.f32 %v2818, %v2886
      %v2919 = vadd.f32 %v2819, %v2887
      %v2920 = vadd.f32 %v2820, %v2888
      %v2921 = vadd.f32 %v2821, %v2889
      %v2922 = vadd.f32 %v2890, %v839
      %v2923 = vadd.f32 %v2891, %v839
      %v2924 = vadd.f32 %v2892, %v839
      %v2925 = vadd.f32 %v2893, %v839
      %v2926 = vadd.f32 %v2894, %v839
      %v2927 = vadd.f32 %v2895, %v839
      %v2928 = vadd.f32 %v2896, %v839
      %v2929 = vadd.f32 %v2897, %v839
      %v2930 = vadd.f32 %v2898, %v839
      %v2931 = vadd.f32 %v2899, %v839
      %v2932 = vadd.f32 %v2900, %v839
      %v2933 = vadd.f32 %v2901, %v839
      %v2934 = vadd.f32 %v2902, %v839
      %v2935 = vadd.f32 %v2903, %v839
      %v2936 = vadd.f32 %v2904, %v839
      %v2937 = vadd.f32 %v2905, %v839
      %v2938 = vadd.f32 %v2906, %v839
      %v2939 = vadd.f32 %v2907, %v839
      %v2940 = vadd.f32 %v2908, %v839
      %v2941 = vadd.f32 %v2909, %v839
      %v2942 = vadd.f32 %v2910, %v839
      %v2943 = vadd.f32 %v2911, %v839
      %v2944 = vadd.f32 %v2912, %v839
      %v2945 = vadd.f32 %v2913, %v839
      %v2946 = vadd.f32 %v2914, %v839
      %v2947 = vadd.f32 %v2915, %v839
      %v2948 = vadd.f32 %v2916, %v839
      %v2949 = vadd.f32 %v2917, %v839
      %v2950 = vadd.f32 %v2918, %v839
      %v2951 = vadd.f32 %v2919, %v839
      %v2952 = vadd.f32 %v2920, %v839
      %v2953 = vadd.f32 %v2921, %v839
      %v2954 = vmax.f32 %v2922, 0.0
      %v2955 = vmax.f32 %v2923, 0.0
      %v2956 = vmax.f32 %v2924, 0.0
      %v2957 = vmax.f32 %v2925, 0.0
      %v2958 = vmax.f32 %v2926, 0.0
      %v2959 = vmax.f32 %v2927, 0.0
      %v2960 = vmax.f32 %v2928, 0.0
      %v2961 = vmax.f32 %v2929, 0.0
      %v2962 = vmax.f32 %v2930, 0.0
      %v2963 = vmax.f32 %v2931, 0.0
      %v2964 = vmax.f32 %v2932, 0.0
      %v2965 = vmax.f32 %v2933, 0.0
      %v2966 = vmax.f32 %v2934, 0.0
      %v2967 = vmax.f32 %v2935, 0.0
      %v2968 = vmax.f32 %v2936, 0.0
      %v2969 = vmax.f32 %v2937, 0.0
      %v2970 = vmax.f32 %v2938, 0.0
      %v2971 = vmax.f32 %v2939, 0.0
      %v2972 = vmax.f32 %v2940, 0.0
      %v2973 = vmax.f32 %v2941, 0.0
      %v2974 = vmax.f32 %v2942, 0.0
      %v2975 = vmax.f32 %v2943, 0.0
      %v2976 = vmax.f32 %v2944, 0.0
      %v2977 = vmax.f32 %v2945, 0.0
      %v2978 = vmax.f32 %v2946, 0.0
      %v2979 = vmax.f32 %v2947, 0.0
      %v2980 = vmax.f32 %v2948, 0.0
      %v2981 = vmax.f32 %v2949, 0.0
      %v2982 = vmax.f32 %v2950, 0.0
      %v2983 = vmax.f32 %v2951, 0.0
      %v2984 = vmax.f32 %v2952, 0.0
      %v2985 = vmax.f32 %v2953, 0.0
      %v2986 = vpack.c.bf16 %v2955, %v2954
      %v2987 = vpack.c.bf16 %v2957, %v2956
      %v2988 = vpack.c.bf16 %v2959, %v2958
      %v2989 = vpack.c.bf16 %v2961, %v2960
      %v2990 = vpack.c.bf16 %v2963, %v2962
      %v2991 = vpack.c.bf16 %v2965, %v2964
      %v2992 = vpack.c.bf16 %v2967, %v2966
      %v2993 = vpack.c.bf16 %v2969, %v2968
      %v2994 = vpack.c.bf16 %v2971, %v2970
      %v2995 = vpack.c.bf16 %v2973, %v2972
      %v2996 = vpack.c.bf16 %v2975, %v2974
      %v2997 = vpack.c.bf16 %v2977, %v2976
      %v2998 = vpack.c.bf16 %v2979, %v2978
      %v2999 = vpack.c.bf16 %v2981, %v2980
      %v3000 = vpack.c.bf16 %v2983, %v2982
      %v3001 = vpack.c.bf16 %v2985, %v2984
      %v3003 = vsel %vm331, %v2986, 0
      %v3006 = vsel %vm331, %v2987, 0
      %v3009 = vsel %vm331, %v2988, 0
      %v3012 = vsel %vm331, %v2989, 0
      %v3015 = vsel %vm331, %v2990, 0
      %v3018 = vsel %vm331, %v2991, 0
      %v3021 = vsel %vm331, %v2992, 0
      %v3024 = vsel %vm331, %v2993, 0
      %v3027 = vsel %vm331, %v2994, 0
      %v3030 = vsel %vm331, %v2995, 0
      %v3033 = vsel %vm331, %v2996, 0
      %v3036 = vsel %vm331, %v2997, 0
      %v3039 = vsel %vm331, %v2998, 0
      %v3042 = vsel %vm331, %v2999, 0
      %v3045 = vsel %vm331, %v3000, 0
      %v3048 = vsel %vm331, %v3001, 0
      %3050 = vmatprep.subr.bf16.mxu0 0
      %3051 = vmatpush1.bf16.msra.mxu0 %v977
      %3052 = vmatprep.subr.bf16.mxu0 0
      %3053 = vmatpush1.bf16.msra.mxu0 0
      %3054 = vmatprep.subr.bf16.mxu0 0
      %3055 = vmatpush1.bf16.msra.mxu0 0
      %3056 = vmatprep.subr.bf16.mxu0 0
      %3057 = vmatpush1.bf16.msra.mxu0 0
      %3058 = vmatprep.subr.bf16.mxu0 0
      %3059 = vmatpush1.bf16.msra.mxu0 0
      %3060 = vmatprep.subr.bf16.mxu0 0
      %3061 = vmatpush1.bf16.msra.mxu0 0
      %3062 = vmatprep.subr.bf16.mxu0 0
      %3063 = vmatpush1.bf16.msra.mxu0 0
      %3064 = vmatprep.subr.bf16.mxu0 0
      %3065 = vmatpush1.bf16.msra.mxu0 0
      %3066 = vmatprep.subr.bf16.mxu0 0
      %3067 = vmatpush1.bf16.msra.mxu0 0
      %3068 = vmatprep.subr.bf16.mxu0 0
      %3069 = vmatpush1.bf16.msra.mxu0 0
      %3070 = vmatprep.subr.bf16.mxu0 0
      %3071 = vmatpush1.bf16.msra.mxu0 0
      %3072 = vmatprep.subr.bf16.mxu0 0
      %3073 = vmatpush1.bf16.msra.mxu0 0
      %3074 = vmatprep.subr.bf16.mxu0 0
      %3075 = vmatpush1.bf16.msra.mxu0 0
      %3076 = vmatprep.subr.bf16.mxu0 0
      %3077 = vmatpush1.bf16.msra.mxu0 0
      %3078 = vmatprep.subr.bf16.mxu0 0
      %3079 = vmatpush1.bf16.msra.mxu0 0
      %3080 = vmatprep.subr.bf16.mxu0 0
      %3081 = vmatpush1.bf16.msra.mxu0 0
      %3082 = vmatprep.mubr.bf16.mxu0 0
      %3083 = vmatmul.mubr.bf16.gmra.mrb[0].mxu0 %v3003
      %v3084 = vpop.f32.mrb[0].mxu0
      %v3085 = vadd.f32 %v925, %v3084
      %v3086 = vpop.f32.mrb[0].mxu0
      %v3087 = vpop.f32.mrb[0].mxu0
      %v3088 = vadd.f32 %v925, %v3087
      %v3089 = vpop.f32.mrb[0].mxu0
      %3090 = vmatprep.mubr.bf16.mxu0 0
      %3091 = vmatmul.mubr.bf16.gmra.mrb[0].mxu0 %v3006
      %v3092 = vpop.f32.mrb[0].mxu0
      %v3093 = vadd.f32 %v925, %v3092
      %v3094 = vpop.f32.mrb[0].mxu0
      %v3095 = vpop.f32.mrb[0].mxu0
      %v3096 = vadd.f32 %v925, %v3095
      %v3097 = vpop.f32.mrb[0].mxu0
      %3098 = vmatprep.mubr.bf16.mxu0 0
      %3099 = vmatmul.mubr.bf16.gmra.mrb[0].mxu0 %v3009
      %v3100 = vpop.f32.mrb[0].mxu0
      %v3101 = vadd.f32 %v925, %v3100
      %v3102 = vpop.f32.mrb[0].mxu0
      %v3103 = vpop.f32.mrb[0].mxu0
      %v3104 = vadd.f32 %v925, %v3103
      %v3105 = vpop.f32.mrb[0].mxu0
      %3106 = vmatprep.mubr.bf16.mxu0 0
      %3107 = vmatmul.mubr.bf16.gmra.mrb[0].mxu0 %v3012
      %v3108 = vpop.f32.mrb[0].mxu0
      %v3109 = vadd.f32 %v925, %v3108
      %v3110 = vpop.f32.mrb[0].mxu0
      %v3111 = vpop.f32.mrb[0].mxu0
      %v3112 = vadd.f32 %v925, %v3111
      %v3113 = vpop.f32.mrb[0].mxu0
      %3114 = vmatprep.mubr.bf16.mxu0 0
      %3115 = vmatmul.mubr.bf16.gmra.mrb[0].mxu0 %v3015
      %v3116 = vpop.f32.mrb[0].mxu0
      %v3117 = vadd.f32 %v925, %v3116
      %v3118 = vpop.f32.mrb[0].mxu0
      %v3119 = vpop.f32.mrb[0].mxu0
      %v3120 = vadd.f32 %v925, %v3119
      %v3121 = vpop.f32.mrb[0].mxu0
      %3122 = vmatprep.mubr.bf16.mxu0 0
      %3123 = vmatmul.mubr.bf16.gmra.mrb[0].mxu0 %v3018
      %v3124 = vpop.f32.mrb[0].mxu0
      %v3125 = vadd.f32 %v925, %v3124
      %v3126 = vpop.f32.mrb[0].mxu0
      %v3127 = vpop.f32.mrb[0].mxu0
      %v3128 = vadd.f32 %v925, %v3127
      %v3129 = vpop.f32.mrb[0].mxu0
      %3130 = vmatprep.mubr.bf16.mxu0 0
      %3131 = vmatmul.mubr.bf16.gmra.mrb[0].mxu0 %v3021
      %v3132 = vpop.f32.mrb[0].mxu0
      %v3133 = vadd.f32 %v925, %v3132
      %v3134 = vpop.f32.mrb[0].mxu0
      %v3135 = vpop.f32.mrb[0].mxu0
      %v3136 = vadd.f32 %v925, %v3135
      %v3137 = vpop.f32.mrb[0].mxu0
      %3138 = vmatprep.mubr.bf16.mxu0 0
      %3139 = vmatmul.mubr.bf16.gmra.mrb[0].mxu0 %v3024
      %v3140 = vpop.f32.mrb[0].mxu0
      %v3141 = vadd.f32 %v925, %v3140
      %v3142 = vpop.f32.mrb[0].mxu0
      %v3143 = vpop.f32.mrb[0].mxu0
      %v3144 = vadd.f32 %v925, %v3143
      %v3145 = vpop.f32.mrb[0].mxu0
      %3146 = vmatprep.mubr.bf16.mxu0 0
      %3147 = vmatmul.mubr.bf16.gmra.mrb[0].mxu0 %v3027
      %v3148 = vpop.f32.mrb[0].mxu0
      %v3149 = vadd.f32 %v925, %v3148
      %v3150 = vpop.f32.mrb[0].mxu0
      %v3151 = vpop.f32.mrb[0].mxu0
      %v3152 = vadd.f32 %v925, %v3151
      %v3153 = vpop.f32.mrb[0].mxu0
      %3154 = vmatprep.mubr.bf16.mxu0 0
      %3155 = vmatmul.mubr.bf16.gmra.mrb[0].mxu0 %v3030
      %v3156 = vpop.f32.mrb[0].mxu0
      %v3157 = vadd.f32 %v925, %v3156
      %v3158 = vpop.f32.mrb[0].mxu0
      %v3159 = vpop.f32.mrb[0].mxu0
      %v3160 = vadd.f32 %v925, %v3159
      %v3161 = vpop.f32.mrb[0].mxu0
      %3162 = vmatprep.mubr.bf16.mxu0 0
      %3163 = vmatmul.mubr.bf16.gmra.mrb[0].mxu0 %v3033
      %v3164 = vpop.f32.mrb[0].mxu0
      %v3165 = vadd.f32 %v925, %v3164
      %v3166 = vpop.f32.mrb[0].mxu0
      %v3167 = vpop.f32.mrb[0].mxu0
      %v3168 = vadd.f32 %v925, %v3167
      %v3169 = vpop.f32.mrb[0].mxu0
      %3170 = vmatprep.mubr.bf16.mxu0 0
      %3171 = vmatmul.mubr.bf16.gmra.mrb[0].mxu0 %v3036
      %v3172 = vpop.f32.mrb[0].mxu0
      %v3173 = vadd.f32 %v925, %v3172
      %v3174 = vpop.f32.mrb[0].mxu0
      %v3175 = vpop.f32.mrb[0].mxu0
      %v3176 = vadd.f32 %v925, %v3175
      %v3177 = vpop.f32.mrb[0].mxu0
      %3178 = vmatprep.mubr.bf16.mxu0 0
      %3179 = vmatmul.mubr.bf16.gmra.mrb[0].mxu0 %v3039
      %v3180 = vpop.f32.mrb[0].mxu0
      %v3181 = vadd.f32 %v925, %v3180
      %v3182 = vpop.f32.mrb[0].mxu0
      %v3183 = vpop.f32.mrb[0].mxu0
      %v3184 = vadd.f32 %v925, %v3183
      %v3185 = vpop.f32.mrb[0].mxu0
      %3186 = vmatprep.mubr.bf16.mxu0 0
      %3187 = vmatmul.mubr.bf16.gmra.mrb[0].mxu0 %v3042
      %v3188 = vpop.f32.mrb[0].mxu0
      %v3189 = vadd.f32 %v925, %v3188
      %v3190 = vpop.f32.mrb[0].mxu0
      %v3191 = vpop.f32.mrb[0].mxu0
      %v3192 = vadd.f32 %v925, %v3191
      %v3193 = vpop.f32.mrb[0].mxu0
      %3194 = vmatprep.mubr.bf16.mxu0 0
      %3195 = vmatmul.mubr.bf16.gmra.mrb[0].mxu0 %v3045
      %v3196 = vpop.f32.mrb[0].mxu0
      %v3197 = vadd.f32 %v925, %v3196
      %v3198 = vpop.f32.mrb[0].mxu0
      %v3199 = vpop.f32.mrb[0].mxu0
      %v3200 = vadd.f32 %v925, %v3199
      %v3201 = vpop.f32.mrb[0].mxu0
      %3202 = vmatprep.mubr.bf16.mxu0 0
      %3203 = vmatmul.mubr.bf16.gmra.mrb[0].mxu0 %v3048
      %v3204 = vpop.f32.mrb[0].mxu0
      %v3205 = vadd.f32 %v925, %v3204
      %v3206 = vpop.f32.mrb[0].mxu0
      %v3207 = vpop.f32.mrb[0].mxu0
      %v3208 = vadd.f32 %v925, %v3207
      %v3209 = vpop.f32.mrb[0].mxu0
      %3210 = vdwg.mxu0
      %s3211 = scalar_lea.vmem %s328, 768
      %3212 = vst.msk [vmem:[%s3211] sm:$0xff] %vm1140, %v3085
      %3213 = vst.msk [vmem:[%s3211 + $0x8] sm:$0xff] %vm1140, %v3088
      %3214 = vst.msk [vmem:[%s3211 + $0x10] sm:$0xff] %vm1140, %v3093
      %3215 = vst.msk [vmem:[%s3211 + $0x18] sm:$0xff] %vm1140, %v3096
      %3216 = vst.msk [vmem:[%s3211 + $0x20] sm:$0xff] %vm1140, %v3101
      %3217 = vst.msk [vmem:[%s3211 + $0x28] sm:$0xff] %vm1140, %v3104
      %3218 = vst.msk [vmem:[%s3211 + $0x30] sm:$0xff] %vm1140, %v3109
      %3219 = vst.msk [vmem:[%s3211 + $0x38] sm:$0xff] %vm1140, %v3112
      %3220 = vst.msk [vmem:[%s3211 + $0x40] sm:$0xff] %vm1140, %v3117
      %3221 = vst.msk [vmem:[%s3211 + $0x48] sm:$0xff] %vm1140, %v3120
      %3222 = vst.msk [vmem:[%s3211 + $0x50] sm:$0xff] %vm1140, %v3125
      %3223 = vst.msk [vmem:[%s3211 + $0x58] sm:$0xff] %vm1140, %v3128
      %3224 = vst.msk [vmem:[%s3211 + $0x60] sm:$0xff] %vm1140, %v3133
      %3225 = vst.msk [vmem:[%s3211 + $0x68] sm:$0xff] %vm1140, %v3136
      %3226 = vst.msk [vmem:[%s3211 + $0x70] sm:$0xff] %vm1140, %v3141
      %3227 = vst.msk [vmem:[%s3211 + $0x78] sm:$0xff] %vm1140, %v3144
      %3228 = vst.msk [vmem:[%s3211 + $0x80] sm:$0xff] %vm1140, %v3149
      %3229 = vst.msk [vmem:[%s3211 + $0x88] sm:$0xff] %vm1140, %v3152
      %3230 = vst.msk [vmem:[%s3211 + $0x90] sm:$0xff] %vm1140, %v3157
      %3231 = vst.msk [vmem:[%s3211 + $0x98] sm:$0xff] %vm1140, %v3160
      %3232 = vst.msk [vmem:[%s3211 + $0xa0] sm:$0xff] %vm1140, %v3165
      %3233 = vst.msk [vmem:[%s3211 + $0xa8] sm:$0xff] %vm1140, %v3168
      %3234 = vst.msk [vmem:[%s3211 + $0xb0] sm:$0xff] %vm1140, %v3173
      %3235 = vst.msk [vmem:[%s3211 + $0xb8] sm:$0xff] %vm1140, %v3176
      %3236 = vst.msk [vmem:[%s3211 + $0xc0] sm:$0xff] %vm1140, %v3181
      %3237 = vst.msk [vmem:[%s3211 + $0xc8] sm:$0xff] %vm1140, %v3184
      %3238 = vst.msk [vmem:[%s3211 + $0xd0] sm:$0xff] %vm1140, %v3189
      %3239 = vst.msk [vmem:[%s3211 + $0xd8] sm:$0xff] %vm1140, %v3192
      %3240 = vst.msk [vmem:[%s3211 + $0xe0] sm:$0xff] %vm1140, %v3197
      %3241 = vst.msk [vmem:[%s3211 + $0xe8] sm:$0xff] %vm1140, %v3200
      %3242 = vst.msk [vmem:[%s3211 + $0xf0] sm:$0xff] %vm1140, %v3205
      %3243 = vst.msk [vmem:[%s3211 + $0xf8] sm:$0xff] %vm1140, %v3208
      %s3244 = smul.u32 16, %s22
      %p3245 = scmp.lt.s32.totalorder %s21, 1
      %s3246 = scalar_select %p3245, %s21, 1
      %p3247 = scmp.lt.s32.totalorder %s3244, 15
      %s3248 = scalar_select %p3247, %s3244, 15
      %s3249 = smul.addr %s3248, 2
      %s3250 = smul.addr %s3246, 128
      %s3251 = sadd.s32 %s3249, %s3250
      %s3252 = smul.addr %s3251, 8
      %s3253 = scalar_lea.vmem %s6, %s3252
      // Predicated region
      $region45: #{tpu_custom_call.1} parent=43 // pred_check
        %p3254 = pneg %p189
      $region46: #{tpu_custom_call.1} parent=43 // pred_check_branch
        %3256 = sbr.rel (%p3254) target = $region48
      $region47: #{tpu_custom_call.1} parent=43 // pred_region
        %s3257 = smul.u32 16, %s22
      $region48: #{tpu_custom_call.1} parent=43 // pred_fallthru
        _
    $region44: #{tpu_custom_call.1} parent=5 // pred_fallthru
      _
    %p3258 = scmp.le.s32.totalorder 2, %s12
    // Predicated region
    $region49: #{tpu_custom_call.1} parent=5 // pred_check
      %p3259 = pneg %p3258
    $region50: #{tpu_custom_call.1} parent=5 // pred_check_branch
      %3261 = sbr.rel (%p3259) target = $region52
    $region51: #{tpu_custom_call.1} parent=5 // pred_region
      %s3262 = ssub.s32 %s12, 2
      // Predicated region
      $region53: #{tpu_custom_call.1} parent=51 // pred_check
        %p3263 = pneg %p195
      $region54: #{tpu_custom_call.1} parent=51 // pred_check_branch
        %3265 = sbr.rel (%p3263) target = $region56
      $region55: #{tpu_custom_call.1} parent=51 // pred_region
        %s3266 = smul.u32 16, %s24
        %p3267 = scmp.lt.s32.totalorder %s23, 1
        %s3268 = scalar_select %p3267, %s23, 1
        %p3269 = scmp.lt.s32.totalorder %s3266, 15
        %s3270 = scalar_select %p3269, %s3266, 15
        %s3271 = smul.addr %s3270, 2
        %s3272 = smul.addr %s3268, 128
        %s3273 = sadd.s32 %s3271, %s3272
        %s3274 = smul.addr %s3273, 8
        %s3275 = scalar_lea.vmem %s6, %s3274
      $region56: #{tpu_custom_call.1} parent=51 // pred_fallthru
        _
    $region52: #{tpu_custom_call.1} parent=5 // pred_fallthru
      _
  $region6: #{tpu_custom_call.1} parent=0 // loop_footer
    %s16 = sadd.s32 1, %s12
  $region7: #{tpu_custom_call.1} parent=0 // loop_footer_branch
    %11 = sbr.rel target = $region3
  $region8: #{tpu_custom_call.1} parent=0 // loop_exit
    _

</llo_original>
